<compile_context>
chip_gen: v7x
topology: tpu7x:2x2x1
jax: 0.10.0
libtpu: 0.0.40
codegen_flags: <defaults>
</compile_context>

<pallas_src>
import jax
import jax.numpy as jnp
from jax.experimental import pallas as pl
from jax.experimental.pallas import tpu as pltpu

EPS = 1e-5
K = 5            # conv kernel size (both convs)
C_IN = 3
C1 = 128         # conv1 out channels
C2 = 64          # conv2 out channels
K1_PADDED = 128  # conv1 im2col contraction dim (75) zero-padded to a full lane width
N_PAIR = (K * K + 1) // 2        # 13 tap pairs for the wide conv2 weight
WIDE_COLS = N_PAIR * 2 * C2      # 1664 columns of the wide conv2 matmul


def _round_up(x, m):
    return (x + m - 1) // m * m


def _vmem():
    return pl.BlockSpec(memory_space=pltpu.MemorySpace.VMEM)


# ---------------------------------------------------------------------------
# Host-side constants built once at init: pooling selection matrices, BN2
# validity mask, folded/packed weights.
# ---------------------------------------------------------------------------
def _pool1_select(batch, h1):
    """(batch*(h1/2)^2, batch*h1^2) 0/1: pooled row (n,h,w) <- conv1 row (n,2h,2w)."""
    ph = h1 // 2
    o = jnp.arange(batch * ph * ph)
    n, h, w = o // (ph * ph), (o // ph) % ph, o % ph
    src = n * (h1 * h1) + (2 * h) * h1 + 2 * w
    return (src[:, None] == jnp.arange(batch * h1 * h1)[None, :]).astype(jnp.float32)


def _pool2_select(batch, p1h, in_dim):
    """(in_dim^2*batch, batch*p1h^2) 0/1: row q=p*batch+n <- padded-conv2 row (n,2ho,2wo)."""
    q = jnp.arange(in_dim * in_dim * batch)
    p, n = q // batch, q % batch
    ho, wo = p // in_dim, p % in_dim
    src = n * (p1h * p1h) + (2 * ho) * p1h + 2 * wo
    return (src[:, None] == jnp.arange(batch * p1h * p1h)[None, :]).astype(jnp.float32)


def _bn2_mask(batch, p1h, h2):
    """(batch*p1h^2, 1) mask of rows that are genuine conv2 outputs (h<h2, w<h2)."""
    r = jnp.arange(batch * p1h * p1h)
    h, w = (r // p1h) % p1h, r % p1h
    return ((h < h2) & (w < h2)).astype(jnp.float32)[:, None]


def init_params(size, batch, key):
    h1 = size - (K - 1)          # conv1 output spatial (16)
    p1h = h1 // 2                # after pool1 (8)
    h2 = p1h - (K - 1)           # conv2 output spatial (4)
    in_dim = h2 // 2             # after pool2 (2) == torch in_dim
    feat = in_dim * in_dim * C2

    ks = jax.random.split(key, 8)
    p = {}

    # conv1: torch (C1, C_IN, K, K) -> (K*K*C_IN, C1), contraction padded to 128, bf16
    w1 = 0.05 * jax.random.normal(ks[0], (C1, C_IN, K, K), jnp.float32)
    w1 = jnp.transpose(w1, (2, 3, 1, 0)).reshape(K * K * C_IN, C1)
    p["w1"] = jnp.pad(w1, ((0, K1_PADDED - K * K * C_IN), (0, 0))).astype(jnp.bfloat16)
    p["b1"] = 0.05 * jax.random.normal(ks[1], (1, C1), jnp.float32)
    p["g1"] = jnp.ones((1, C1), jnp.float32)    # BatchNorm2d default weight
    p["bt1"] = jnp.zeros((1, C1), jnp.float32)  # BatchNorm2d default bias

    # conv2: torch (C2, C1, K, K) -> wide bf16 (C1, 13*128); pair block t holds tap 2t
    # in lanes [0:64) and tap 2t+1 in lanes [64:128) (last block's upper half is zero)
    w2 = 0.02 * jax.random.normal(ks[2], (C2, C1, K, K), jnp.float32)
    taps = jnp.transpose(w2, (2, 3, 1, 0)).reshape(K * K, C1, C2)          # (25,128,64)
    taps = jnp.concatenate([taps, jnp.zeros((1, C1, C2), jnp.float32)], 0)  # (26,128,64)
    w2w = taps.reshape(N_PAIR, 2, C1, C2).transpose(2, 0, 1, 3).reshape(C1, WIDE_COLS)
    p["w2w"] = w2w.astype(jnp.bfloat16)
    b2 = 0.05 * jax.random.normal(ks[3], (1, C2), jnp.float32)
    p["b2p"] = jnp.pad(b2, ((0, 0), (0, C2)))                                  # junk lanes +0
    p["g2p"] = jnp.pad(jnp.ones((1, C2), jnp.float32), ((0, 0), (0, C2)))      # gamma=0 on junk
    p["bt2p"] = jnp.zeros((1, 2 * C2), jnp.float32)

    # linear1 (feat->120) @ linear2 (120->3) folded at init (no activation in between)
    lw1 = 0.05 * jax.random.normal(ks[4], (feat, 120), jnp.float32)
    lb1 = 0.05 * jax.random.normal(ks[5], (1, 120), jnp.float32)
    lw2 = 0.05 * jax.random.normal(ks[6], (120, 3), jnp.float32)
    lb2 = 0.05 * jax.random.normal(ks[7], (1, 3), jnp.float32)
    wl = lw1 @ lw2                        # (feat, 3), rows in torch flatten order c*in_dim^2+p
    p["bl"] = lb1 @ lw2 + lb2             # (1, 3) f32
    # tail weight (in_dim^2*128, 3): row sp*128 + c = wl[c*in_dim^2 + sp] for c<64, else 0
    wlp = wl.reshape(C2, in_dim * in_dim, 3).transpose(1, 0, 2)               # (4, 64, 3)
    wlp = jnp.pad(wlp, ((0, 0), (0, C2), (0, 0)))                             # (4, 128, 3)
    p["wtail"] = wlp.reshape(in_dim * in_dim * 2 * C2, 3).astype(jnp.bfloat16)

    # shape-only constants (0/1 values -> exact in bf16)
    p["s1"] = _pool1_select(batch, h1).astype(jnp.bfloat16)
    p["s2"] = _pool2_select(batch, p1h, in_dim).astype(jnp.bfloat16)
    p["mask2"] = _bn2_mask(batch, p1h, h2)
    return p


def make_forward(size, batch):
    h1 = size - (K - 1)               # 16
    p1h = h1 // 2                     # 8
    h2 = p1h - (K - 1)                # 4
    in_dim = h2 // 2                  # 2

    m1 = batch * h1 * h1              # conv1 rows (512)
    mp = batch * p1h * p1h            # pooled1 rows == padded conv2 rows (128)
    n_valid2 = batch * h2 * h2        # valid conv2 positions for BN2 (32)
    feat_pad = in_dim * in_dim * 2 * C2  # lane-dense tail LHS width (512)

    a1_rows = _round_up(m1 + h1 + 2, 8)              # pool1 shifted reads need +h1+1
    p1_rows = _round_up(mp + (K - 1) * p1h + K, 8)   # conv2 taps shift rows by up to 36
    a2_rows = _round_up(mp + p1h + 2, 8)             # pool2 shifted reads need +p1h+1
    a1_pad, p1_pad, a2_pad = a1_rows - m1, p1_rows - mp, a2_rows - mp

    # lane-aligned 256-wide column chunks of the single wide conv2 matmul
    wide_chunks = [(c, min(256, WIDE_COLS - c)) for c in range(0, WIDE_COLS, 256)]
    tap_shift = [(t // K) * p1h + (t % K) for t in range(K * K)]

    def kernel(pat_ref, w1_ref, b1_ref, g1_ref, bt1_ref,
               w2_ref, b2_ref, g2_ref, bt2_ref, mask2_ref,
               s1_ref, s2_ref, wt_ref, bl_ref,
               o_ref,
               a1_ref, p1_ref, wide_ref, a2_ref, tl_ref):
        f32, bf16 = jnp.float32, jnp.bfloat16

        # ---- conv1: bf16 im2col matmul (f32 accumulate) + bias ----
        y1 = jnp.dot(pat_ref[...], w1_ref[...], preferred_element_type=f32)
        y1 = y1 + b1_ref[...]

        # ---- bn1: single-pass batch stats (f32) + folded affine ----
        mu = jnp.mean(y1, axis=0, keepdims=True)
        var = jnp.maximum(jnp.mean(y1 * y1, axis=0, keepdims=True) - mu * mu, 0.0)
        sc = g1_ref[...] * jax.lax.rsqrt(var + EPS)
        y1 = y1 * sc + (bt1_ref[...] - mu * sc)                      # (m1, C1) f32

        # ---- pool1 (2x2 max) + ReLU: max of 4 row-shifted VMEM views ----
        a1_ref[pl.ds(0, m1), :] = y1
        a1_ref[pl.ds(m1, a1_pad), :] = jnp.zeros((a1_pad, C1), f32)
        wmax = jnp.maximum(a1_ref[pl.ds(0, m1), :], a1_ref[pl.ds(1, m1), :])
        wmax = jnp.maximum(wmax, a1_ref[pl.ds(h1, m1), :])
        wmax = jnp.maximum(wmax, a1_ref[pl.ds(h1 + 1, m1), :])
        wmax = jnp.maximum(wmax, 0.0)
        # decimation to the 8x8 pooled grid via a bf16 one-hot selection matmul
        pooled1 = jnp.dot(s1_ref[...], wmax.astype(bf16), preferred_element_type=f32)

        # ---- conv2: ONE wide bf16 matmul over 13 lane-aligned tap-pair blocks ----
        p1_ref[pl.ds(0, mp), :] = pooled1.astype(bf16)
        p1_ref[pl.ds(mp, p1_pad), :] = jnp.zeros((p1_pad, C1), bf16)
        lhs = p1_ref[...]                                            # (p1_rows, C1) bf16
        for c0, csz in wide_chunks:
            wide_ref[:, pl.ds(c0, csz)] = jnp.dot(
                lhs, w2_ref[:, pl.ds(c0, csz)], preferred_element_type=f32)
        # reduce the 25 taps with VPU adds of row-shifted slabs of the wide result
        acc_a = jnp.zeros((mp, 2 * C2), f32)   # even taps -> lanes [0:C2) valid
        acc_b = jnp.zeros((mp, 2 * C2), f32)   # odd  taps -> lanes [C2:2*C2) valid
        for t in range(N_PAIR):
            ta, tb = 2 * t, 2 * t + 1
            acc_a = acc_a + wide_ref[pl.ds(tap_shift[ta], mp), pl.ds(t * 2 * C2, 2 * C2)]
            if tb < K * K:
                acc_b = acc_b + wide_ref[pl.ds(tap_shift[tb], mp), pl.ds(t * 2 * C2, 2 * C2)]
        y2 = acc_a + pltpu.roll(acc_b, shift=C2, axis=1) + b2_ref[...]
        # lanes [0:C2) now hold conv2+bias; lanes [C2:2*C2) are junk and are zeroed by
        # bn2's zero gamma/beta padding, and never read by the zero rows of wtail.

        # ---- bn2: masked single-pass stats over the 32 valid conv2 positions ----
        msk = mask2_ref[...]
        inv_n = 1.0 / n_valid2
        mu2 = jnp.sum(y2 * msk, axis=0, keepdims=True) * inv_n
        var2 = jnp.maximum(
            jnp.sum(y2 * y2 * msk, axis=0, keepdims=True) * inv_n - mu2 * mu2, 0.0)
        sc2 = g2_ref[...] * jax.lax.rsqrt(var2 + EPS)
        y2 = y2 * sc2 + (bt2_ref[...] - mu2 * sc2)

        # ---- pool2 (2x2 max) + ReLU + decimation (rows ordered (p, n)) ----
        a2_ref[pl.ds(0, mp), :] = y2
        a2_ref[pl.ds(mp, a2_pad), :] = jnp.zeros((a2_pad, 2 * C2), f32)
        vmax = jnp.maximum(a2_ref[pl.ds(0, mp), :], a2_ref[pl.ds(1, mp), :])
        vmax = jnp.maximum(vmax, a2_ref[pl.ds(p1h, mp), :])
        vmax = jnp.maximum(vmax, a2_ref[pl.ds(p1h + 1, mp), :])
        vmax = jnp.maximum(vmax, 0.0)
        d = jnp.dot(s2_ref[...], vmax.astype(bf16), preferred_element_type=f32)  # (8, 128)

        # ---- flatten into one lane-dense (batch, 512) LHS + single fused-linear dot ----
        for sp in range(in_dim * in_dim):
            tl_ref[pl.ds(0, batch), pl.ds(sp * 2 * C2, 2 * C2)] = (
                d[sp * batch:(sp + 1) * batch, :].astype(bf16))
        out = jnp.dot(tl_ref[pl.ds(0, batch), :], wt_ref[...],
                      preferred_element_type=f32)                    # (batch, 3)
        o_ref[...] = out + bl_ref[...]

    fused = pl.pallas_call(
        kernel,
        out_shape=jax.ShapeDtypeStruct((batch, 3), jnp.float32),
        in_specs=[_vmem() for _ in range(14)],
        out_specs=_vmem(),
        scratch_shapes=[
            pltpu.VMEM((a1_rows, C1), jnp.float32),        # conv1+bn1 output (+pad rows)
            pltpu.VMEM((p1_rows, C1), jnp.bfloat16),       # pooled1 activation (+pad rows)
            pltpu.VMEM((p1_rows, WIDE_COLS), jnp.float32),  # wide conv2 matmul result
            pltpu.VMEM((a2_rows, 2 * C2), jnp.float32),    # conv2+bn2 output (+pad rows)
            pltpu.VMEM((8, feat_pad), jnp.bfloat16),       # lane-dense tail LHS
        ],
    )

    @jax.jit
    def forward(x_nchw, params):
        # Thin layout glue: NCHW -> NHWC, conv1 im2col, pad K to 128, emit bf16.
        # TODO(synk): conv1 im2col is kept as a host-side XLA fusion (now bf16, 128KB);
        # folding it in-kernel needs gather-style DMA and is not a clean win at this size.
        x = jnp.transpose(x_nchw, (0, 2, 3, 1))
        n, _, _, c = x.shape
        cols = [x[:, i:i + h1, j:j + h1, :] for i in range(K) for j in range(K)]
        pat = jnp.concatenate(cols, axis=-1).reshape(n * h1 * h1, K * K * c)
        pat = jnp.pad(pat, ((0, 0), (0, K1_PADDED - K * K * c))).astype(jnp.bfloat16)
        return fused(pat, params["w1"], params["b1"], params["g1"], params["bt1"],
                     params["w2w"], params["b2p"], params["g2p"], params["bt2p"],
                     params["mask2"], params["s1"], params["s2"],
                     params["wtail"], params["bl"])

    return forward


if __name__ == "__main__":
    SIZE = 20    # conv1 -> 16x16, pool -> 8x8, conv2 -> 4x4, pool -> 2x2, feat = 256
    BATCH = 2
    key = jax.random.PRNGKey(0)
    k_x, k_p = jax.random.split(key)
    x = jax.random.normal(k_x, (BATCH, 3, SIZE, SIZE), jnp.float32)   # NCHW input
    params = init_params(SIZE, BATCH, k_p)
    forward = make_forward(SIZE, BATCH)

    out = jax.block_until_ready(forward(x, params))
    assert out.shape == (BATCH, 3) and out.dtype == jnp.float32
    assert bool(jnp.all(jnp.isfinite(out)))
    print("KERNEL_OK")
</pallas_src>

<mosaic_0001>
module attributes {stable_mosaic.version = 11 : i64} {
  func.func @kernel(%arg0: memref<512x128xbf16, #tpu.memory_space<vmem>>, %arg1: memref<128x128xbf16, #tpu.memory_space<vmem>>, %arg2: memref<1x128xf32, #tpu.memory_space<vmem>>, %arg3: memref<1x128xf32, #tpu.memory_space<vmem>>, %arg4: memref<1x128xf32, #tpu.memory_space<vmem>>, %arg5: memref<128x1664xbf16, #tpu.memory_space<vmem>>, %arg6: memref<1x128xf32, #tpu.memory_space<vmem>>, %arg7: memref<1x128xf32, #tpu.memory_space<vmem>>, %arg8: memref<1x128xf32, #tpu.memory_space<vmem>>, %arg9: memref<128x1xf32, #tpu.memory_space<vmem>>, %arg10: memref<128x512xbf16, #tpu.memory_space<vmem>>, %arg11: memref<8x128xbf16, #tpu.memory_space<vmem>>, %arg12: memref<512x3xbf16, #tpu.memory_space<vmem>>, %arg13: memref<1x3xf32, #tpu.memory_space<vmem>>, %arg14: memref<2x3xf32, #tpu.memory_space<vmem>>, %arg15: memref<536x128xf32, #tpu.memory_space<vmem>>, %arg16: memref<168x128xbf16, #tpu.memory_space<vmem>>, %arg17: memref<168x1664xf32, #tpu.memory_space<vmem>>, %arg18: memref<144x128xf32, #tpu.memory_space<vmem>>, %arg19: memref<8x512xbf16, #tpu.memory_space<vmem>>) attributes {dimension_semantics = [], scalar_prefetch = 0 : i64, scratch_operands = 5 : i64, tpu.core_type = #tpu.core_type<tc>} {
    %c0 = arith.constant 0 : index
    %c0_0 = arith.constant 0 : index
    %0 = vector.load %arg0[%c0, %c0_0] : memref<512x128xbf16, #tpu.memory_space<vmem>>, vector<512x128xbf16>
    %c0_1 = arith.constant 0 : index
    %c0_2 = arith.constant 0 : index
    %1 = vector.load %arg1[%c0_1, %c0_2] : memref<128x128xbf16, #tpu.memory_space<vmem>>, vector<128x128xbf16>
    %cst = arith.constant dense<0.000000e+00> : vector<512x128xf32>
    %2 = tpu.matmul %0, %1, %cst {dimension_numbers = #tpu.dot_dimension_numbers<[1], [0], [0], [1], [0, 0, 1, 1], [], []>} : vector<512x128xbf16>, vector<128x128xbf16>, vector<512x128xf32> -> vector<512x128xf32>
    %c0_3 = arith.constant 0 : index
    %c0_4 = arith.constant 0 : index
    %3 = vector.load %arg2[%c0_3, %c0_4] : memref<1x128xf32, #tpu.memory_space<vmem>>, vector<1x128xf32>
    %4 = vector.broadcast %3 : vector<1x128xf32> to vector<512x128xf32>
    %5 = arith.addf %2, %4 : vector<512x128xf32>
    %cst_5 = arith.constant dense<0.000000e+00> : vector<128xf32>
    %6 = vector.multi_reduction <add>, %5, %cst_5 [0] : vector<512x128xf32> to vector<128xf32>
    %7 = vector.shape_cast %6 : vector<128xf32> to vector<1x128xf32>
    %cst_6 = arith.constant 5.120000e+02 : f32
    %8 = vector.broadcast %cst_6 : f32 to vector<1x128xf32>
    %9 = arith.divf %7, %8 : vector<1x128xf32>
    %10 = arith.mulf %5, %5 : vector<512x128xf32>
    %cst_7 = arith.constant dense<0.000000e+00> : vector<128xf32>
    %11 = vector.multi_reduction <add>, %10, %cst_7 [0] : vector<512x128xf32> to vector<128xf32>
    %12 = vector.shape_cast %11 : vector<128xf32> to vector<1x128xf32>
    %cst_8 = arith.constant 5.120000e+02 : f32
    %13 = vector.broadcast %cst_8 : f32 to vector<1x128xf32>
    %14 = arith.divf %12, %13 : vector<1x128xf32>
    %15 = arith.mulf %9, %9 : vector<1x128xf32>
    %16 = arith.subf %14, %15 : vector<1x128xf32>
    %cst_9 = arith.constant 0.000000e+00 : f32
    %17 = vector.broadcast %cst_9 : f32 to vector<1x128xf32>
    %18 = arith.maximumf %16, %17 : vector<1x128xf32>
    %c0_10 = arith.constant 0 : index
    %c0_11 = arith.constant 0 : index
    %19 = vector.load %arg3[%c0_10, %c0_11] : memref<1x128xf32, #tpu.memory_space<vmem>>, vector<1x128xf32>
    %cst_12 = arith.constant 9.99999974E-6 : f32
    %20 = vector.broadcast %cst_12 : f32 to vector<1x128xf32>
    %21 = arith.addf %18, %20 : vector<1x128xf32>
    %22 = math.rsqrt %21 : vector<1x128xf32>
    %23 = arith.mulf %19, %22 : vector<1x128xf32>
    %24 = vector.broadcast %23 : vector<1x128xf32> to vector<512x128xf32>
    %25 = arith.mulf %5, %24 : vector<512x128xf32>
    %c0_13 = arith.constant 0 : index
    %c0_14 = arith.constant 0 : index
    %26 = vector.load %arg4[%c0_13, %c0_14] : memref<1x128xf32, #tpu.memory_space<vmem>>, vector<1x128xf32>
    %27 = arith.mulf %9, %23 : vector<1x128xf32>
    %28 = arith.subf %26, %27 : vector<1x128xf32>
    %29 = vector.broadcast %28 : vector<1x128xf32> to vector<512x128xf32>
    %30 = arith.addf %25, %29 : vector<512x128xf32>
    %c0_15 = arith.constant 0 : index
    %c0_16 = arith.constant 0 : index
    %31 = vector.load %arg15[%c0_15, %c0_16] : memref<536x128xf32, #tpu.memory_space<vmem>>, vector<512x128xf32>
    tpu.vector_store %arg15[%c0_15, %c0_16], %30 {strides = array<i32>} : memref<536x128xf32, #tpu.memory_space<vmem>>, vector<512x128xf32>,
    %cst_17 = arith.constant 0.000000e+00 : f32
    %32 = vector.broadcast %cst_17 : f32 to vector<24x128xf32>
    %c512 = arith.constant 512 : index
    %c0_18 = arith.constant 0 : index
    %33 = vector.load %arg15[%c512, %c0_18] : memref<536x128xf32, #tpu.memory_space<vmem>>, vector<24x128xf32>
    tpu.vector_store %arg15[%c512, %c0_18], %32 {strides = array<i32>} : memref<536x128xf32, #tpu.memory_space<vmem>>, vector<24x128xf32>,
    %c0_19 = arith.constant 0 : index
    %c0_20 = arith.constant 0 : index
    %34 = vector.load %arg15[%c0_19, %c0_20] : memref<536x128xf32, #tpu.memory_space<vmem>>, vector<512x128xf32>
    %c1 = arith.constant 1 : index
    %c0_21 = arith.constant 0 : index
    %35 = vector.load %arg15[%c1, %c0_21] : memref<536x128xf32, #tpu.memory_space<vmem>>, vector<512x128xf32>
    %36 = arith.maximumf %34, %35 : vector<512x128xf32>
    %c16 = arith.constant 16 : index
    %c0_22 = arith.constant 0 : index
    %37 = vector.load %arg15[%c16, %c0_22] : memref<536x128xf32, #tpu.memory_space<vmem>>, vector<512x128xf32>
    %38 = arith.maximumf %36, %37 : vector<512x128xf32>
    %c17 = arith.constant 17 : index
    %c0_23 = arith.constant 0 : index
    %39 = vector.load %arg15[%c17, %c0_23] : memref<536x128xf32, #tpu.memory_space<vmem>>, vector<512x128xf32>
    %40 = arith.maximumf %38, %39 : vector<512x128xf32>
    %cst_24 = arith.constant 0.000000e+00 : f32
    %41 = vector.broadcast %cst_24 : f32 to vector<512x128xf32>
    %42 = arith.maximumf %40, %41 : vector<512x128xf32>
    %c0_25 = arith.constant 0 : index
    %c0_26 = arith.constant 0 : index
    %43 = vector.load %arg10[%c0_25, %c0_26] : memref<128x512xbf16, #tpu.memory_space<vmem>>, vector<128x512xbf16>
    %44 = arith.truncf %42 : vector<512x128xf32> to vector<512x128xbf16>
    %cst_27 = arith.constant dense<0.000000e+00> : vector<128x128xf32>
    %45 = tpu.matmul %43, %44, %cst_27 {dimension_numbers = #tpu.dot_dimension_numbers<[1], [0], [0], [1], [0, 0, 1, 1], [], []>} : vector<128x512xbf16>, vector<512x128xbf16>, vector<128x128xf32> -> vector<128x128xf32>
    %46 = arith.truncf %45 : vector<128x128xf32> to vector<128x128xbf16>
    %c0_28 = arith.constant 0 : index
    %c0_29 = arith.constant 0 : index
    %47 = vector.load %arg16[%c0_28, %c0_29] : memref<168x128xbf16, #tpu.memory_space<vmem>>, vector<128x128xbf16>
    tpu.vector_store %arg16[%c0_28, %c0_29], %46 {strides = array<i32>} : memref<168x128xbf16, #tpu.memory_space<vmem>>, vector<128x128xbf16>,
    %cst_30 = arith.constant 0.000000e+00 : bf16
    %48 = vector.broadcast %cst_30 : bf16 to vector<40x128xbf16>
    %c128 = arith.constant 128 : index
    %c0_31 = arith.constant 0 : index
    %49 = vector.load %arg16[%c128, %c0_31] : memref<168x128xbf16, #tpu.memory_space<vmem>>, vector<40x128xbf16>
    tpu.vector_store %arg16[%c128, %c0_31], %48 {strides = array<i32>} : memref<168x128xbf16, #tpu.memory_space<vmem>>, vector<40x128xbf16>,
    %c0_32 = arith.constant 0 : index
    %c0_33 = arith.constant 0 : index
    %50 = vector.load %arg16[%c0_32, %c0_33] : memref<168x128xbf16, #tpu.memory_space<vmem>>, vector<168x128xbf16>
    %c0_34 = arith.constant 0 : index
    %c0_35 = arith.constant 0 : index
    %51 = vector.load %arg5[%c0_34, %c0_35] : memref<128x1664xbf16, #tpu.memory_space<vmem>>, vector<128x256xbf16>
    %cst_36 = arith.constant dense<0.000000e+00> : vector<168x256xf32>
    %52 = tpu.matmul %50, %51, %cst_36 {dimension_numbers = #tpu.dot_dimension_numbers<[1], [0], [0], [1], [0, 0, 1, 1], [], []>} : vector<168x128xbf16>, vector<128x256xbf16>, vector<168x256xf32> -> vector<168x256xf32>
    %c0_37 = arith.constant 0 : index
    %c0_38 = arith.constant 0 : index
    %53 = vector.load %arg17[%c0_37, %c0_38] : memref<168x1664xf32, #tpu.memory_space<vmem>>, vector<168x256xf32>
    tpu.vector_store %arg17[%c0_37, %c0_38], %52 {strides = array<i32>} : memref<168x1664xf32, #tpu.memory_space<vmem>>, vector<168x256xf32>,
    %c0_39 = arith.constant 0 : index
    %c256 = arith.constant 256 : index
    %54 = vector.load %arg5[%c0_39, %c256] : memref<128x1664xbf16, #tpu.memory_space<vmem>>, vector<128x256xbf16>
    %cst_40 = arith.constant dense<0.000000e+00> : vector<168x256xf32>
    %55 = tpu.matmul %50, %54, %cst_40 {dimension_numbers = #tpu.dot_dimension_numbers<[1], [0], [0], [1], [0, 0, 1, 1], [], []>} : vector<168x128xbf16>, vector<128x256xbf16>, vector<168x256xf32> -> vector<168x256xf32>
    %c0_41 = arith.constant 0 : index
    %c256_42 = arith.constant 256 : index
    %56 = vector.load %arg17[%c0_41, %c256_42] : memref<168x1664xf32, #tpu.memory_space<vmem>>, vector<168x256xf32>
    tpu.vector_store %arg17[%c0_41, %c256_42], %55 {strides = array<i32>} : memref<168x1664xf32, #tpu.memory_space<vmem>>, vector<168x256xf32>,
    %c0_43 = arith.constant 0 : index
    %c512_44 = arith.constant 512 : index
    %57 = vector.load %arg5[%c0_43, %c512_44] : memref<128x1664xbf16, #tpu.memory_space<vmem>>, vector<128x256xbf16>
    %cst_45 = arith.constant dense<0.000000e+00> : vector<168x256xf32>
    %58 = tpu.matmul %50, %57, %cst_45 {dimension_numbers = #tpu.dot_dimension_numbers<[1], [0], [0], [1], [0, 0, 1, 1], [], []>} : vector<168x128xbf16>, vector<128x256xbf16>, vector<168x256xf32> -> vector<168x256xf32>
    %c0_46 = arith.constant 0 : index
    %c512_47 = arith.constant 512 : index
    %59 = vector.load %arg17[%c0_46, %c512_47] : memref<168x1664xf32, #tpu.memory_space<vmem>>, vector<168x256xf32>
    tpu.vector_store %arg17[%c0_46, %c512_47], %58 {strides = array<i32>} : memref<168x1664xf32, #tpu.memory_space<vmem>>, vector<168x256xf32>,
    %c0_48 = arith.constant 0 : index
    %c768 = arith.constant 768 : index
    %60 = vector.load %arg5[%c0_48, %c768] : memref<128x1664xbf16, #tpu.memory_space<vmem>>, vector<128x256xbf16>
    %cst_49 = arith.constant dense<0.000000e+00> : vector<168x256xf32>
    %61 = tpu.matmul %50, %60, %cst_49 {dimension_numbers = #tpu.dot_dimension_numbers<[1], [0], [0], [1], [0, 0, 1, 1], [], []>} : vector<168x128xbf16>, vector<128x256xbf16>, vector<168x256xf32> -> vector<168x256xf32>
    %c0_50 = arith.constant 0 : index
    %c768_51 = arith.constant 768 : index
    %62 = vector.load %arg17[%c0_50, %c768_51] : memref<168x1664xf32, #tpu.memory_space<vmem>>, vector<168x256xf32>
    tpu.vector_store %arg17[%c0_50, %c768_51], %61 {strides = array<i32>} : memref<168x1664xf32, #tpu.memory_space<vmem>>, vector<168x256xf32>,
    %c0_52 = arith.constant 0 : index
    %c1024 = arith.constant 1024 : index
    %63 = vector.load %arg5[%c0_52, %c1024] : memref<128x1664xbf16, #tpu.memory_space<vmem>>, vector<128x256xbf16>
    %cst_53 = arith.constant dense<0.000000e+00> : vector<168x256xf32>
    %64 = tpu.matmul %50, %63, %cst_53 {dimension_numbers = #tpu.dot_dimension_numbers<[1], [0], [0], [1], [0, 0, 1, 1], [], []>} : vector<168x128xbf16>, vector<128x256xbf16>, vector<168x256xf32> -> vector<168x256xf32>
    %c0_54 = arith.constant 0 : index
    %c1024_55 = arith.constant 1024 : index
    %65 = vector.load %arg17[%c0_54, %c1024_55] : memref<168x1664xf32, #tpu.memory_space<vmem>>, vector<168x256xf32>
    tpu.vector_store %arg17[%c0_54, %c1024_55], %64 {strides = array<i32>} : memref<168x1664xf32, #tpu.memory_space<vmem>>, vector<168x256xf32>,
    %c0_56 = arith.constant 0 : index
    %c1280 = arith.constant 1280 : index
    %66 = vector.load %arg5[%c0_56, %c1280] : memref<128x1664xbf16, #tpu.memory_space<vmem>>, vector<128x256xbf16>
    %cst_57 = arith.constant dense<0.000000e+00> : vector<168x256xf32>
    %67 = tpu.matmul %50, %66, %cst_57 {dimension_numbers = #tpu.dot_dimension_numbers<[1], [0], [0], [1], [0, 0, 1, 1], [], []>} : vector<168x128xbf16>, vector<128x256xbf16>, vector<168x256xf32> -> vector<168x256xf32>
    %c0_58 = arith.constant 0 : index
    %c1280_59 = arith.constant 1280 : index
    %68 = vector.load %arg17[%c0_58, %c1280_59] : memref<168x1664xf32, #tpu.memory_space<vmem>>, vector<168x256xf32>
    tpu.vector_store %arg17[%c0_58, %c1280_59], %67 {strides = array<i32>} : memref<168x1664xf32, #tpu.memory_space<vmem>>, vector<168x256xf32>,
    %c0_60 = arith.constant 0 : index
    %c1536 = arith.constant 1536 : index
    %69 = vector.load %arg5[%c0_60, %c1536] : memref<128x1664xbf16, #tpu.memory_space<vmem>>, vector<128x128xbf16>
    %cst_61 = arith.constant dense<0.000000e+00> : vector<168x128xf32>
    %70 = tpu.matmul %50, %69, %cst_61 {dimension_numbers = #tpu.dot_dimension_numbers<[1], [0], [0], [1], [0, 0, 1, 1], [], []>} : vector<168x128xbf16>, vector<128x128xbf16>, vector<168x128xf32> -> vector<168x128xf32>
    %c0_62 = arith.constant 0 : index
    %c1536_63 = arith.constant 1536 : index
    %71 = vector.load %arg17[%c0_62, %c1536_63] : memref<168x1664xf32, #tpu.memory_space<vmem>>, vector<168x128xf32>
    tpu.vector_store %arg17[%c0_62, %c1536_63], %70 {strides = array<i32>} : memref<168x1664xf32, #tpu.memory_space<vmem>>, vector<168x128xf32>,
    %cst_64 = arith.constant 0.000000e+00 : f32
    %72 = vector.broadcast %cst_64 : f32 to vector<128x128xf32>
    %cst_65 = arith.constant 0.000000e+00 : f32
    %73 = vector.broadcast %cst_65 : f32 to vector<128x128xf32>
    %c0_66 = arith.constant 0 : index
    %c0_67 = arith.constant 0 : index
    %74 = vector.load %arg17[%c0_66, %c0_67] : memref<168x1664xf32, #tpu.memory_space<vmem>>, vector<128x128xf32>
    %75 = arith.addf %72, %74 : vector<128x128xf32>
    %c1_68 = arith.constant 1 : index
    %c0_69 = arith.constant 0 : index
    %76 = vector.load %arg17[%c1_68, %c0_69] : memref<168x1664xf32, #tpu.memory_space<vmem>>, vector<128x128xf32>
    %77 = arith.addf %73, %76 : vector<128x128xf32>
    %c2 = arith.constant 2 : index
    %c128_70 = arith.constant 128 : index
    %78 = vector.load %arg17[%c2, %c128_70] : memref<168x1664xf32, #tpu.memory_space<vmem>>, vector<128x128xf32>
    %79 = arith.addf %75, %78 : vector<128x128xf32>
    %c3 = arith.constant 3 : index
    %c128_71 = arith.constant 128 : index
    %80 = vector.load %arg17[%c3, %c128_71] : memref<168x1664xf32, #tpu.memory_space<vmem>>, vector<128x128xf32>
    %81 = arith.addf %77, %80 : vector<128x128xf32>
    %c4 = arith.constant 4 : index
    %c256_72 = arith.constant 256 : index
    %82 = vector.load %arg17[%c4, %c256_72] : memref<168x1664xf32, #tpu.memory_space<vmem>>, vector<128x128xf32>
    %83 = arith.addf %79, %82 : vector<128x128xf32>
    %c8 = arith.constant 8 : index
    %c256_73 = arith.constant 256 : index
    %84 = vector.load %arg17[%c8, %c256_73] : memref<168x1664xf32, #tpu.memory_space<vmem>>, vector<128x128xf32>
    %85 = arith.addf %81, %84 : vector<128x128xf32>
    %c9 = arith.constant 9 : index
    %c384 = arith.constant 384 : index
    %86 = vector.load %arg17[%c9, %c384] : memref<168x1664xf32, #tpu.memory_space<vmem>>, vector<128x128xf32>
    %87 = arith.addf %83, %86 : vector<128x128xf32>
    %c10 = arith.constant 10 : index
    %c384_74 = arith.constant 384 : index
    %88 = vector.load %arg17[%c10, %c384_74] : memref<168x1664xf32, #tpu.memory_space<vmem>>, vector<128x128xf32>
    %89 = arith.addf %85, %88 : vector<128x128xf32>
    %c11 = arith.constant 11 : index
    %c512_75 = arith.constant 512 : index
    %90 = vector.load %arg17[%c11, %c512_75] : memref<168x1664xf32, #tpu.memory_space<vmem>>, vector<128x128xf32>
    %91 = arith.addf %87, %90 : vector<128x128xf32>
    %c12 = arith.constant 12 : index
    %c512_76 = arith.constant 512 : index
    %92 = vector.load %arg17[%c12, %c512_76] : memref<168x1664xf32, #tpu.memory_space<vmem>>, vector<128x128xf32>
    %93 = arith.addf %89, %92 : vector<128x128xf32>
    %c16_77 = arith.constant 16 : index
    %c640 = arith.constant 640 : index
    %94 = vector.load %arg17[%c16_77, %c640] : memref<168x1664xf32, #tpu.memory_space<vmem>>, vector<128x128xf32>
    %95 = arith.addf %91, %94 : vector<128x128xf32>
    %c17_78 = arith.constant 17 : index
    %c640_79 = arith.constant 640 : index
    %96 = vector.load %arg17[%c17_78, %c640_79] : memref<168x1664xf32, #tpu.memory_space<vmem>>, vector<128x128xf32>
    %97 = arith.addf %93, %96 : vector<128x128xf32>
    %c18 = arith.constant 18 : index
    %c768_80 = arith.constant 768 : index
    %98 = vector.load %arg17[%c18, %c768_80] : memref<168x1664xf32, #tpu.memory_space<vmem>>, vector<128x128xf32>
    %99 = arith.addf %95, %98 : vector<128x128xf32>
    %c19 = arith.constant 19 : index
    %c768_81 = arith.constant 768 : index
    %100 = vector.load %arg17[%c19, %c768_81] : memref<168x1664xf32, #tpu.memory_space<vmem>>, vector<128x128xf32>
    %101 = arith.addf %97, %100 : vector<128x128xf32>
    %c20 = arith.constant 20 : index
    %c896 = arith.constant 896 : index
    %102 = vector.load %arg17[%c20, %c896] : memref<168x1664xf32, #tpu.memory_space<vmem>>, vector<128x128xf32>
    %103 = arith.addf %99, %102 : vector<128x128xf32>
    %c24 = arith.constant 24 : index
    %c896_82 = arith.constant 896 : index
    %104 = vector.load %arg17[%c24, %c896_82] : memref<168x1664xf32, #tpu.memory_space<vmem>>, vector<128x128xf32>
    %105 = arith.addf %101, %104 : vector<128x128xf32>
    %c25 = arith.constant 25 : index
    %c1024_83 = arith.constant 1024 : index
    %106 = vector.load %arg17[%c25, %c1024_83] : memref<168x1664xf32, #tpu.memory_space<vmem>>, vector<128x128xf32>
    %107 = arith.addf %103, %106 : vector<128x128xf32>
    %c26 = arith.constant 26 : index
    %c1024_84 = arith.constant 1024 : index
    %108 = vector.load %arg17[%c26, %c1024_84] : memref<168x1664xf32, #tpu.memory_space<vmem>>, vector<128x128xf32>
    %109 = arith.addf %105, %108 : vector<128x128xf32>
    %c27 = arith.constant 27 : index
    %c1152 = arith.constant 1152 : index
    %110 = vector.load %arg17[%c27, %c1152] : memref<168x1664xf32, #tpu.memory_space<vmem>>, vector<128x128xf32>
    %111 = arith.addf %107, %110 : vector<128x128xf32>
    %c28 = arith.constant 28 : index
    %c1152_85 = arith.constant 1152 : index
    %112 = vector.load %arg17[%c28, %c1152_85] : memref<168x1664xf32, #tpu.memory_space<vmem>>, vector<128x128xf32>
    %113 = arith.addf %109, %112 : vector<128x128xf32>
    %c32 = arith.constant 32 : index
    %c1280_86 = arith.constant 1280 : index
    %114 = vector.load %arg17[%c32, %c1280_86] : memref<168x1664xf32, #tpu.memory_space<vmem>>, vector<128x128xf32>
    %115 = arith.addf %111, %114 : vector<128x128xf32>
    %c33 = arith.constant 33 : index
    %c1280_87 = arith.constant 1280 : index
    %116 = vector.load %arg17[%c33, %c1280_87] : memref<168x1664xf32, #tpu.memory_space<vmem>>, vector<128x128xf32>
    %117 = arith.addf %113, %116 : vector<128x128xf32>
    %c34 = arith.constant 34 : index
    %c1408 = arith.constant 1408 : index
    %118 = vector.load %arg17[%c34, %c1408] : memref<168x1664xf32, #tpu.memory_space<vmem>>, vector<128x128xf32>
    %119 = arith.addf %115, %118 : vector<128x128xf32>
    %c35 = arith.constant 35 : index
    %c1408_88 = arith.constant 1408 : index
    %120 = vector.load %arg17[%c35, %c1408_88] : memref<168x1664xf32, #tpu.memory_space<vmem>>, vector<128x128xf32>
    %121 = arith.addf %117, %120 : vector<128x128xf32>
    %c36 = arith.constant 36 : index
    %c1536_89 = arith.constant 1536 : index
    %122 = vector.load %arg17[%c36, %c1536_89] : memref<168x1664xf32, #tpu.memory_space<vmem>>, vector<128x128xf32>
    %123 = arith.addf %119, %122 : vector<128x128xf32>
    %c64_i32 = arith.constant 64 : i32
    %124 = tpu.dynamic_rotate %121 by %c64_i32 dim 1 : vector<128x128xf32>, i32 -> vector<128x128xf32>
    %125 = arith.addf %123, %124 : vector<128x128xf32>
    %c0_90 = arith.constant 0 : index
    %c0_91 = arith.constant 0 : index
    %126 = vector.load %arg6[%c0_90, %c0_91] : memref<1x128xf32, #tpu.memory_space<vmem>>, vector<1x128xf32>
    %127 = vector.broadcast %126 : vector<1x128xf32> to vector<128x128xf32>
    %128 = arith.addf %125, %127 : vector<128x128xf32>
    %c0_92 = arith.constant 0 : index
    %c0_93 = arith.constant 0 : index
    %129 = vector.load %arg9[%c0_92, %c0_93] : memref<128x1xf32, #tpu.memory_space<vmem>>, vector<128x1xf32>
    %130 = vector.broadcast %129 : vector<128x1xf32> to vector<128x128xf32>
    %131 = arith.mulf %128, %130 : vector<128x128xf32>
    %cst_94 = arith.constant dense<0.000000e+00> : vector<128xf32>
    %132 = vector.multi_reduction <add>, %131, %cst_94 [0] : vector<128x128xf32> to vector<128xf32>
    %133 = vector.shape_cast %132 : vector<128xf32> to vector<1x128xf32>
    %cst_95 = arith.constant 3.125000e-02 : f32
    %134 = vector.broadcast %cst_95 : f32 to vector<1x128xf32>
    %135 = arith.mulf %133, %134 : vector<1x128xf32>
    %136 = arith.mulf %128, %128 : vector<128x128xf32>
    %137 = vector.broadcast %129 : vector<128x1xf32> to vector<128x128xf32>
    %138 = arith.mulf %136, %137 : vector<128x128xf32>
    %cst_96 = arith.constant dense<0.000000e+00> : vector<128xf32>
    %139 = vector.multi_reduction <add>, %138, %cst_96 [0] : vector<128x128xf32> to vector<128xf32>
    %140 = vector.shape_cast %139 : vector<128xf32> to vector<1x128xf32>
    %cst_97 = arith.constant 3.125000e-02 : f32
    %141 = vector.broadcast %cst_97 : f32 to vector<1x128xf32>
    %142 = arith.mulf %140, %141 : vector<1x128xf32>
    %143 = arith.mulf %135, %135 : vector<1x128xf32>
    %144 = arith.subf %142, %143 : vector<1x128xf32>
    %cst_98 = arith.constant 0.000000e+00 : f32
    %145 = vector.broadcast %cst_98 : f32 to vector<1x128xf32>
    %146 = arith.maximumf %144, %145 : vector<1x128xf32>
    %c0_99 = arith.constant 0 : index
    %c0_100 = arith.constant 0 : index
    %147 = vector.load %arg7[%c0_99, %c0_100] : memref<1x128xf32, #tpu.memory_space<vmem>>, vector<1x128xf32>
    %cst_101 = arith.constant 9.99999974E-6 : f32
    %148 = vector.broadcast %cst_101 : f32 to vector<1x128xf32>
    %149 = arith.addf %146, %148 : vector<1x128xf32>
    %150 = math.rsqrt %149 : vector<1x128xf32>
    %151 = arith.mulf %147, %150 : vector<1x128xf32>
    %152 = vector.broadcast %151 : vector<1x128xf32> to vector<128x128xf32>
    %153 = arith.mulf %128, %152 : vector<128x128xf32>
    %c0_102 = arith.constant 0 : index
    %c0_103 = arith.constant 0 : index
    %154 = vector.load %arg8[%c0_102, %c0_103] : memref<1x128xf32, #tpu.memory_space<vmem>>, vector<1x128xf32>
    %155 = arith.mulf %135, %151 : vector<1x128xf32>
    %156 = arith.subf %154, %155 : vector<1x128xf32>
    %157 = vector.broadcast %156 : vector<1x128xf32> to vector<128x128xf32>
    %158 = arith.addf %153, %157 : vector<128x128xf32>
    %c0_104 = arith.constant 0 : index
    %c0_105 = arith.constant 0 : index
    %159 = vector.load %arg18[%c0_104, %c0_105] : memref<144x128xf32, #tpu.memory_space<vmem>>, vector<128x128xf32>
    tpu.vector_store %arg18[%c0_104, %c0_105], %158 {strides = array<i32>} : memref<144x128xf32, #tpu.memory_space<vmem>>, vector<128x128xf32>,
    %cst_106 = arith.constant 0.000000e+00 : f32
    %160 = vector.broadcast %cst_106 : f32 to vector<16x128xf32>
    %c128_107 = arith.constant 128 : index
    %c0_108 = arith.constant 0 : index
    %161 = vector.load %arg18[%c128_107, %c0_108] : memref<144x128xf32, #tpu.memory_space<vmem>>, vector<16x128xf32>
    tpu.vector_store %arg18[%c128_107, %c0_108], %160 {strides = array<i32>} : memref<144x128xf32, #tpu.memory_space<vmem>>, vector<16x128xf32>,
    %c0_109 = arith.constant 0 : index
    %c0_110 = arith.constant 0 : index
    %162 = vector.load %arg18[%c0_109, %c0_110] : memref<144x128xf32, #tpu.memory_space<vmem>>, vector<128x128xf32>
    %c1_111 = arith.constant 1 : index
    %c0_112 = arith.constant 0 : index
    %163 = vector.load %arg18[%c1_111, %c0_112] : memref<144x128xf32, #tpu.memory_space<vmem>>, vector<128x128xf32>
    %164 = arith.maximumf %162, %163 : vector<128x128xf32>
    %c8_113 = arith.constant 8 : index
    %c0_114 = arith.constant 0 : index
    %165 = vector.load %arg18[%c8_113, %c0_114] : memref<144x128xf32, #tpu.memory_space<vmem>>, vector<128x128xf32>
    %166 = arith.maximumf %164, %165 : vector<128x128xf32>
    %c9_115 = arith.constant 9 : index
    %c0_116 = arith.constant 0 : index
    %167 = vector.load %arg18[%c9_115, %c0_116] : memref<144x128xf32, #tpu.memory_space<vmem>>, vector<128x128xf32>
    %168 = arith.maximumf %166, %167 : vector<128x128xf32>
    %cst_117 = arith.constant 0.000000e+00 : f32
    %169 = vector.broadcast %cst_117 : f32 to vector<128x128xf32>
    %170 = arith.maximumf %168, %169 : vector<128x128xf32>
    %c0_118 = arith.constant 0 : index
    %c0_119 = arith.constant 0 : index
    %171 = vector.load %arg11[%c0_118, %c0_119] : memref<8x128xbf16, #tpu.memory_space<vmem>>, vector<8x128xbf16>
    %172 = arith.truncf %170 : vector<128x128xf32> to vector<128x128xbf16>
    %cst_120 = arith.constant dense<0.000000e+00> : vector<8x128xf32>
    %173 = tpu.matmul %171, %172, %cst_120 {dimension_numbers = #tpu.dot_dimension_numbers<[1], [0], [0], [1], [0, 0, 1, 1], [], []>} : vector<8x128xbf16>, vector<128x128xbf16>, vector<8x128xf32> -> vector<8x128xf32>
    %174 = vector.extract_strided_slice %173 {offsets = [0, 0], sizes = [2, 128], strides = [1, 1]} : vector<8x128xf32> to vector<2x128xf32>
    %175 = arith.truncf %174 : vector<2x128xf32> to vector<2x128xbf16>
    %c0_121 = arith.constant 0 : index
    %c0_122 = arith.constant 0 : index
    %176 = vector.load %arg19[%c0_121, %c0_122] : memref<8x512xbf16, #tpu.memory_space<vmem>>, vector<2x128xbf16>
    tpu.vector_store %arg19[%c0_121, %c0_122], %175 {strides = array<i32>} : memref<8x512xbf16, #tpu.memory_space<vmem>>, vector<2x128xbf16>,
    %177 = vector.extract_strided_slice %173 {offsets = [2, 0], sizes = [2, 128], strides = [1, 1]} : vector<8x128xf32> to vector<2x128xf32>
    %178 = arith.truncf %177 : vector<2x128xf32> to vector<2x128xbf16>
    %c0_123 = arith.constant 0 : index
    %c128_124 = arith.constant 128 : index
    %179 = vector.load %arg19[%c0_123, %c128_124] : memref<8x512xbf16, #tpu.memory_space<vmem>>, vector<2x128xbf16>
    tpu.vector_store %arg19[%c0_123, %c128_124], %178 {strides = array<i32>} : memref<8x512xbf16, #tpu.memory_space<vmem>>, vector<2x128xbf16>,
    %180 = vector.extract_strided_slice %173 {offsets = [4, 0], sizes = [2, 128], strides = [1, 1]} : vector<8x128xf32> to vector<2x128xf32>
    %181 = arith.truncf %180 : vector<2x128xf32> to vector<2x128xbf16>
    %c0_125 = arith.constant 0 : index
    %c256_126 = arith.constant 256 : index
    %182 = vector.load %arg19[%c0_125, %c256_126] : memref<8x512xbf16, #tpu.memory_space<vmem>>, vector<2x128xbf16>
    tpu.vector_store %arg19[%c0_125, %c256_126], %181 {strides = array<i32>} : memref<8x512xbf16, #tpu.memory_space<vmem>>, vector<2x128xbf16>,
    %183 = vector.extract_strided_slice %173 {offsets = [6, 0], sizes = [2, 128], strides = [1, 1]} : vector<8x128xf32> to vector<2x128xf32>
    %184 = arith.truncf %183 : vector<2x128xf32> to vector<2x128xbf16>
    %c0_127 = arith.constant 0 : index
    %c384_128 = arith.constant 384 : index
    %185 = vector.load %arg19[%c0_127, %c384_128] : memref<8x512xbf16, #tpu.memory_space<vmem>>, vector<2x128xbf16>
    tpu.vector_store %arg19[%c0_127, %c384_128], %184 {strides = array<i32>} : memref<8x512xbf16, #tpu.memory_space<vmem>>, vector<2x128xbf16>,
    %c0_129 = arith.constant 0 : index
    %c0_130 = arith.constant 0 : index
    %186 = vector.load %arg19[%c0_129, %c0_130] : memref<8x512xbf16, #tpu.memory_space<vmem>>, vector<2x512xbf16>
    %c0_131 = arith.constant 0 : index
    %c0_132 = arith.constant 0 : index
    %187 = vector.load %arg12[%c0_131, %c0_132] : memref<512x3xbf16, #tpu.memory_space<vmem>>, vector<512x3xbf16>
    %cst_133 = arith.constant dense<0.000000e+00> : vector<2x3xf32>
    %188 = tpu.matmul %186, %187, %cst_133 {dimension_numbers = #tpu.dot_dimension_numbers<[1], [0], [0], [1], [0, 0, 1, 1], [], []>} : vector<2x512xbf16>, vector<512x3xbf16>, vector<2x3xf32> -> vector<2x3xf32>
    %c0_134 = arith.constant 0 : index
    %c0_135 = arith.constant 0 : index
    %189 = vector.load %arg13[%c0_134, %c0_135] : memref<1x3xf32, #tpu.memory_space<vmem>>, vector<1x3xf32>
    %190 = vector.broadcast %189 : vector<1x3xf32> to vector<2x3xf32>
    %191 = arith.addf %188, %190 : vector<2x3xf32>
    %c0_136 = arith.constant 0 : index
    %c0_137 = arith.constant 0 : index
    %192 = vector.load %arg14[%c0_136, %c0_137] : memref<2x3xf32, #tpu.memory_space<vmem>>, vector<2x3xf32>
    tpu.vector_store %arg14[%c0_136, %c0_137], %191 {strides = array<i32>} : memref<2x3xf32, #tpu.memory_space<vmem>>, vector<2x3xf32>,
    return
  }
}

</mosaic_0001>

<llo_original>
// kernel: forward.1
$region0: #{forward.1}
  #allocation0 [shape = 'u32[]', space=smem, size = 0x4, offset = 0x4, fixed_abs, tag = 'smem constant byte address 0x4 - core index']
  #allocation1 [shape = 'u32[144,128]{1,0:T(1,128)}', space=vmem, size = 0x12000, scoped, tag = 'internal scratch']
  #allocation2 [shape = 'f32[536,128]{1,0:T(8,128)}', space=vmem, size = 0x43000, scoped, tag = 'scratch operand']
  #allocation3 [shape = 'bf16[168,128]{1,0:T(8,128)(2,1)}', space=vmem, size = 0xa800, scoped, tag = 'scratch operand']
  #allocation4 [shape = 'f32[168,1664]{1,0:T(8,128)}', space=vmem, size = 0x111000, scoped, tag = 'scratch operand']
  #allocation5 [shape = 'f32[144,128]{1,0:T(8,128)}', space=vmem, size = 0x12000, scoped, tag = 'scratch operand']
  #allocation6 [shape = 'bf16[8,512]{1,0:T(8,128)(2,1)}', space=vmem, size = 0x2000, scoped, tag = 'scratch operand']
  %s0 = inlined_call_operand.vmem [shape: bf16[512,128], index: 0, kind: input, shape index: {}]
  %s1 = inlined_call_operand.vmem [shape: bf16[128,128], index: 1, kind: input, shape index: {}]
  %s2 = inlined_call_operand.vmem [shape: f32[1,128], index: 2, kind: input, shape index: {}]
  %s3 = inlined_call_operand.vmem [shape: f32[1,128], index: 3, kind: input, shape index: {}]
  %s4 = inlined_call_operand.vmem [shape: f32[1,128], index: 4, kind: input, shape index: {}]
  %s5 = inlined_call_operand.vmem [shape: bf16[128,1664], index: 5, kind: input, shape index: {}]
  %s6 = inlined_call_operand.vmem [shape: f32[1,128], index: 6, kind: input, shape index: {}]
  %s7 = inlined_call_operand.vmem [shape: f32[1,128], index: 7, kind: input, shape index: {}]
  %s8 = inlined_call_operand.vmem [shape: f32[1,128], index: 8, kind: input, shape index: {}]
  %s9 = inlined_call_operand.vmem [shape: f32[128,1], index: 9, kind: input, shape index: {}]
  %s10 = inlined_call_operand.vmem [shape: bf16[128,512], index: 10, kind: input, shape index: {}]
  %s11 = inlined_call_operand.vmem [shape: bf16[8,128], index: 11, kind: input, shape index: {}]
  %s12 = inlined_call_operand.vmem [shape: bf16[512,3], index: 12, kind: input, shape index: {}]
  %s13 = inlined_call_operand.vmem [shape: f32[1,3], index: 13, kind: input, shape index: {}]
  %s14 = inlined_call_operand.hbm [shape: f32[2,3], index: 14, kind: output, shape index: {}]
  %s15 = sld [smem:[#allocation0]]
  $region66: #{forward.1} parent=0
    _
  %s17 = ssub.s32 1, %s15
  %s18 = scalar_select 0, %s17, %s15
  $region1: #{forward.1} parent=0
    #allocation7 [shape = 'u8[1024]{0}', space=vmem, size = 0x400, scoped, tag = 'output window, operand 0, single buffered']
    #allocation8 [shape = 's32[1]{0}', space=sflag, size = 0x4, scoped, tag = 'scoped memory for forward.1']
    %19 = vsyncpa [#allocation8], 0
    // Predicated region
    $region2: #{forward.1} parent=1 // pred_check
      _
    $region3: #{forward.1} parent=1 // pred_check_branch
      %21 = sbr.rel (0) target = $region5
    $region4: #{forward.1} parent=1 // pred_region
      _
    $region5: #{forward.1} parent=1 // pred_fallthru
      _
    // Predicated region
    $region6: #{forward.1} parent=1 // pred_check
      _
    $region7: #{forward.1} parent=1 // pred_check_branch
      %23 = sbr.rel (0) target = $region9
    $region8: #{forward.1} parent=1 // pred_region
      _
    $region9: #{forward.1} parent=1 // pred_fallthru
      _
    // Predicated region
    $region10: #{forward.1} parent=1 // pred_check
      _
    $region11: #{forward.1} parent=1 // pred_check_branch
      %25 = sbr.rel (0) target = $region13
    $region12: #{forward.1} parent=1 // pred_region
      _
    $region13: #{forward.1} parent=1 // pred_fallthru
      _
    // Predicated region
    $region14: #{forward.1} parent=1 // pred_check
      _
    $region15: #{forward.1} parent=1 // pred_check_branch
      %27 = sbr.rel (0) target = $region17
    $region16: #{forward.1} parent=1 // pred_region
      _
    $region17: #{forward.1} parent=1 // pred_fallthru
      _
    // Predicated region
    $region18: #{forward.1} parent=1 // pred_check
      _
    $region19: #{forward.1} parent=1 // pred_check_branch
      %29 = sbr.rel (0) target = $region21
    $region20: #{forward.1} parent=1 // pred_region
      _
    $region21: #{forward.1} parent=1 // pred_fallthru
      _
    // Predicated region
    $region22: #{forward.1} parent=1 // pred_check
      _
    $region23: #{forward.1} parent=1 // pred_check_branch
      %31 = sbr.rel (0) target = $region25
    $region24: #{forward.1} parent=1 // pred_region
      _
    $region25: #{forward.1} parent=1 // pred_fallthru
      _
    // Predicated region
    $region26: #{forward.1} parent=1 // pred_check
      _
    $region27: #{forward.1} parent=1 // pred_check_branch
      %33 = sbr.rel (0) target = $region29
    $region28: #{forward.1} parent=1 // pred_region
      _
    $region29: #{forward.1} parent=1 // pred_fallthru
      _
    // Predicated region
    $region30: #{forward.1} parent=1 // pred_check
      _
    $region31: #{forward.1} parent=1 // pred_check_branch
      %35 = sbr.rel (0) target = $region33
    $region32: #{forward.1} parent=1 // pred_region
      _
    $region33: #{forward.1} parent=1 // pred_fallthru
      _
    // Predicated region
    $region34: #{forward.1} parent=1 // pred_check
      _
    $region35: #{forward.1} parent=1 // pred_check_branch
      %37 = sbr.rel (0) target = $region37
    $region36: #{forward.1} parent=1 // pred_region
      _
    $region37: #{forward.1} parent=1 // pred_fallthru
      _
    // Predicated region
    $region38: #{forward.1} parent=1 // pred_check
      _
    $region39: #{forward.1} parent=1 // pred_check_branch
      %39 = sbr.rel (0) target = $region41
    $region40: #{forward.1} parent=1 // pred_region
      _
    $region41: #{forward.1} parent=1 // pred_fallthru
      _
    // Predicated region
    $region42: #{forward.1} parent=1 // pred_check
      _
    $region43: #{forward.1} parent=1 // pred_check_branch
      %41 = sbr.rel (0) target = $region45
    $region44: #{forward.1} parent=1 // pred_region
      _
    $region45: #{forward.1} parent=1 // pred_fallthru
      _
    // Predicated region
    $region46: #{forward.1} parent=1 // pred_check
      _
    $region47: #{forward.1} parent=1 // pred_check_branch
      %43 = sbr.rel (0) target = $region49
    $region48: #{forward.1} parent=1 // pred_region
      _
    $region49: #{forward.1} parent=1 // pred_fallthru
      _
    // Predicated region
    $region50: #{forward.1} parent=1 // pred_check
      _
    $region51: #{forward.1} parent=1 // pred_check_branch
      %45 = sbr.rel (0) target = $region53
    $region52: #{forward.1} parent=1 // pred_region
      _
    $region53: #{forward.1} parent=1 // pred_fallthru
      _
    // Predicated region
    $region54: #{forward.1} parent=1 // pred_check
      _
    $region55: #{forward.1} parent=1 // pred_check_branch
      %47 = sbr.rel (0) target = $region57
    $region56: #{forward.1} parent=1 // pred_region
      _
    $region57: #{forward.1} parent=1 // pred_fallthru
      _
    %v49 = vld [vmem:[%s0] sm:$0xf]
    %v50 = vld [vmem:[%s0 + $0x4] sm:$0xf]
    %v51 = vld [vmem:[%s0 + $0x8] sm:$0xf]
    %v52 = vld [vmem:[%s0 + $0xc] sm:$0xf]
    %v53 = vld [vmem:[%s0 + $0x10] sm:$0xf]
    %v54 = vld [vmem:[%s0 + $0x14] sm:$0xf]
    %v55 = vld [vmem:[%s0 + $0x18] sm:$0xf]
    %v56 = vld [vmem:[%s0 + $0x1c] sm:$0xf]
    %v57 = vld [vmem:[%s0 + $0x20] sm:$0xf]
    %v58 = vld [vmem:[%s0 + $0x24] sm:$0xf]
    %v59 = vld [vmem:[%s0 + $0x28] sm:$0xf]
    %v60 = vld [vmem:[%s0 + $0x2c] sm:$0xf]
    %v61 = vld [vmem:[%s0 + $0x30] sm:$0xf]
    %v62 = vld [vmem:[%s0 + $0x34] sm:$0xf]
    %v63 = vld [vmem:[%s0 + $0x38] sm:$0xf]
    %v64 = vld [vmem:[%s0 + $0x3c] sm:$0xf]
    %v65 = vld [vmem:[%s0 + $0x40] sm:$0xf]
    %v66 = vld [vmem:[%s0 + $0x44] sm:$0xf]
    %v67 = vld [vmem:[%s0 + $0x48] sm:$0xf]
    %v68 = vld [vmem:[%s0 + $0x4c] sm:$0xf]
    %v69 = vld [vmem:[%s0 + $0x50] sm:$0xf]
    %v70 = vld [vmem:[%s0 + $0x54] sm:$0xf]
    %v71 = vld [vmem:[%s0 + $0x58] sm:$0xf]
    %v72 = vld [vmem:[%s0 + $0x5c] sm:$0xf]
    %v73 = vld [vmem:[%s0 + $0x60] sm:$0xf]
    %v74 = vld [vmem:[%s0 + $0x64] sm:$0xf]
    %v75 = vld [vmem:[%s0 + $0x68] sm:$0xf]
    %v76 = vld [vmem:[%s0 + $0x6c] sm:$0xf]
    %v77 = vld [vmem:[%s0 + $0x70] sm:$0xf]
    %v78 = vld [vmem:[%s0 + $0x74] sm:$0xf]
    %v79 = vld [vmem:[%s0 + $0x78] sm:$0xf]
    %v80 = vld [vmem:[%s0 + $0x7c] sm:$0xf]
    %v81 = vld [vmem:[%s0 + $0x80] sm:$0xf]
    %v82 = vld [vmem:[%s0 + $0x84] sm:$0xf]
    %v83 = vld [vmem:[%s0 + $0x88] sm:$0xf]
    %v84 = vld [vmem:[%s0 + $0x8c] sm:$0xf]
    %v85 = vld [vmem:[%s0 + $0x90] sm:$0xf]
    %v86 = vld [vmem:[%s0 + $0x94] sm:$0xf]
    %v87 = vld [vmem:[%s0 + $0x98] sm:$0xf]
    %v88 = vld [vmem:[%s0 + $0x9c] sm:$0xf]
    %v89 = vld [vmem:[%s0 + $0xa0] sm:$0xf]
    %v90 = vld [vmem:[%s0 + $0xa4] sm:$0xf]
    %v91 = vld [vmem:[%s0 + $0xa8] sm:$0xf]
    %v92 = vld [vmem:[%s0 + $0xac] sm:$0xf]
    %v93 = vld [vmem:[%s0 + $0xb0] sm:$0xf]
    %v94 = vld [vmem:[%s0 + $0xb4] sm:$0xf]
    %v95 = vld [vmem:[%s0 + $0xb8] sm:$0xf]
    %v96 = vld [vmem:[%s0 + $0xbc] sm:$0xf]
    %v97 = vld [vmem:[%s0 + $0xc0] sm:$0xf]
    %v98 = vld [vmem:[%s0 + $0xc4] sm:$0xf]
    %v99 = vld [vmem:[%s0 + $0xc8] sm:$0xf]
    %v100 = vld [vmem:[%s0 + $0xcc] sm:$0xf]
    %v101 = vld [vmem:[%s0 + $0xd0] sm:$0xf]
    %v102 = vld [vmem:[%s0 + $0xd4] sm:$0xf]
    %v103 = vld [vmem:[%s0 + $0xd8] sm:$0xf]
    %v104 = vld [vmem:[%s0 + $0xdc] sm:$0xf]
    %v105 = vld [vmem:[%s0 + $0xe0] sm:$0xf]
    %v106 = vld [vmem:[%s0 + $0xe4] sm:$0xf]
    %v107 = vld [vmem:[%s0 + $0xe8] sm:$0xf]
    %v108 = vld [vmem:[%s0 + $0xec] sm:$0xf]
    %v109 = vld [vmem:[%s0 + $0xf0] sm:$0xf]
    %v110 = vld [vmem:[%s0 + $0xf4] sm:$0xf]
    %v111 = vld [vmem:[%s0 + $0xf8] sm:$0xf]
    %v112 = vld [vmem:[%s0 + $0xfc] sm:$0xf]
    %v113 = vld [vmem:[%s1] sm:$0xf]
    %v114 = vld [vmem:[%s1 + $0x4] sm:$0xf]
    %v115 = vld [vmem:[%s1 + $0x8] sm:$0xf]
    %v116 = vld [vmem:[%s1 + $0xc] sm:$0xf]
    %v117 = vld [vmem:[%s1 + $0x10] sm:$0xf]
    %v118 = vld [vmem:[%s1 + $0x14] sm:$0xf]
    %v119 = vld [vmem:[%s1 + $0x18] sm:$0xf]
    %v120 = vld [vmem:[%s1 + $0x1c] sm:$0xf]
    %v121 = vld [vmem:[%s1 + $0x20] sm:$0xf]
    %v122 = vld [vmem:[%s1 + $0x24] sm:$0xf]
    %v123 = vld [vmem:[%s1 + $0x28] sm:$0xf]
    %v124 = vld [vmem:[%s1 + $0x2c] sm:$0xf]
    %v125 = vld [vmem:[%s1 + $0x30] sm:$0xf]
    %v126 = vld [vmem:[%s1 + $0x34] sm:$0xf]
    %v127 = vld [vmem:[%s1 + $0x38] sm:$0xf]
    %v128 = vld [vmem:[%s1 + $0x3c] sm:$0xf]
    %v129 = vld [vmem:[%s2] sm:$0x1]
    %v131 = vlaneseq
    %v132 = vshrl.u32 %v131, 7
    %v133 = vsub.s32 0, %v132
    %v134 = vrot.slane %v129, %v133
    %v200 = vunpack.c.l.b16 %v49
    %v201 = vunpack.c.l.b16 %v50
    %v202 = vunpack.c.l.b16 %v51
    %v203 = vunpack.c.l.b16 %v52
    %v204 = vunpack.c.l.b16 %v53
    %v205 = vunpack.c.l.b16 %v54
    %v206 = vunpack.c.l.b16 %v55
    %v207 = vunpack.c.l.b16 %v56
    %v208 = vunpack.c.l.b16 %v57
    %v209 = vunpack.c.l.b16 %v58
    %v210 = vunpack.c.l.b16 %v59
    %v211 = vunpack.c.l.b16 %v60
    %v212 = vunpack.c.l.b16 %v61
    %v213 = vunpack.c.l.b16 %v62
    %v214 = vunpack.c.l.b16 %v63
    %v215 = vunpack.c.l.b16 %v64
    %v216 = vunpack.c.l.b16 %v65
    %v217 = vunpack.c.l.b16 %v66
    %v218 = vunpack.c.l.b16 %v67
    %v219 = vunpack.c.l.b16 %v68
    %v220 = vunpack.c.l.b16 %v69
    %v221 = vunpack.c.l.b16 %v70
    %v222 = vunpack.c.l.b16 %v71
    %v223 = vunpack.c.l.b16 %v72
    %v224 = vunpack.c.l.b16 %v73
    %v225 = vunpack.c.l.b16 %v74
    %v226 = vunpack.c.l.b16 %v75
    %v227 = vunpack.c.l.b16 %v76
    %v228 = vunpack.c.l.b16 %v77
    %v229 = vunpack.c.l.b16 %v78
    %v230 = vunpack.c.l.b16 %v79
    %v231 = vunpack.c.l.b16 %v80
    %v232 = vunpack.c.l.b16 %v81
    %v233 = vunpack.c.l.b16 %v82
    %v234 = vunpack.c.l.b16 %v83
    %v235 = vunpack.c.l.b16 %v84
    %v236 = vunpack.c.l.b16 %v85
    %v237 = vunpack.c.l.b16 %v86
    %v238 = vunpack.c.l.b16 %v87
    %v239 = vunpack.c.l.b16 %v88
    %v240 = vunpack.c.l.b16 %v89
    %v241 = vunpack.c.l.b16 %v90
    %v242 = vunpack.c.l.b16 %v91
    %v243 = vunpack.c.l.b16 %v92
    %v244 = vunpack.c.l.b16 %v93
    %v245 = vunpack.c.l.b16 %v94
    %v246 = vunpack.c.l.b16 %v95
    %v247 = vunpack.c.l.b16 %v96
    %v248 = vunpack.c.l.b16 %v97
    %v249 = vunpack.c.l.b16 %v98
    %v250 = vunpack.c.l.b16 %v99
    %v251 = vunpack.c.l.b16 %v100
    %v252 = vunpack.c.l.b16 %v101
    %v253 = vunpack.c.l.b16 %v102
    %v254 = vunpack.c.l.b16 %v103
    %v255 = vunpack.c.l.b16 %v104
    %v256 = vunpack.c.l.b16 %v105
    %v257 = vunpack.c.l.b16 %v106
    %v258 = vunpack.c.l.b16 %v107
    %v259 = vunpack.c.l.b16 %v108
    %v260 = vunpack.c.l.b16 %v109
    %v261 = vunpack.c.l.b16 %v110
    %v262 = vunpack.c.l.b16 %v111
    %v263 = vunpack.c.l.b16 %v112
    %v264 = vpack.c.b16 %v201, %v200
    %v265 = vpack.c.b16 %v203, %v202
    %v266 = vpack.c.b16 %v205, %v204
    %v267 = vpack.c.b16 %v207, %v206
    %v268 = vpack.c.b16 %v209, %v208
    %v269 = vpack.c.b16 %v211, %v210
    %v270 = vpack.c.b16 %v213, %v212
    %v271 = vpack.c.b16 %v215, %v214
    %v272 = vpack.c.b16 %v217, %v216
    %v273 = vpack.c.b16 %v219, %v218
    %v274 = vpack.c.b16 %v221, %v220
    %v275 = vpack.c.b16 %v223, %v222
    %v276 = vpack.c.b16 %v225, %v224
    %v277 = vpack.c.b16 %v227, %v226
    %v278 = vpack.c.b16 %v229, %v228
    %v279 = vpack.c.b16 %v231, %v230
    %v280 = vpack.c.b16 %v233, %v232
    %v281 = vpack.c.b16 %v235, %v234
    %v282 = vpack.c.b16 %v237, %v236
    %v283 = vpack.c.b16 %v239, %v238
    %v284 = vpack.c.b16 %v241, %v240
    %v285 = vpack.c.b16 %v243, %v242
    %v286 = vpack.c.b16 %v245, %v244
    %v287 = vpack.c.b16 %v247, %v246
    %v288 = vpack.c.b16 %v249, %v248
    %v289 = vpack.c.b16 %v251, %v250
    %v290 = vpack.c.b16 %v253, %v252
    %v291 = vpack.c.b16 %v255, %v254
    %v292 = vpack.c.b16 %v257, %v256
    %v293 = vpack.c.b16 %v259, %v258
    %v294 = vpack.c.b16 %v261, %v260
    %v295 = vpack.c.b16 %v263, %v262
    %v344 = vunpack.c.l.b16 %v113
    %v345 = vunpack.c.l.b16 %v114
    %v346 = vunpack.c.l.b16 %v115
    %v347 = vunpack.c.l.b16 %v116
    %v348 = vunpack.c.l.b16 %v117
    %v349 = vunpack.c.l.b16 %v118
    %v350 = vunpack.c.l.b16 %v119
    %v351 = vunpack.c.l.b16 %v120
    %v352 = vunpack.c.l.b16 %v121
    %v353 = vunpack.c.l.b16 %v122
    %v354 = vunpack.c.l.b16 %v123
    %v355 = vunpack.c.l.b16 %v124
    %v356 = vunpack.c.l.b16 %v125
    %v357 = vunpack.c.l.b16 %v126
    %v358 = vunpack.c.l.b16 %v127
    %v359 = vunpack.c.l.b16 %v128
    %v360 = vpack.c.b16 %v345, %v344
    %v361 = vpack.c.b16 %v347, %v346
    %v362 = vpack.c.b16 %v349, %v348
    %v363 = vpack.c.b16 %v351, %v350
    %v364 = vpack.c.b16 %v353, %v352
    %v365 = vpack.c.b16 %v355, %v354
    %v366 = vpack.c.b16 %v357, %v356
    %v367 = vpack.c.b16 %v359, %v358
    %376 = vmatprep.subr.bf16.mxu0 0
    %377 = vmatpush1.bf16.msra.mxu0 %v360
    %378 = vmatprep.subr.bf16.mxu0 0
    %379 = vmatpush1.bf16.msra.mxu0 %v361
    %380 = vmatprep.subr.bf16.mxu0 0
    %381 = vmatpush1.bf16.msra.mxu0 %v362
    %382 = vmatprep.subr.bf16.mxu0 0
    %383 = vmatpush1.bf16.msra.mxu0 %v363
    %384 = vmatprep.subr.bf16.mxu0 0
    %385 = vmatpush1.bf16.msra.mxu0 %v364
    %386 = vmatprep.subr.bf16.mxu0 0
    %387 = vmatpush1.bf16.msra.mxu0 %v365
    %388 = vmatprep.subr.bf16.mxu0 0
    %389 = vmatpush1.bf16.msra.mxu0 %v366
    %390 = vmatprep.subr.bf16.mxu0 0
    %391 = vmatpush1.bf16.msra.mxu0 %v367
    %392 = vmatprep.subr.bf16.mxu0 0
    %393 = vmatpush1.bf16.msra.mxu0 0
    %394 = vmatprep.subr.bf16.mxu0 0
    %395 = vmatpush1.bf16.msra.mxu0 0
    %396 = vmatprep.subr.bf16.mxu0 0
    %397 = vmatpush1.bf16.msra.mxu0 0
    %398 = vmatprep.subr.bf16.mxu0 0
    %399 = vmatpush1.bf16.msra.mxu0 0
    %400 = vmatprep.subr.bf16.mxu0 0
    %401 = vmatpush1.bf16.msra.mxu0 0
    %402 = vmatprep.subr.bf16.mxu0 0
    %403 = vmatpush1.bf16.msra.mxu0 0
    %404 = vmatprep.subr.bf16.mxu0 0
    %405 = vmatpush1.bf16.msra.mxu0 0
    %406 = vmatprep.subr.bf16.mxu0 0
    %407 = vmatpush1.bf16.msra.mxu0 0
    %408 = vmatprep.mubr.bf16.mxu0 0
    %409 = vmatmul.mubr.bf16.gmra.mrb[0].mxu0 %v264
    %v410 = vpop.f32.mrb[0].mxu0
    %v411 = vadd.f32 %v134, %v410
    %v412 = vpop.f32.mrb[0].mxu0
    %v413 = vpop.f32.mrb[0].mxu0
    %v414 = vadd.f32 %v134, %v413
    %v415 = vpop.f32.mrb[0].mxu0
    %416 = vmatprep.mubr.bf16.mxu0 0
    %417 = vmatmul.mubr.bf16.gmra.mrb[0].mxu0 %v265
    %v418 = vpop.f32.mrb[0].mxu0
    %v419 = vadd.f32 %v134, %v418
    %v420 = vpop.f32.mrb[0].mxu0
    %v421 = vpop.f32.mrb[0].mxu0
    %v422 = vadd.f32 %v134, %v421
    %v423 = vpop.f32.mrb[0].mxu0
    %424 = vmatprep.mubr.bf16.mxu0 0
    %425 = vmatmul.mubr.bf16.gmra.mrb[0].mxu0 %v266
    %v426 = vpop.f32.mrb[0].mxu0
    %v427 = vadd.f32 %v134, %v426
    %v428 = vpop.f32.mrb[0].mxu0
    %v429 = vpop.f32.mrb[0].mxu0
    %v430 = vadd.f32 %v134, %v429
    %v431 = vpop.f32.mrb[0].mxu0
    %432 = vmatprep.mubr.bf16.mxu0 0
    %433 = vmatmul.mubr.bf16.gmra.mrb[0].mxu0 %v267
    %v434 = vpop.f32.mrb[0].mxu0
    %v435 = vadd.f32 %v134, %v434
    %v436 = vpop.f32.mrb[0].mxu0
    %v437 = vpop.f32.mrb[0].mxu0
    %v438 = vadd.f32 %v134, %v437
    %v439 = vpop.f32.mrb[0].mxu0
    %440 = vmatprep.mubr.bf16.mxu0 0
    %441 = vmatmul.mubr.bf16.gmra.mrb[0].mxu0 %v268
    %v442 = vpop.f32.mrb[0].mxu0
    %v443 = vadd.f32 %v134, %v442
    %v444 = vpop.f32.mrb[0].mxu0
    %v445 = vpop.f32.mrb[0].mxu0
    %v446 = vadd.f32 %v134, %v445
    %v447 = vpop.f32.mrb[0].mxu0
    %448 = vmatprep.mubr.bf16.mxu0 0
    %449 = vmatmul.mubr.bf16.gmra.mrb[0].mxu0 %v269
    %v450 = vpop.f32.mrb[0].mxu0
    %v451 = vadd.f32 %v134, %v450
    %v452 = vpop.f32.mrb[0].mxu0
    %v453 = vpop.f32.mrb[0].mxu0
    %v454 = vadd.f32 %v134, %v453
    %v455 = vpop.f32.mrb[0].mxu0
    %456 = vmatprep.mubr.bf16.mxu0 0
    %457 = vmatmul.mubr.bf16.gmra.mrb[0].mxu0 %v270
    %v458 = vpop.f32.mrb[0].mxu0
    %v459 = vadd.f32 %v134, %v458
    %v460 = vpop.f32.mrb[0].mxu0
    %v461 = vpop.f32.mrb[0].mxu0
    %v462 = vadd.f32 %v134, %v461
    %v463 = vpop.f32.mrb[0].mxu0
    %464 = vmatprep.mubr.bf16.mxu0 0
    %465 = vmatmul.mubr.bf16.gmra.mrb[0].mxu0 %v271
    %v466 = vpop.f32.mrb[0].mxu0
    %v467 = vadd.f32 %v134, %v466
    %v468 = vpop.f32.mrb[0].mxu0
    %v469 = vpop.f32.mrb[0].mxu0
    %v470 = vadd.f32 %v134, %v469
    %v471 = vpop.f32.mrb[0].mxu0
    %472 = vmatprep.mubr.bf16.mxu0 0
    %473 = vmatmul.mubr.bf16.gmra.mrb[0].mxu0 %v272
    %v474 = vpop.f32.mrb[0].mxu0
    %v475 = vadd.f32 %v134, %v474
    %v476 = vpop.f32.mrb[0].mxu0
    %v477 = vpop.f32.mrb[0].mxu0
    %v478 = vadd.f32 %v134, %v477
    %v479 = vpop.f32.mrb[0].mxu0
    %480 = vmatprep.mubr.bf16.mxu0 0
    %481 = vmatmul.mubr.bf16.gmra.mrb[0].mxu0 %v273
    %v482 = vpop.f32.mrb[0].mxu0
    %v483 = vadd.f32 %v134, %v482
    %v484 = vpop.f32.mrb[0].mxu0
    %v485 = vpop.f32.mrb[0].mxu0
    %v486 = vadd.f32 %v134, %v485
    %v487 = vpop.f32.mrb[0].mxu0
    %488 = vmatprep.mubr.bf16.mxu0 0
    %489 = vmatmul.mubr.bf16.gmra.mrb[0].mxu0 %v274
    %v490 = vpop.f32.mrb[0].mxu0
    %v491 = vadd.f32 %v134, %v490
    %v492 = vpop.f32.mrb[0].mxu0
    %v493 = vpop.f32.mrb[0].mxu0
    %v494 = vadd.f32 %v134, %v493
    %v495 = vpop.f32.mrb[0].mxu0
    %496 = vmatprep.mubr.bf16.mxu0 0
    %497 = vmatmul.mubr.bf16.gmra.mrb[0].mxu0 %v275
    %v498 = vpop.f32.mrb[0].mxu0
    %v499 = vadd.f32 %v134, %v498
    %v500 = vpop.f32.mrb[0].mxu0
    %v501 = vpop.f32.mrb[0].mxu0
    %v502 = vadd.f32 %v134, %v501
    %v503 = vpop.f32.mrb[0].mxu0
    %504 = vmatprep.mubr.bf16.mxu0 0
    %505 = vmatmul.mubr.bf16.gmra.mrb[0].mxu0 %v276
    %v506 = vpop.f32.mrb[0].mxu0
    %v507 = vadd.f32 %v134, %v506
    %v508 = vpop.f32.mrb[0].mxu0
    %v509 = vpop.f32.mrb[0].mxu0
    %v510 = vadd.f32 %v134, %v509
    %v511 = vpop.f32.mrb[0].mxu0
    %512 = vmatprep.mubr.bf16.mxu0 0
    %513 = vmatmul.mubr.bf16.gmra.mrb[0].mxu0 %v277
    %v514 = vpop.f32.mrb[0].mxu0
    %v515 = vadd.f32 %v134, %v514
    %v516 = vpop.f32.mrb[0].mxu0
    %v517 = vpop.f32.mrb[0].mxu0
    %v518 = vadd.f32 %v134, %v517
    %v519 = vpop.f32.mrb[0].mxu0
    %520 = vmatprep.mubr.bf16.mxu0 0
    %521 = vmatmul.mubr.bf16.gmra.mrb[0].mxu0 %v278
    %v522 = vpop.f32.mrb[0].mxu0
    %v523 = vadd.f32 %v134, %v522
    %v524 = vpop.f32.mrb[0].mxu0
    %v525 = vpop.f32.mrb[0].mxu0
    %v526 = vadd.f32 %v134, %v525
    %v527 = vpop.f32.mrb[0].mxu0
    %528 = vmatprep.mubr.bf16.mxu0 0
    %529 = vmatmul.mubr.bf16.gmra.mrb[0].mxu0 %v279
    %v530 = vpop.f32.mrb[0].mxu0
    %v531 = vadd.f32 %v134, %v530
    %v532 = vpop.f32.mrb[0].mxu0
    %v533 = vpop.f32.mrb[0].mxu0
    %v534 = vadd.f32 %v134, %v533
    %v535 = vpop.f32.mrb[0].mxu0
    %536 = vmatprep.mubr.bf16.mxu0 0
    %537 = vmatmul.mubr.bf16.gmra.mrb[0].mxu0 %v280
    %v538 = vpop.f32.mrb[0].mxu0
    %v539 = vadd.f32 %v134, %v538
    %v540 = vpop.f32.mrb[0].mxu0
    %v541 = vpop.f32.mrb[0].mxu0
    %v542 = vadd.f32 %v134, %v541
    %v543 = vpop.f32.mrb[0].mxu0
    %544 = vmatprep.mubr.bf16.mxu0 0
    %545 = vmatmul.mubr.bf16.gmra.mrb[0].mxu0 %v281
    %v546 = vpop.f32.mrb[0].mxu0
    %v547 = vadd.f32 %v134, %v546
    %v548 = vpop.f32.mrb[0].mxu0
    %v549 = vpop.f32.mrb[0].mxu0
    %v550 = vadd.f32 %v134, %v549
    %v551 = vpop.f32.mrb[0].mxu0
    %552 = vmatprep.mubr.bf16.mxu0 0
    %553 = vmatmul.mubr.bf16.gmra.mrb[0].mxu0 %v282
    %v554 = vpop.f32.mrb[0].mxu0
    %v555 = vadd.f32 %v134, %v554
    %v556 = vpop.f32.mrb[0].mxu0
    %v557 = vpop.f32.mrb[0].mxu0
    %v558 = vadd.f32 %v134, %v557
    %v559 = vpop.f32.mrb[0].mxu0
    %560 = vmatprep.mubr.bf16.mxu0 0
    %561 = vmatmul.mubr.bf16.gmra.mrb[0].mxu0 %v283
    %v562 = vpop.f32.mrb[0].mxu0
    %v563 = vadd.f32 %v134, %v562
    %v564 = vpop.f32.mrb[0].mxu0
    %v565 = vpop.f32.mrb[0].mxu0
    %v566 = vadd.f32 %v134, %v565
    %v567 = vpop.f32.mrb[0].mxu0
    %568 = vmatprep.mubr.bf16.mxu0 0
    %569 = vmatmul.mubr.bf16.gmra.mrb[0].mxu0 %v284
    %v570 = vpop.f32.mrb[0].mxu0
    %v571 = vadd.f32 %v134, %v570
    %v572 = vpop.f32.mrb[0].mxu0
    %v573 = vpop.f32.mrb[0].mxu0
    %v574 = vadd.f32 %v134, %v573
    %v575 = vpop.f32.mrb[0].mxu0
    %576 = vmatprep.mubr.bf16.mxu0 0
    %577 = vmatmul.mubr.bf16.gmra.mrb[0].mxu0 %v285
    %v578 = vpop.f32.mrb[0].mxu0
    %v579 = vadd.f32 %v134, %v578
    %v580 = vpop.f32.mrb[0].mxu0
    %v581 = vpop.f32.mrb[0].mxu0
    %v582 = vadd.f32 %v134, %v581
    %v583 = vpop.f32.mrb[0].mxu0
    %584 = vmatprep.mubr.bf16.mxu0 0
    %585 = vmatmul.mubr.bf16.gmra.mrb[0].mxu0 %v286
    %v586 = vpop.f32.mrb[0].mxu0
    %v587 = vadd.f32 %v134, %v586
    %v588 = vpop.f32.mrb[0].mxu0
    %v589 = vpop.f32.mrb[0].mxu0
    %v590 = vadd.f32 %v134, %v589
    %v591 = vpop.f32.mrb[0].mxu0
    %592 = vmatprep.mubr.bf16.mxu0 0
    %593 = vmatmul.mubr.bf16.gmra.mrb[0].mxu0 %v287
    %v594 = vpop.f32.mrb[0].mxu0
    %v595 = vadd.f32 %v134, %v594
    %v596 = vpop.f32.mrb[0].mxu0
    %v597 = vpop.f32.mrb[0].mxu0
    %v598 = vadd.f32 %v134, %v597
    %v599 = vpop.f32.mrb[0].mxu0
    %600 = vmatprep.mubr.bf16.mxu0 0
    %601 = vmatmul.mubr.bf16.gmra.mrb[0].mxu0 %v288
    %v602 = vpop.f32.mrb[0].mxu0
    %v603 = vadd.f32 %v134, %v602
    %v604 = vpop.f32.mrb[0].mxu0
    %v605 = vpop.f32.mrb[0].mxu0
    %v606 = vadd.f32 %v134, %v605
    %v607 = vpop.f32.mrb[0].mxu0
    %608 = vmatprep.mubr.bf16.mxu0 0
    %609 = vmatmul.mubr.bf16.gmra.mrb[0].mxu0 %v289
    %v610 = vpop.f32.mrb[0].mxu0
    %v611 = vadd.f32 %v134, %v610
    %v612 = vpop.f32.mrb[0].mxu0
    %v613 = vpop.f32.mrb[0].mxu0
    %v614 = vadd.f32 %v134, %v613
    %v615 = vpop.f32.mrb[0].mxu0
    %616 = vmatprep.mubr.bf16.mxu0 0
    %617 = vmatmul.mubr.bf16.gmra.mrb[0].mxu0 %v290
    %v618 = vpop.f32.mrb[0].mxu0
    %v619 = vadd.f32 %v134, %v618
    %v620 = vpop.f32.mrb[0].mxu0
    %v621 = vpop.f32.mrb[0].mxu0
    %v622 = vadd.f32 %v134, %v621
    %v623 = vpop.f32.mrb[0].mxu0
    %624 = vmatprep.mubr.bf16.mxu0 0
    %625 = vmatmul.mubr.bf16.gmra.mrb[0].mxu0 %v291
    %v626 = vpop.f32.mrb[0].mxu0
    %v627 = vadd.f32 %v134, %v626
    %v628 = vpop.f32.mrb[0].mxu0
    %v629 = vpop.f32.mrb[0].mxu0
    %v630 = vadd.f32 %v134, %v629
    %v631 = vpop.f32.mrb[0].mxu0
    %632 = vmatprep.mubr.bf16.mxu0 0
    %633 = vmatmul.mubr.bf16.gmra.mrb[0].mxu0 %v292
    %v634 = vpop.f32.mrb[0].mxu0
    %v635 = vadd.f32 %v134, %v634
    %v636 = vpop.f32.mrb[0].mxu0
    %v637 = vpop.f32.mrb[0].mxu0
    %v638 = vadd.f32 %v134, %v637
    %v639 = vpop.f32.mrb[0].mxu0
    %640 = vmatprep.mubr.bf16.mxu0 0
    %641 = vmatmul.mubr.bf16.gmra.mrb[0].mxu0 %v293
    %v642 = vpop.f32.mrb[0].mxu0
    %v643 = vadd.f32 %v134, %v642
    %v644 = vpop.f32.mrb[0].mxu0
    %v645 = vpop.f32.mrb[0].mxu0
    %v646 = vadd.f32 %v134, %v645
    %v647 = vpop.f32.mrb[0].mxu0
    %648 = vmatprep.mubr.bf16.mxu0 0
    %649 = vmatmul.mubr.bf16.gmra.mrb[0].mxu0 %v294
    %v650 = vpop.f32.mrb[0].mxu0
    %v651 = vadd.f32 %v134, %v650
    %v652 = vpop.f32.mrb[0].mxu0
    %v653 = vpop.f32.mrb[0].mxu0
    %v654 = vadd.f32 %v134, %v653
    %v655 = vpop.f32.mrb[0].mxu0
    %656 = vmatprep.mubr.bf16.mxu0 0
    %657 = vmatmul.mubr.bf16.gmra.mrb[0].mxu0 %v295
    %v658 = vpop.f32.mrb[0].mxu0
    %v659 = vadd.f32 %v134, %v658
    %v660 = vpop.f32.mrb[0].mxu0
    %v661 = vpop.f32.mrb[0].mxu0
    %v662 = vadd.f32 %v134, %v661
    %v663 = vpop.f32.mrb[0].mxu0
    %664 = vdwg.mxu0
    %v665 = vadd.f32 %v411, %v414
    %v666 = vadd.f32 %v665, %v419
    %v667 = vadd.f32 %v666, %v422
    %v668 = vadd.f32 %v667, %v427
    %v669 = vadd.f32 %v668, %v430
    %v670 = vadd.f32 %v669, %v435
    %v671 = vadd.f32 %v670, %v438
    %v672 = vadd.f32 %v671, %v443
    %v673 = vadd.f32 %v672, %v446
    %v674 = vadd.f32 %v673, %v451
    %v675 = vadd.f32 %v674, %v454
    %v676 = vadd.f32 %v675, %v459
    %v677 = vadd.f32 %v676, %v462
    %v678 = vadd.f32 %v677, %v467
    %v679 = vadd.f32 %v678, %v470
    %v680 = vadd.f32 %v679, %v475
    %v681 = vadd.f32 %v680, %v478
    %v682 = vadd.f32 %v681, %v483
    %v683 = vadd.f32 %v682, %v486
    %v684 = vadd.f32 %v683, %v491
    %v685 = vadd.f32 %v684, %v494
    %v686 = vadd.f32 %v685, %v499
    %v687 = vadd.f32 %v686, %v502
    %v688 = vadd.f32 %v687, %v507
    %v689 = vadd.f32 %v688, %v510
    %v690 = vadd.f32 %v689, %v515
    %v691 = vadd.f32 %v690, %v518
    %v692 = vadd.f32 %v691, %v523
    %v693 = vadd.f32 %v692, %v526
    %v694 = vadd.f32 %v693, %v531
    %v695 = vadd.f32 %v694, %v534
    %v696 = vadd.f32 %v695, %v539
    %v697 = vadd.f32 %v696, %v542
    %v698 = vadd.f32 %v697, %v547
    %v699 = vadd.f32 %v698, %v550
    %v700 = vadd.f32 %v699, %v555
    %v701 = vadd.f32 %v700, %v558
    %v702 = vadd.f32 %v701, %v563
    %v703 = vadd.f32 %v702, %v566
    %v704 = vadd.f32 %v703, %v571
    %v705 = vadd.f32 %v704, %v574
    %v706 = vadd.f32 %v705, %v579
    %v707 = vadd.f32 %v706, %v582
    %v708 = vadd.f32 %v707, %v587
    %v709 = vadd.f32 %v708, %v590
    %v710 = vadd.f32 %v709, %v595
    %v711 = vadd.f32 %v710, %v598
    %v712 = vadd.f32 %v711, %v603
    %v713 = vadd.f32 %v712, %v606
    %v714 = vadd.f32 %v713, %v611
    %v715 = vadd.f32 %v714, %v614
    %v716 = vadd.f32 %v715, %v619
    %v717 = vadd.f32 %v716, %v622
    %v718 = vadd.f32 %v717, %v627
    %v719 = vadd.f32 %v718, %v630
    %v720 = vadd.f32 %v719, %v635
    %v721 = vadd.f32 %v720, %v638
    %v722 = vadd.f32 %v721, %v643
    %v723 = vadd.f32 %v722, %v646
    %v724 = vadd.f32 %v723, %v651
    %v725 = vadd.f32 %v724, %v654
    %v726 = vadd.f32 %v725, %v659
    %v727 = vadd.f32 %v726, %v662
    %v728 = vrot.slane %v727, 4
    %v729 = vadd.f32 %v727, %v728
    %v730 = vrot.slane %v729, 2
    %v731 = vadd.f32 %v729, %v730
    %v732 = vrot.slane %v731, 1
    %v733 = vadd.f32 %v731, %v732
    %v734 = vrcp.pop 512.0
    %v735 = vmul.f32 %v733, %v734
    %v736 = vmul.f32 %v411, %v411
    %v737 = vmul.f32 %v414, %v414
    %v738 = vmul.f32 %v419, %v419
    %v739 = vmul.f32 %v422, %v422
    %v740 = vmul.f32 %v427, %v427
    %v741 = vmul.f32 %v430, %v430
    %v742 = vmul.f32 %v435, %v435
    %v743 = vmul.f32 %v438, %v438
    %v744 = vmul.f32 %v443, %v443
    %v745 = vmul.f32 %v446, %v446
    %v746 = vmul.f32 %v451, %v451
    %v747 = vmul.f32 %v454, %v454
    %v748 = vmul.f32 %v459, %v459
    %v749 = vmul.f32 %v462, %v462
    %v750 = vmul.f32 %v467, %v467
    %v751 = vmul.f32 %v470, %v470
    %v752 = vmul.f32 %v475, %v475
    %v753 = vmul.f32 %v478, %v478
    %v754 = vmul.f32 %v483, %v483
    %v755 = vmul.f32 %v486, %v486
    %v756 = vmul.f32 %v491, %v491
    %v757 = vmul.f32 %v494, %v494
    %v758 = vmul.f32 %v499, %v499
    %v759 = vmul.f32 %v502, %v502
    %v760 = vmul.f32 %v507, %v507
    %v761 = vmul.f32 %v510, %v510
    %v762 = vmul.f32 %v515, %v515
    %v763 = vmul.f32 %v518, %v518
    %v764 = vmul.f32 %v523, %v523
    %v765 = vmul.f32 %v526, %v526
    %v766 = vmul.f32 %v531, %v531
    %v767 = vmul.f32 %v534, %v534
    %v768 = vmul.f32 %v539, %v539
    %v769 = vmul.f32 %v542, %v542
    %v770 = vmul.f32 %v547, %v547
    %v771 = vmul.f32 %v550, %v550
    %v772 = vmul.f32 %v555, %v555
    %v773 = vmul.f32 %v558, %v558
    %v774 = vmul.f32 %v563, %v563
    %v775 = vmul.f32 %v566, %v566
    %v776 = vmul.f32 %v571, %v571
    %v777 = vmul.f32 %v574, %v574
    %v778 = vmul.f32 %v579, %v579
    %v779 = vmul.f32 %v582, %v582
    %v780 = vmul.f32 %v587, %v587
    %v781 = vmul.f32 %v590, %v590
    %v782 = vmul.f32 %v595, %v595
    %v783 = vmul.f32 %v598, %v598
    %v784 = vmul.f32 %v603, %v603
    %v785 = vmul.f32 %v606, %v606
    %v786 = vmul.f32 %v611, %v611
    %v787 = vmul.f32 %v614, %v614
    %v788 = vmul.f32 %v619, %v619
    %v789 = vmul.f32 %v622, %v622
    %v790 = vmul.f32 %v627, %v627
    %v791 = vmul.f32 %v630, %v630
    %v792 = vmul.f32 %v635, %v635
    %v793 = vmul.f32 %v638, %v638
    %v794 = vmul.f32 %v643, %v643
    %v795 = vmul.f32 %v646, %v646
    %v796 = vmul.f32 %v651, %v651
    %v797 = vmul.f32 %v654, %v654
    %v798 = vmul.f32 %v659, %v659
    %v799 = vmul.f32 %v662, %v662
    %v800 = vadd.f32 %v736, %v737
    %v801 = vadd.f32 %v800, %v738
    %v802 = vadd.f32 %v801, %v739
    %v803 = vadd.f32 %v802, %v740
    %v804 = vadd.f32 %v803, %v741
    %v805 = vadd.f32 %v804, %v742
    %v806 = vadd.f32 %v805, %v743
    %v807 = vadd.f32 %v806, %v744
    %v808 = vadd.f32 %v807, %v745
    %v809 = vadd.f32 %v808, %v746
    %v810 = vadd.f32 %v809, %v747
    %v811 = vadd.f32 %v810, %v748
    %v812 = vadd.f32 %v811, %v749
    %v813 = vadd.f32 %v812, %v750
    %v814 = vadd.f32 %v813, %v751
    %v815 = vadd.f32 %v814, %v752
    %v816 = vadd.f32 %v815, %v753
    %v817 = vadd.f32 %v816, %v754
    %v818 = vadd.f32 %v817, %v755
    %v819 = vadd.f32 %v818, %v756
    %v820 = vadd.f32 %v819, %v757
    %v821 = vadd.f32 %v820, %v758
    %v822 = vadd.f32 %v821, %v759
    %v823 = vadd.f32 %v822, %v760
    %v824 = vadd.f32 %v823, %v761
    %v825 = vadd.f32 %v824, %v762
    %v826 = vadd.f32 %v825, %v763
    %v827 = vadd.f32 %v826, %v764
    %v828 = vadd.f32 %v827, %v765
    %v829 = vadd.f32 %v828, %v766
    %v830 = vadd.f32 %v829, %v767
    %v831 = vadd.f32 %v830, %v768
    %v832 = vadd.f32 %v831, %v769
    %v833 = vadd.f32 %v832, %v770
    %v834 = vadd.f32 %v833, %v771
    %v835 = vadd.f32 %v834, %v772
    %v836 = vadd.f32 %v835, %v773
    %v837 = vadd.f32 %v836, %v774
    %v838 = vadd.f32 %v837, %v775
    %v839 = vadd.f32 %v838, %v776
    %v840 = vadd.f32 %v839, %v777
    %v841 = vadd.f32 %v840, %v778
    %v842 = vadd.f32 %v841, %v779
    %v843 = vadd.f32 %v842, %v780
    %v844 = vadd.f32 %v843, %v781
    %v845 = vadd.f32 %v844, %v782
    %v846 = vadd.f32 %v845, %v783
    %v847 = vadd.f32 %v846, %v784
    %v848 = vadd.f32 %v847, %v785
    %v849 = vadd.f32 %v848, %v786
    %v850 = vadd.f32 %v849, %v787
    %v851 = vadd.f32 %v850, %v788
    %v852 = vadd.f32 %v851, %v789
    %v853 = vadd.f32 %v852, %v790
    %v854 = vadd.f32 %v853, %v791
    %v855 = vadd.f32 %v854, %v792
    %v856 = vadd.f32 %v855, %v793
    %v857 = vadd.f32 %v856, %v794
    %v858 = vadd.f32 %v857, %v795
    %v859 = vadd.f32 %v858, %v796
    %v860 = vadd.f32 %v859, %v797
    %v861 = vadd.f32 %v860, %v798
    %v862 = vadd.f32 %v861, %v799
    %v863 = vrot.slane %v862, 4
    %v864 = vadd.f32 %v862, %v863
    %v865 = vrot.slane %v864, 2
    %v866 = vadd.f32 %v864, %v865
    %v867 = vrot.slane %v866, 1
    %v868 = vadd.f32 %v866, %v867
    %v869 = vmul.f32 %v868, %v734
    %v870 = vmul.f32 %v735, %v735
    %v871 = vsub.f32 %v869, %v870
    %v872 = vmax.f32 %v871, 0.0
    %v873 = vld [vmem:[%s3] sm:$0x1]
    %v874 = vadd.f32 %v872, 1e-05
    %v875 = vrsqrt.pop %v874
    %v876 = vmul.f32 %v873, %v875
    %v878 = vlaneseq
    %v879 = vshrl.u32 %v878, 7
    %v880 = vsub.s32 0, %v879
    %v881 = vrot.slane %v876, %v880
    %v883 = vmul.f32 %v411, %v881
    %v884 = vmul.f32 %v414, %v881
    %v885 = vmul.f32 %v419, %v881
    %v886 = vmul.f32 %v422, %v881
    %v887 = vmul.f32 %v427, %v881
    %v888 = vmul.f32 %v430, %v881
    %v889 = vmul.f32 %v435, %v881
    %v890 = vmul.f32 %v438, %v881
    %v891 = vmul.f32 %v443, %v881
    %v892 = vmul.f32 %v446, %v881
    %v893 = vmul.f32 %v451, %v881
    %v894 = vmul.f32 %v454, %v881
    %v895 = vmul.f32 %v459, %v881
    %v896 = vmul.f32 %v462, %v881
    %v897 = vmul.f32 %v467, %v881
    %v898 = vmul.f32 %v470, %v881
    %v899 = vmul.f32 %v475, %v881
    %v900 = vmul.f32 %v478, %v881
    %v901 = vmul.f32 %v483, %v881
    %v902 = vmul.f32 %v486, %v881
    %v903 = vmul.f32 %v491, %v881
    %v904 = vmul.f32 %v494, %v881
    %v905 = vmul.f32 %v499, %v881
    %v906 = vmul.f32 %v502, %v881
    %v907 = vmul.f32 %v507, %v881
    %v908 = vmul.f32 %v510, %v881
    %v909 = vmul.f32 %v515, %v881
    %v910 = vmul.f32 %v518, %v881
    %v911 = vmul.f32 %v523, %v881
    %v912 = vmul.f32 %v526, %v881
    %v913 = vmul.f32 %v531, %v881
    %v914 = vmul.f32 %v534, %v881
    %v915 = vmul.f32 %v539, %v881
    %v916 = vmul.f32 %v542, %v881
    %v917 = vmul.f32 %v547, %v881
    %v918 = vmul.f32 %v550, %v881
    %v919 = vmul.f32 %v555, %v881
    %v920 = vmul.f32 %v558, %v881
    %v921 = vmul.f32 %v563, %v881
    %v922 = vmul.f32 %v566, %v881
    %v923 = vmul.f32 %v571, %v881
    %v924 = vmul.f32 %v574, %v881
    %v925 = vmul.f32 %v579, %v881
    %v926 = vmul.f32 %v582, %v881
    %v927 = vmul.f32 %v587, %v881
    %v928 = vmul.f32 %v590, %v881
    %v929 = vmul.f32 %v595, %v881
    %v930 = vmul.f32 %v598, %v881
    %v931 = vmul.f32 %v603, %v881
    %v932 = vmul.f32 %v606, %v881
    %v933 = vmul.f32 %v611, %v881
    %v934 = vmul.f32 %v614, %v881
    %v935 = vmul.f32 %v619, %v881
    %v936 = vmul.f32 %v622, %v881
    %v937 = vmul.f32 %v627, %v881
    %v938 = vmul.f32 %v630, %v881
    %v939 = vmul.f32 %v635, %v881
    %v940 = vmul.f32 %v638, %v881
    %v941 = vmul.f32 %v643, %v881
    %v942 = vmul.f32 %v646, %v881
    %v943 = vmul.f32 %v651, %v881
    %v944 = vmul.f32 %v654, %v881
    %v945 = vmul.f32 %v659, %v881
    %v946 = vmul.f32 %v662, %v881
    %v947 = vld [vmem:[%s4] sm:$0x1]
    %v948 = vmul.f32 %v735, %v876
    %v949 = vsub.f32 %v947, %v948
    %v951 = vlaneseq
    %v952 = vshrl.u32 %v951, 7
    %v953 = vsub.s32 0, %v952
    %v954 = vrot.slane %v949, %v953
    %v956 = vadd.f32 %v883, %v954
    %v957 = vadd.f32 %v884, %v954
    %v958 = vadd.f32 %v885, %v954
    %v959 = vadd.f32 %v886, %v954
    %v960 = vadd.f32 %v887, %v954
    %v961 = vadd.f32 %v888, %v954
    %v962 = vadd.f32 %v889, %v954
    %v963 = vadd.f32 %v890, %v954
    %v964 = vadd.f32 %v891, %v954
    %v965 = vadd.f32 %v892, %v954
    %v966 = vadd.f32 %v893, %v954
    %v967 = vadd.f32 %v894, %v954
    %v968 = vadd.f32 %v895, %v954
    %v969 = vadd.f32 %v896, %v954
    %v970 = vadd.f32 %v897, %v954
    %v971 = vadd.f32 %v898, %v954
    %v972 = vadd.f32 %v899, %v954
    %v973 = vadd.f32 %v900, %v954
    %v974 = vadd.f32 %v901, %v954
    %v975 = vadd.f32 %v902, %v954
    %v976 = vadd.f32 %v903, %v954
    %v977 = vadd.f32 %v904, %v954
    %v978 = vadd.f32 %v905, %v954
    %v979 = vadd.f32 %v906, %v954
    %v980 = vadd.f32 %v907, %v954
    %v981 = vadd.f32 %v908, %v954
    %v982 = vadd.f32 %v909, %v954
    %v983 = vadd.f32 %v910, %v954
    %v984 = vadd.f32 %v911, %v954
    %v985 = vadd.f32 %v912, %v954
    %v986 = vadd.f32 %v913, %v954
    %v987 = vadd.f32 %v914, %v954
    %v988 = vadd.f32 %v915, %v954
    %v989 = vadd.f32 %v916, %v954
    %v990 = vadd.f32 %v917, %v954
    %v991 = vadd.f32 %v918, %v954
    %v992 = vadd.f32 %v919, %v954
    %v993 = vadd.f32 %v920, %v954
    %v994 = vadd.f32 %v921, %v954
    %v995 = vadd.f32 %v922, %v954
    %v996 = vadd.f32 %v923, %v954
    %v997 = vadd.f32 %v924, %v954
    %v998 = vadd.f32 %v925, %v954
    %v999 = vadd.f32 %v926, %v954
    %v1000 = vadd.f32 %v927, %v954
    %v1001 = vadd.f32 %v928, %v954
    %v1002 = vadd.f32 %v929, %v954
    %v1003 = vadd.f32 %v930, %v954
    %v1004 = vadd.f32 %v931, %v954
    %v1005 = vadd.f32 %v932, %v954
    %v1006 = vadd.f32 %v933, %v954
    %v1007 = vadd.f32 %v934, %v954
    %v1008 = vadd.f32 %v935, %v954
    %v1009 = vadd.f32 %v936, %v954
    %v1010 = vadd.f32 %v937, %v954
    %v1011 = vadd.f32 %v938, %v954
    %v1012 = vadd.f32 %v939, %v954
    %v1013 = vadd.f32 %v940, %v954
    %v1014 = vadd.f32 %v941, %v954
    %v1015 = vadd.f32 %v942, %v954
    %v1016 = vadd.f32 %v943, %v954
    %v1017 = vadd.f32 %v944, %v954
    %v1018 = vadd.f32 %v945, %v954
    %v1019 = vadd.f32 %v946, %v954
    %1020 = vst [vmem:[#allocation2] sm:$0xff] %v956
    %1021 = vst [vmem:[#allocation2 + $0x8] sm:$0xff] %v957
    %1022 = vst [vmem:[#allocation2 + $0x10] sm:$0xff] %v958
    %1023 = vst [vmem:[#allocation2 + $0x18] sm:$0xff] %v959
    %1024 = vst [vmem:[#allocation2 + $0x20] sm:$0xff] %v960
    %1025 = vst [vmem:[#allocation2 + $0x28] sm:$0xff] %v961
    %1026 = vst [vmem:[#allocation2 + $0x30] sm:$0xff] %v962
    %1027 = vst [vmem:[#allocation2 + $0x38] sm:$0xff] %v963
    %1028 = vst [vmem:[#allocation2 + $0x40] sm:$0xff] %v964
    %1029 = vst [vmem:[#allocation2 + $0x48] sm:$0xff] %v965
    %1030 = vst [vmem:[#allocation2 + $0x50] sm:$0xff] %v966
    %1031 = vst [vmem:[#allocation2 + $0x58] sm:$0xff] %v967
    %1032 = vst [vmem:[#allocation2 + $0x60] sm:$0xff] %v968
    %1033 = vst [vmem:[#allocation2 + $0x68] sm:$0xff] %v969
    %1034 = vst [vmem:[#allocation2 + $0x70] sm:$0xff] %v970
    %1035 = vst [vmem:[#allocation2 + $0x78] sm:$0xff] %v971
    %1036 = vst [vmem:[#allocation2 + $0x80] sm:$0xff] %v972
    %1037 = vst [vmem:[#allocation2 + $0x88] sm:$0xff] %v973
    %1038 = vst [vmem:[#allocation2 + $0x90] sm:$0xff] %v974
    %1039 = vst [vmem:[#allocation2 + $0x98] sm:$0xff] %v975
    %1040 = vst [vmem:[#allocation2 + $0xa0] sm:$0xff] %v976
    %1041 = vst [vmem:[#allocation2 + $0xa8] sm:$0xff] %v977
    %1042 = vst [vmem:[#allocation2 + $0xb0] sm:$0xff] %v978
    %1043 = vst [vmem:[#allocation2 + $0xb8] sm:$0xff] %v979
    %1044 = vst [vmem:[#allocation2 + $0xc0] sm:$0xff] %v980
    %1045 = vst [vmem:[#allocation2 + $0xc8] sm:$0xff] %v981
    %1046 = vst [vmem:[#allocation2 + $0xd0] sm:$0xff] %v982
    %1047 = vst [vmem:[#allocation2 + $0xd8] sm:$0xff] %v983
    %1048 = vst [vmem:[#allocation2 + $0xe0] sm:$0xff] %v984
    %1049 = vst [vmem:[#allocation2 + $0xe8] sm:$0xff] %v985
    %1050 = vst [vmem:[#allocation2 + $0xf0] sm:$0xff] %v986
    %1051 = vst [vmem:[#allocation2 + $0xf8] sm:$0xff] %v987
    %1052 = vst [vmem:[#allocation2 + $0x100] sm:$0xff] %v988
    %1053 = vst [vmem:[#allocation2 + $0x108] sm:$0xff] %v989
    %1054 = vst [vmem:[#allocation2 + $0x110] sm:$0xff] %v990
    %1055 = vst [vmem:[#allocation2 + $0x118] sm:$0xff] %v991
    %1056 = vst [vmem:[#allocation2 + $0x120] sm:$0xff] %v992
    %1057 = vst [vmem:[#allocation2 + $0x128] sm:$0xff] %v993
    %1058 = vst [vmem:[#allocation2 + $0x130] sm:$0xff] %v994
    %1059 = vst [vmem:[#allocation2 + $0x138] sm:$0xff] %v995
    %1060 = vst [vmem:[#allocation2 + $0x140] sm:$0xff] %v996
    %1061 = vst [vmem:[#allocation2 + $0x148] sm:$0xff] %v997
    %1062 = vst [vmem:[#allocation2 + $0x150] sm:$0xff] %v998
    %1063 = vst [vmem:[#allocation2 + $0x158] sm:$0xff] %v999
    %1064 = vst [vmem:[#allocation2 + $0x160] sm:$0xff] %v1000
    %1065 = vst [vmem:[#allocation2 + $0x168] sm:$0xff] %v1001
    %1066 = vst [vmem:[#allocation2 + $0x170] sm:$0xff] %v1002
    %1067 = vst [vmem:[#allocation2 + $0x178] sm:$0xff] %v1003
    %1068 = vst [vmem:[#allocation2 + $0x180] sm:$0xff] %v1004
    %1069 = vst [vmem:[#allocation2 + $0x188] sm:$0xff] %v1005
    %1070 = vst [vmem:[#allocation2 + $0x190] sm:$0xff] %v1006
    %1071 = vst [vmem:[#allocation2 + $0x198] sm:$0xff] %v1007
    %1072 = vst [vmem:[#allocation2 + $0x1a0] sm:$0xff] %v1008
    %1073 = vst [vmem:[#allocation2 + $0x1a8] sm:$0xff] %v1009
    %1074 = vst [vmem:[#allocation2 + $0x1b0] sm:$0xff] %v1010
    %1075 = vst [vmem:[#allocation2 + $0x1b8] sm:$0xff] %v1011
    %1076 = vst [vmem:[#allocation2 + $0x1c0] sm:$0xff] %v1012
    %1077 = vst [vmem:[#allocation2 + $0x1c8] sm:$0xff] %v1013
    %1078 = vst [vmem:[#allocation2 + $0x1d0] sm:$0xff] %v1014
    %1079 = vst [vmem:[#allocation2 + $0x1d8] sm:$0xff] %v1015
    %1080 = vst [vmem:[#allocation2 + $0x1e0] sm:$0xff] %v1016
    %1081 = vst [vmem:[#allocation2 + $0x1e8] sm:$0xff] %v1017
    %1082 = vst [vmem:[#allocation2 + $0x1f0] sm:$0xff] %v1018
    %1083 = vst [vmem:[#allocation2 + $0x1f8] sm:$0xff] %v1019
    %1084 = vst [vmem:[#allocation2 + $0x200] sm:$0xff] 0.0
    %1085 = vst [vmem:[#allocation2 + $0x208] sm:$0xff] 0.0
    %1086 = vst [vmem:[#allocation2 + $0x210] sm:$0xff] 0.0
    %v1087 = vld [vmem:[#allocation2] sm:$0xff]
    %v1088 = vld [vmem:[#allocation2 + $0x8] sm:$0xff]
    %v1089 = vld [vmem:[#allocation2 + $0x10] sm:$0xff]
    %v1090 = vld [vmem:[#allocation2 + $0x18] sm:$0xff]
    %v1091 = vld [vmem:[#allocation2 + $0x20] sm:$0xff]
    %v1092 = vld [vmem:[#allocation2 + $0x28] sm:$0xff]
    %v1093 = vld [vmem:[#allocation2 + $0x30] sm:$0xff]
    %v1094 = vld [vmem:[#allocation2 + $0x38] sm:$0xff]
    %v1095 = vld [vmem:[#allocation2 + $0x40] sm:$0xff]
    %v1096 = vld [vmem:[#allocation2 + $0x48] sm:$0xff]
    %v1097 = vld [vmem:[#allocation2 + $0x50] sm:$0xff]
    %v1098 = vld [vmem:[#allocation2 + $0x58] sm:$0xff]
    %v1099 = vld [vmem:[#allocation2 + $0x60] sm:$0xff]
    %v1100 = vld [vmem:[#allocation2 + $0x68] sm:$0xff]
    %v1101 = vld [vmem:[#allocation2 + $0x70] sm:$0xff]
    %v1102 = vld [vmem:[#allocation2 + $0x78] sm:$0xff]
    %v1103 = vld [vmem:[#allocation2 + $0x80] sm:$0xff]
    %v1104 = vld [vmem:[#allocation2 + $0x88] sm:$0xff]
    %v1105 = vld [vmem:[#allocation2 + $0x90] sm:$0xff]
    %v1106 = vld [vmem:[#allocation2 + $0x98] sm:$0xff]
    %v1107 = vld [vmem:[#allocation2 + $0xa0] sm:$0xff]
    %v1108 = vld [vmem:[#allocation2 + $0xa8] sm:$0xff]
    %v1109 = vld [vmem:[#allocation2 + $0xb0] sm:$0xff]
    %v1110 = vld [vmem:[#allocation2 + $0xb8] sm:$0xff]
    %v1111 = vld [vmem:[#allocation2 + $0xc0] sm:$0xff]
    %v1112 = vld [vmem:[#allocation2 + $0xc8] sm:$0xff]
    %v1113 = vld [vmem:[#allocation2 + $0xd0] sm:$0xff]
    %v1114 = vld [vmem:[#allocation2 + $0xd8] sm:$0xff]
    %v1115 = vld [vmem:[#allocation2 + $0xe0] sm:$0xff]
    %v1116 = vld [vmem:[#allocation2 + $0xe8] sm:$0xff]
    %v1117 = vld [vmem:[#allocation2 + $0xf0] sm:$0xff]
    %v1118 = vld [vmem:[#allocation2 + $0xf8] sm:$0xff]
    %v1119 = vld [vmem:[#allocation2 + $0x100] sm:$0xff]
    %v1120 = vld [vmem:[#allocation2 + $0x108] sm:$0xff]
    %v1121 = vld [vmem:[#allocation2 + $0x110] sm:$0xff]
    %v1122 = vld [vmem:[#allocation2 + $0x118] sm:$0xff]
    %v1123 = vld [vmem:[#allocation2 + $0x120] sm:$0xff]
    %v1124 = vld [vmem:[#allocation2 + $0x128] sm:$0xff]
    %v1125 = vld [vmem:[#allocation2 + $0x130] sm:$0xff]
    %v1126 = vld [vmem:[#allocation2 + $0x138] sm:$0xff]
    %v1127 = vld [vmem:[#allocation2 + $0x140] sm:$0xff]
    %v1128 = vld [vmem:[#allocation2 + $0x148] sm:$0xff]
    %v1129 = vld [vmem:[#allocation2 + $0x150] sm:$0xff]
    %v1130 = vld [vmem:[#allocation2 + $0x158] sm:$0xff]
    %v1131 = vld [vmem:[#allocation2 + $0x160] sm:$0xff]
    %v1132 = vld [vmem:[#allocation2 + $0x168] sm:$0xff]
    %v1133 = vld [vmem:[#allocation2 + $0x170] sm:$0xff]
    %v1134 = vld [vmem:[#allocation2 + $0x178] sm:$0xff]
    %v1135 = vld [vmem:[#allocation2 + $0x180] sm:$0xff]
    %v1136 = vld [vmem:[#allocation2 + $0x188] sm:$0xff]
    %v1137 = vld [vmem:[#allocation2 + $0x190] sm:$0xff]
    %v1138 = vld [vmem:[#allocation2 + $0x198] sm:$0xff]
    %v1139 = vld [vmem:[#allocation2 + $0x1a0] sm:$0xff]
    %v1140 = vld [vmem:[#allocation2 + $0x1a8] sm:$0xff]
    %v1141 = vld [vmem:[#allocation2 + $0x1b0] sm:$0xff]
    %v1142 = vld [vmem:[#allocation2 + $0x1b8] sm:$0xff]
    %v1143 = vld [vmem:[#allocation2 + $0x1c0] sm:$0xff]
    %v1144 = vld [vmem:[#allocation2 + $0x1c8] sm:$0xff]
    %v1145 = vld [vmem:[#allocation2 + $0x1d0] sm:$0xff]
    %v1146 = vld [vmem:[#allocation2 + $0x1d8] sm:$0xff]
    %v1147 = vld [vmem:[#allocation2 + $0x1e0] sm:$0xff]
    %v1148 = vld [vmem:[#allocation2 + $0x1e8] sm:$0xff]
    %v1149 = vld [vmem:[#allocation2 + $0x1f0] sm:$0xff]
    %v1150 = vld [vmem:[#allocation2 + $0x1f8] sm:$0xff]
    %v1151 = vld [vmem:[#allocation2 + $0x1] sm:$0xff]
    %v1152 = vld [vmem:[#allocation2 + $0x9] sm:$0xff]
    %v1153 = vld [vmem:[#allocation2 + $0x11] sm:$0xff]
    %v1154 = vld [vmem:[#allocation2 + $0x19] sm:$0xff]
    %v1155 = vld [vmem:[#allocation2 + $0x21] sm:$0xff]
    %v1156 = vld [vmem:[#allocation2 + $0x29] sm:$0xff]
    %v1157 = vld [vmem:[#allocation2 + $0x31] sm:$0xff]
    %v1158 = vld [vmem:[#allocation2 + $0x39] sm:$0xff]
    %v1159 = vld [vmem:[#allocation2 + $0x41] sm:$0xff]
    %v1160 = vld [vmem:[#allocation2 + $0x49] sm:$0xff]
    %v1161 = vld [vmem:[#allocation2 + $0x51] sm:$0xff]
    %v1162 = vld [vmem:[#allocation2 + $0x59] sm:$0xff]
    %v1163 = vld [vmem:[#allocation2 + $0x61] sm:$0xff]
    %v1164 = vld [vmem:[#allocation2 + $0x69] sm:$0xff]
    %v1165 = vld [vmem:[#allocation2 + $0x71] sm:$0xff]
    %v1166 = vld [vmem:[#allocation2 + $0x79] sm:$0xff]
    %v1167 = vld [vmem:[#allocation2 + $0x81] sm:$0xff]
    %v1168 = vld [vmem:[#allocation2 + $0x89] sm:$0xff]
    %v1169 = vld [vmem:[#allocation2 + $0x91] sm:$0xff]
    %v1170 = vld [vmem:[#allocation2 + $0x99] sm:$0xff]
    %v1171 = vld [vmem:[#allocation2 + $0xa1] sm:$0xff]
    %v1172 = vld [vmem:[#allocation2 + $0xa9] sm:$0xff]
    %v1173 = vld [vmem:[#allocation2 + $0xb1] sm:$0xff]
    %v1174 = vld [vmem:[#allocation2 + $0xb9] sm:$0xff]
    %v1175 = vld [vmem:[#allocation2 + $0xc1] sm:$0xff]
    %v1176 = vld [vmem:[#allocation2 + $0xc9] sm:$0xff]
    %v1177 = vld [vmem:[#allocation2 + $0xd1] sm:$0xff]
    %v1178 = vld [vmem:[#allocation2 + $0xd9] sm:$0xff]
    %v1179 = vld [vmem:[#allocation2 + $0xe1] sm:$0xff]
    %v1180 = vld [vmem:[#allocation2 + $0xe9] sm:$0xff]
    %v1181 = vld [vmem:[#allocation2 + $0xf1] sm:$0xff]
    %v1182 = vld [vmem:[#allocation2 + $0xf9] sm:$0xff]
    %v1183 = vld [vmem:[#allocation2 + $0x101] sm:$0xff]
    %v1184 = vld [vmem:[#allocation2 + $0x109] sm:$0xff]
    %v1185 = vld [vmem:[#allocation2 + $0x111] sm:$0xff]
    %v1186 = vld [vmem:[#allocation2 + $0x119] sm:$0xff]
    %v1187 = vld [vmem:[#allocation2 + $0x121] sm:$0xff]
    %v1188 = vld [vmem:[#allocation2 + $0x129] sm:$0xff]
    %v1189 = vld [vmem:[#allocation2 + $0x131] sm:$0xff]
    %v1190 = vld [vmem:[#allocation2 + $0x139] sm:$0xff]
    %v1191 = vld [vmem:[#allocation2 + $0x141] sm:$0xff]
    %v1192 = vld [vmem:[#allocation2 + $0x149] sm:$0xff]
    %v1193 = vld [vmem:[#allocation2 + $0x151] sm:$0xff]
    %v1194 = vld [vmem:[#allocation2 + $0x159] sm:$0xff]
    %v1195 = vld [vmem:[#allocation2 + $0x161] sm:$0xff]
    %v1196 = vld [vmem:[#allocation2 + $0x169] sm:$0xff]
    %v1197 = vld [vmem:[#allocation2 + $0x171] sm:$0xff]
    %v1198 = vld [vmem:[#allocation2 + $0x179] sm:$0xff]
    %v1199 = vld [vmem:[#allocation2 + $0x181] sm:$0xff]
    %v1200 = vld [vmem:[#allocation2 + $0x189] sm:$0xff]
    %v1201 = vld [vmem:[#allocation2 + $0x191] sm:$0xff]
    %v1202 = vld [vmem:[#allocation2 + $0x199] sm:$0xff]
    %v1203 = vld [vmem:[#allocation2 + $0x1a1] sm:$0xff]
    %v1204 = vld [vmem:[#allocation2 + $0x1a9] sm:$0xff]
    %v1205 = vld [vmem:[#allocation2 + $0x1b1] sm:$0xff]
    %v1206 = vld [vmem:[#allocation2 + $0x1b9] sm:$0xff]
    %v1207 = vld [vmem:[#allocation2 + $0x1c1] sm:$0xff]
    %v1208 = vld [vmem:[#allocation2 + $0x1c9] sm:$0xff]
    %v1209 = vld [vmem:[#allocation2 + $0x1d1] sm:$0xff]
    %v1210 = vld [vmem:[#allocation2 + $0x1d9] sm:$0xff]
    %v1211 = vld [vmem:[#allocation2 + $0x1e1] sm:$0xff]
    %v1212 = vld [vmem:[#allocation2 + $0x1e9] sm:$0xff]
    %v1213 = vld [vmem:[#allocation2 + $0x1f1] sm:$0xff]
    %v1214 = vld [vmem:[#allocation2 + $0x1f9] sm:$0xff]
    %v1215 = vmax.f32 %v1087, %v1151
    %v1216 = vmax.f32 %v1088, %v1152
    %v1217 = vmax.f32 %v1089, %v1153
    %v1218 = vmax.f32 %v1090, %v1154
    %v1219 = vmax.f32 %v1091, %v1155
    %v1220 = vmax.f32 %v1092, %v1156
    %v1221 = vmax.f32 %v1093, %v1157
    %v1222 = vmax.f32 %v1094, %v1158
    %v1223 = vmax.f32 %v1095, %v1159
    %v1224 = vmax.f32 %v1096, %v1160
    %v1225 = vmax.f32 %v1097, %v1161
    %v1226 = vmax.f32 %v1098, %v1162
    %v1227 = vmax.f32 %v1099, %v1163
    %v1228 = vmax.f32 %v1100, %v1164
    %v1229 = vmax.f32 %v1101, %v1165
    %v1230 = vmax.f32 %v1102, %v1166
    %v1231 = vmax.f32 %v1103, %v1167
    %v1232 = vmax.f32 %v1104, %v1168
    %v1233 = vmax.f32 %v1105, %v1169
    %v1234 = vmax.f32 %v1106, %v1170
    %v1235 = vmax.f32 %v1107, %v1171
    %v1236 = vmax.f32 %v1108, %v1172
    %v1237 = vmax.f32 %v1109, %v1173
    %v1238 = vmax.f32 %v1110, %v1174
    %v1239 = vmax.f32 %v1111, %v1175
    %v1240 = vmax.f32 %v1112, %v1176
    %v1241 = vmax.f32 %v1113, %v1177
    %v1242 = vmax.f32 %v1114, %v1178
    %v1243 = vmax.f32 %v1115, %v1179
    %v1244 = vmax.f32 %v1116, %v1180
    %v1245 = vmax.f32 %v1117, %v1181
    %v1246 = vmax.f32 %v1118, %v1182
    %v1247 = vmax.f32 %v1119, %v1183
    %v1248 = vmax.f32 %v1120, %v1184
    %v1249 = vmax.f32 %v1121, %v1185
    %v1250 = vmax.f32 %v1122, %v1186
    %v1251 = vmax.f32 %v1123, %v1187
    %v1252 = vmax.f32 %v1124, %v1188
    %v1253 = vmax.f32 %v1125, %v1189
    %v1254 = vmax.f32 %v1126, %v1190
    %v1255 = vmax.f32 %v1127, %v1191
    %v1256 = vmax.f32 %v1128, %v1192
    %v1257 = vmax.f32 %v1129, %v1193
    %v1258 = vmax.f32 %v1130, %v1194
    %v1259 = vmax.f32 %v1131, %v1195
    %v1260 = vmax.f32 %v1132, %v1196
    %v1261 = vmax.f32 %v1133, %v1197
    %v1262 = vmax.f32 %v1134, %v1198
    %v1263 = vmax.f32 %v1135, %v1199
    %v1264 = vmax.f32 %v1136, %v1200
    %v1265 = vmax.f32 %v1137, %v1201
    %v1266 = vmax.f32 %v1138, %v1202
    %v1267 = vmax.f32 %v1139, %v1203
    %v1268 = vmax.f32 %v1140, %v1204
    %v1269 = vmax.f32 %v1141, %v1205
    %v1270 = vmax.f32 %v1142, %v1206
    %v1271 = vmax.f32 %v1143, %v1207
    %v1272 = vmax.f32 %v1144, %v1208
    %v1273 = vmax.f32 %v1145, %v1209
    %v1274 = vmax.f32 %v1146, %v1210
    %v1275 = vmax.f32 %v1147, %v1211
    %v1276 = vmax.f32 %v1148, %v1212
    %v1277 = vmax.f32 %v1149, %v1213
    %v1278 = vmax.f32 %v1150, %v1214
    %v1279 = vld [vmem:[#allocation2 + $0x200] sm:$0xff]
    %v1280 = vld [vmem:[#allocation2 + $0x208] sm:$0xff]
    %v1281 = vmax.f32 %v1215, %v1089
    %v1282 = vmax.f32 %v1216, %v1090
    %v1283 = vmax.f32 %v1217, %v1091
    %v1284 = vmax.f32 %v1218, %v1092
    %v1285 = vmax.f32 %v1219, %v1093
    %v1286 = vmax.f32 %v1220, %v1094
    %v1287 = vmax.f32 %v1221, %v1095
    %v1288 = vmax.f32 %v1222, %v1096
    %v1289 = vmax.f32 %v1223, %v1097
    %v1290 = vmax.f32 %v1224, %v1098
    %v1291 = vmax.f32 %v1225, %v1099
    %v1292 = vmax.f32 %v1226, %v1100
    %v1293 = vmax.f32 %v1227, %v1101
    %v1294 = vmax.f32 %v1228, %v1102
    %v1295 = vmax.f32 %v1229, %v1103
    %v1296 = vmax.f32 %v1230, %v1104
    %v1297 = vmax.f32 %v1231, %v1105
    %v1298 = vmax.f32 %v1232, %v1106
    %v1299 = vmax.f32 %v1233, %v1107
    %v1300 = vmax.f32 %v1234, %v1108
    %v1301 = vmax.f32 %v1235, %v1109
    %v1302 = vmax.f32 %v1236, %v1110
    %v1303 = vmax.f32 %v1237, %v1111
    %v1304 = vmax.f32 %v1238, %v1112
    %v1305 = vmax.f32 %v1239, %v1113
    %v1306 = vmax.f32 %v1240, %v1114
    %v1307 = vmax.f32 %v1241, %v1115
    %v1308 = vmax.f32 %v1242, %v1116
    %v1309 = vmax.f32 %v1243, %v1117
    %v1310 = vmax.f32 %v1244, %v1118
    %v1311 = vmax.f32 %v1245, %v1119
    %v1312 = vmax.f32 %v1246, %v1120
    %v1313 = vmax.f32 %v1247, %v1121
    %v1314 = vmax.f32 %v1248, %v1122
    %v1315 = vmax.f32 %v1249, %v1123
    %v1316 = vmax.f32 %v1250, %v1124
    %v1317 = vmax.f32 %v1251, %v1125
    %v1318 = vmax.f32 %v1252, %v1126
    %v1319 = vmax.f32 %v1253, %v1127
    %v1320 = vmax.f32 %v1254, %v1128
    %v1321 = vmax.f32 %v1255, %v1129
    %v1322 = vmax.f32 %v1256, %v1130
    %v1323 = vmax.f32 %v1257, %v1131
    %v1324 = vmax.f32 %v1258, %v1132
    %v1325 = vmax.f32 %v1259, %v1133
    %v1326 = vmax.f32 %v1260, %v1134
    %v1327 = vmax.f32 %v1261, %v1135
    %v1328 = vmax.f32 %v1262, %v1136
    %v1329 = vmax.f32 %v1263, %v1137
    %v1330 = vmax.f32 %v1264, %v1138
    %v1331 = vmax.f32 %v1265, %v1139
    %v1332 = vmax.f32 %v1266, %v1140
    %v1333 = vmax.f32 %v1267, %v1141
    %v1334 = vmax.f32 %v1268, %v1142
    %v1335 = vmax.f32 %v1269, %v1143
    %v1336 = vmax.f32 %v1270, %v1144
    %v1337 = vmax.f32 %v1271, %v1145
    %v1338 = vmax.f32 %v1272, %v1146
    %v1339 = vmax.f32 %v1273, %v1147
    %v1340 = vmax.f32 %v1274, %v1148
    %v1341 = vmax.f32 %v1275, %v1149
    %v1342 = vmax.f32 %v1276, %v1150
    %v1343 = vmax.f32 %v1277, %v1279
    %v1344 = vmax.f32 %v1278, %v1280
    %v1345 = vld [vmem:[#allocation2 + $0x201] sm:$0xff]
    %v1346 = vld [vmem:[#allocation2 + $0x209] sm:$0xff]
    %v1347 = vmax.f32 %v1281, %v1153
    %v1348 = vmax.f32 %v1282, %v1154
    %v1349 = vmax.f32 %v1283, %v1155
    %v1350 = vmax.f32 %v1284, %v1156
    %v1351 = vmax.f32 %v1285, %v1157
    %v1352 = vmax.f32 %v1286, %v1158
    %v1353 = vmax.f32 %v1287, %v1159
    %v1354 = vmax.f32 %v1288, %v1160
    %v1355 = vmax.f32 %v1289, %v1161
    %v1356 = vmax.f32 %v1290, %v1162
    %v1357 = vmax.f32 %v1291, %v1163
    %v1358 = vmax.f32 %v1292, %v1164
    %v1359 = vmax.f32 %v1293, %v1165
    %v1360 = vmax.f32 %v1294, %v1166
    %v1361 = vmax.f32 %v1295, %v1167
    %v1362 = vmax.f32 %v1296, %v1168
    %v1363 = vmax.f32 %v1297, %v1169
    %v1364 = vmax.f32 %v1298, %v1170
    %v1365 = vmax.f32 %v1299, %v1171
    %v1366 = vmax.f32 %v1300, %v1172
    %v1367 = vmax.f32 %v1301, %v1173
    %v1368 = vmax.f32 %v1302, %v1174
    %v1369 = vmax.f32 %v1303, %v1175
    %v1370 = vmax.f32 %v1304, %v1176
    %v1371 = vmax.f32 %v1305, %v1177
    %v1372 = vmax.f32 %v1306, %v1178
    %v1373 = vmax.f32 %v1307, %v1179
    %v1374 = vmax.f32 %v1308, %v1180
    %v1375 = vmax.f32 %v1309, %v1181
    %v1376 = vmax.f32 %v1310, %v1182
    %v1377 = vmax.f32 %v1311, %v1183
    %v1378 = vmax.f32 %v1312, %v1184
    %v1379 = vmax.f32 %v1313, %v1185
    %v1380 = vmax.f32 %v1314, %v1186
    %v1381 = vmax.f32 %v1315, %v1187
    %v1382 = vmax.f32 %v1316, %v1188
    %v1383 = vmax.f32 %v1317, %v1189
    %v1384 = vmax.f32 %v1318, %v1190
    %v1385 = vmax.f32 %v1319, %v1191
    %v1386 = vmax.f32 %v1320, %v1192
    %v1387 = vmax.f32 %v1321, %v1193
    %v1388 = vmax.f32 %v1322, %v1194
    %v1389 = vmax.f32 %v1323, %v1195
    %v1390 = vmax.f32 %v1324, %v1196
    %v1391 = vmax.f32 %v1325, %v1197
    %v1392 = vmax.f32 %v1326, %v1198
    %v1393 = vmax.f32 %v1327, %v1199
    %v1394 = vmax.f32 %v1328, %v1200
    %v1395 = vmax.f32 %v1329, %v1201
    %v1396 = vmax.f32 %v1330, %v1202
    %v1397 = vmax.f32 %v1331, %v1203
    %v1398 = vmax.f32 %v1332, %v1204
    %v1399 = vmax.f32 %v1333, %v1205
    %v1400 = vmax.f32 %v1334, %v1206
    %v1401 = vmax.f32 %v1335, %v1207
    %v1402 = vmax.f32 %v1336, %v1208
    %v1403 = vmax.f32 %v1337, %v1209
    %v1404 = vmax.f32 %v1338, %v1210
    %v1405 = vmax.f32 %v1339, %v1211
    %v1406 = vmax.f32 %v1340, %v1212
    %v1407 = vmax.f32 %v1341, %v1213
    %v1408 = vmax.f32 %v1342, %v1214
    %v1409 = vmax.f32 %v1343, %v1345
    %v1410 = vmax.f32 %v1344, %v1346
    %v1411 = vmax.f32 %v1347, 0.0
    %v1412 = vmax.f32 %v1348, 0.0
    %v1413 = vmax.f32 %v1349, 0.0
    %v1414 = vmax.f32 %v1350, 0.0
    %v1415 = vmax.f32 %v1351, 0.0
    %v1416 = vmax.f32 %v1352, 0.0
    %v1417 = vmax.f32 %v1353, 0.0
    %v1418 = vmax.f32 %v1354, 0.0
    %v1419 = vmax.f32 %v1355, 0.0
    %v1420 = vmax.f32 %v1356, 0.0
    %v1421 = vmax.f32 %v1357, 0.0
    %v1422 = vmax.f32 %v1358, 0.0
    %v1423 = vmax.f32 %v1359, 0.0
    %v1424 = vmax.f32 %v1360, 0.0
    %v1425 = vmax.f32 %v1361, 0.0
    %v1426 = vmax.f32 %v1362, 0.0
    %v1427 = vmax.f32 %v1363, 0.0
    %v1428 = vmax.f32 %v1364, 0.0
    %v1429 = vmax.f32 %v1365, 0.0
    %v1430 = vmax.f32 %v1366, 0.0
    %v1431 = vmax.f32 %v1367, 0.0
    %v1432 = vmax.f32 %v1368, 0.0
    %v1433 = vmax.f32 %v1369, 0.0
    %v1434 = vmax.f32 %v1370, 0.0
    %v1435 = vmax.f32 %v1371, 0.0
    %v1436 = vmax.f32 %v1372, 0.0
    %v1437 = vmax.f32 %v1373, 0.0
    %v1438 = vmax.f32 %v1374, 0.0
    %v1439 = vmax.f32 %v1375, 0.0
    %v1440 = vmax.f32 %v1376, 0.0
    %v1441 = vmax.f32 %v1377, 0.0
    %v1442 = vmax.f32 %v1378, 0.0
    %v1443 = vmax.f32 %v1379, 0.0
    %v1444 = vmax.f32 %v1380, 0.0
    %v1445 = vmax.f32 %v1381, 0.0
    %v1446 = vmax.f32 %v1382, 0.0
    %v1447 = vmax.f32 %v1383, 0.0
    %v1448 = vmax.f32 %v1384, 0.0
    %v1449 = vmax.f32 %v1385, 0.0
    %v1450 = vmax.f32 %v1386, 0.0
    %v1451 = vmax.f32 %v1387, 0.0
    %v1452 = vmax.f32 %v1388, 0.0
    %v1453 = vmax.f32 %v1389, 0.0
    %v1454 = vmax.f32 %v1390, 0.0
    %v1455 = vmax.f32 %v1391, 0.0
    %v1456 = vmax.f32 %v1392, 0.0
    %v1457 = vmax.f32 %v1393, 0.0
    %v1458 = vmax.f32 %v1394, 0.0
    %v1459 = vmax.f32 %v1395, 0.0
    %v1460 = vmax.f32 %v1396, 0.0
    %v1461 = vmax.f32 %v1397, 0.0
    %v1462 = vmax.f32 %v1398, 0.0
    %v1463 = vmax.f32 %v1399, 0.0
    %v1464 = vmax.f32 %v1400, 0.0
    %v1465 = vmax.f32 %v1401, 0.0
    %v1466 = vmax.f32 %v1402, 0.0
    %v1467 = vmax.f32 %v1403, 0.0
    %v1468 = vmax.f32 %v1404, 0.0
    %v1469 = vmax.f32 %v1405, 0.0
    %v1470 = vmax.f32 %v1406, 0.0
    %v1471 = vmax.f32 %v1407, 0.0
    %v1472 = vmax.f32 %v1408, 0.0
    %v1473 = vmax.f32 %v1409, 0.0
    %v1474 = vmax.f32 %v1410, 0.0
    %v1475 = vld [vmem:[%s10] sm:$0xff]
    %v1476 = vld [vmem:[%s10 + $0x8] sm:$0xff]
    %v1477 = vld [vmem:[%s10 + $0x10] sm:$0xff]
    %v1478 = vld [vmem:[%s10 + $0x18] sm:$0xff]
    %v1479 = vld [vmem:[%s10 + $0x20] sm:$0xff]
    %v1480 = vld [vmem:[%s10 + $0x28] sm:$0xff]
    %v1481 = vld [vmem:[%s10 + $0x30] sm:$0xff]
    %v1482 = vld [vmem:[%s10 + $0x38] sm:$0xff]
    %v1483 = vld [vmem:[%s10 + $0x40] sm:$0xff]
    %v1484 = vld [vmem:[%s10 + $0x48] sm:$0xff]
    %v1485 = vld [vmem:[%s10 + $0x50] sm:$0xff]
    %v1486 = vld [vmem:[%s10 + $0x58] sm:$0xff]
    %v1487 = vld [vmem:[%s10 + $0x60] sm:$0xff]
    %v1488 = vld [vmem:[%s10 + $0x68] sm:$0xff]
    %v1489 = vld [vmem:[%s10 + $0x70] sm:$0xff]
    %v1490 = vld [vmem:[%s10 + $0x78] sm:$0xff]
    %v1491 = vld [vmem:[%s10 + $0x80] sm:$0xff]
    %v1492 = vld [vmem:[%s10 + $0x88] sm:$0xff]
    %v1493 = vld [vmem:[%s10 + $0x90] sm:$0xff]
    %v1494 = vld [vmem:[%s10 + $0x98] sm:$0xff]
    %v1495 = vld [vmem:[%s10 + $0xa0] sm:$0xff]
    %v1496 = vld [vmem:[%s10 + $0xa8] sm:$0xff]
    %v1497 = vld [vmem:[%s10 + $0xb0] sm:$0xff]
    %v1498 = vld [vmem:[%s10 + $0xb8] sm:$0xff]
    %v1499 = vld [vmem:[%s10 + $0xc0] sm:$0xff]
    %v1500 = vld [vmem:[%s10 + $0xc8] sm:$0xff]
    %v1501 = vld [vmem:[%s10 + $0xd0] sm:$0xff]
    %v1502 = vld [vmem:[%s10 + $0xd8] sm:$0xff]
    %v1503 = vld [vmem:[%s10 + $0xe0] sm:$0xff]
    %v1504 = vld [vmem:[%s10 + $0xe8] sm:$0xff]
    %v1505 = vld [vmem:[%s10 + $0xf0] sm:$0xff]
    %v1506 = vld [vmem:[%s10 + $0xf8] sm:$0xff]
    %v1507 = vpack.c.bf16 %v1412, %v1411
    %v1508 = vpack.c.bf16 %v1414, %v1413
    %v1509 = vpack.c.bf16 %v1416, %v1415
    %v1510 = vpack.c.bf16 %v1418, %v1417
    %v1511 = vpack.c.bf16 %v1420, %v1419
    %v1512 = vpack.c.bf16 %v1422, %v1421
    %v1513 = vpack.c.bf16 %v1424, %v1423
    %v1514 = vpack.c.bf16 %v1426, %v1425
    %v1515 = vpack.c.bf16 %v1428, %v1427
    %v1516 = vpack.c.bf16 %v1430, %v1429
    %v1517 = vpack.c.bf16 %v1432, %v1431
    %v1518 = vpack.c.bf16 %v1434, %v1433
    %v1519 = vpack.c.bf16 %v1436, %v1435
    %v1520 = vpack.c.bf16 %v1438, %v1437
    %v1521 = vpack.c.bf16 %v1440, %v1439
    %v1522 = vpack.c.bf16 %v1442, %v1441
    %v1523 = vpack.c.bf16 %v1444, %v1443
    %v1524 = vpack.c.bf16 %v1446, %v1445
    %v1525 = vpack.c.bf16 %v1448, %v1447
    %v1526 = vpack.c.bf16 %v1450, %v1449
    %v1527 = vpack.c.bf16 %v1452, %v1451
    %v1528 = vpack.c.bf16 %v1454, %v1453
    %v1529 = vpack.c.bf16 %v1456, %v1455
    %v1530 = vpack.c.bf16 %v1458, %v1457
    %v1531 = vpack.c.bf16 %v1460, %v1459
    %v1532 = vpack.c.bf16 %v1462, %v1461
    %v1533 = vpack.c.bf16 %v1464, %v1463
    %v1534 = vpack.c.bf16 %v1466, %v1465
    %v1535 = vpack.c.bf16 %v1468, %v1467
    %v1536 = vpack.c.bf16 %v1470, %v1469
    %v1537 = vpack.c.bf16 %v1472, %v1471
    %v1538 = vpack.c.bf16 %v1474, %v1473
    %v1571 = vunpack.c.l.b16 %v1475
    %v1572 = vunpack.c.h.b16 %v1475
    %v1573 = vunpack.c.l.b16 %v1476
    %v1574 = vunpack.c.h.b16 %v1476
    %v1575 = vunpack.c.l.b16 %v1477
    %v1576 = vunpack.c.h.b16 %v1477
    %v1577 = vunpack.c.l.b16 %v1478
    %v1578 = vunpack.c.h.b16 %v1478
    %v1579 = vunpack.c.l.b16 %v1479
    %v1580 = vunpack.c.h.b16 %v1479
    %v1581 = vunpack.c.l.b16 %v1480
    %v1582 = vunpack.c.h.b16 %v1480
    %v1583 = vunpack.c.l.b16 %v1481
    %v1584 = vunpack.c.h.b16 %v1481
    %v1585 = vunpack.c.l.b16 %v1482
    %v1586 = vunpack.c.h.b16 %v1482
    %v1587 = vunpack.c.l.b16 %v1483
    %v1588 = vunpack.c.h.b16 %v1483
    %v1589 = vunpack.c.l.b16 %v1484
    %v1590 = vunpack.c.h.b16 %v1484
    %v1591 = vunpack.c.l.b16 %v1485
    %v1592 = vunpack.c.h.b16 %v1485
    %v1593 = vunpack.c.l.b16 %v1486
    %v1594 = vunpack.c.h.b16 %v1486
    %v1595 = vunpack.c.l.b16 %v1487
    %v1596 = vunpack.c.h.b16 %v1487
    %v1597 = vunpack.c.l.b16 %v1488
    %v1598 = vunpack.c.h.b16 %v1488
    %v1599 = vunpack.c.l.b16 %v1489
    %v1600 = vunpack.c.h.b16 %v1489
    %v1601 = vunpack.c.l.b16 %v1490
    %v1602 = vunpack.c.h.b16 %v1490
    %v1603 = vunpack.c.l.b16 %v1491
    %v1604 = vunpack.c.h.b16 %v1491
    %v1605 = vunpack.c.l.b16 %v1492
    %v1606 = vunpack.c.h.b16 %v1492
    %v1607 = vunpack.c.l.b16 %v1493
    %v1608 = vunpack.c.h.b16 %v1493
    %v1609 = vunpack.c.l.b16 %v1494
    %v1610 = vunpack.c.h.b16 %v1494
    %v1611 = vunpack.c.l.b16 %v1495
    %v1612 = vunpack.c.h.b16 %v1495
    %v1613 = vunpack.c.l.b16 %v1496
    %v1614 = vunpack.c.h.b16 %v1496
    %v1615 = vunpack.c.l.b16 %v1497
    %v1616 = vunpack.c.h.b16 %v1497
    %v1617 = vunpack.c.l.b16 %v1498
    %v1618 = vunpack.c.h.b16 %v1498
    %v1619 = vunpack.c.l.b16 %v1499
    %v1620 = vunpack.c.h.b16 %v1499
    %v1621 = vunpack.c.l.b16 %v1500
    %v1622 = vunpack.c.h.b16 %v1500
    %v1623 = vunpack.c.l.b16 %v1501
    %v1624 = vunpack.c.h.b16 %v1501
    %v1625 = vunpack.c.l.b16 %v1502
    %v1626 = vunpack.c.h.b16 %v1502
    %v1627 = vunpack.c.l.b16 %v1503
    %v1628 = vunpack.c.h.b16 %v1503
    %v1629 = vunpack.c.l.b16 %v1504
    %v1630 = vunpack.c.h.b16 %v1504
    %v1631 = vunpack.c.l.b16 %v1505
    %v1632 = vunpack.c.h.b16 %v1505
    %v1633 = vunpack.c.l.b16 %v1506
    %v1634 = vunpack.c.h.b16 %v1506
    %v1635 = vpack.c.b16 %v1575, %v1571
    %v1636 = vpack.c.b16 %v1576, %v1572
    %v1637 = vpack.c.b16 %v1577, %v1573
    %v1638 = vpack.c.b16 %v1578, %v1574
    %v1639 = vpack.c.b16 %v1583, %v1579
    %v1640 = vpack.c.b16 %v1584, %v1580
    %v1641 = vpack.c.b16 %v1585, %v1581
    %v1642 = vpack.c.b16 %v1586, %v1582
    %v1643 = vpack.c.b16 %v1591, %v1587
    %v1644 = vpack.c.b16 %v1592, %v1588
    %v1645 = vpack.c.b16 %v1593, %v1589
    %v1646 = vpack.c.b16 %v1594, %v1590
    %v1647 = vpack.c.b16 %v1599, %v1595
    %v1648 = vpack.c.b16 %v1600, %v1596
    %v1649 = vpack.c.b16 %v1601, %v1597
    %v1650 = vpack.c.b16 %v1602, %v1598
    %v1651 = vpack.c.b16 %v1607, %v1603
    %v1652 = vpack.c.b16 %v1608, %v1604
    %v1653 = vpack.c.b16 %v1609, %v1605
    %v1654 = vpack.c.b16 %v1610, %v1606
    %v1655 = vpack.c.b16 %v1615, %v1611
    %v1656 = vpack.c.b16 %v1616, %v1612
    %v1657 = vpack.c.b16 %v1617, %v1613
    %v1658 = vpack.c.b16 %v1618, %v1614
    %v1659 = vpack.c.b16 %v1623, %v1619
    %v1660 = vpack.c.b16 %v1624, %v1620
    %v1661 = vpack.c.b16 %v1625, %v1621
    %v1662 = vpack.c.b16 %v1626, %v1622
    %v1663 = vpack.c.b16 %v1631, %v1627
    %v1664 = vpack.c.b16 %v1632, %v1628
    %v1665 = vpack.c.b16 %v1633, %v1629
    %v1666 = vpack.c.b16 %v1634, %v1630
    %1699 = vmatprep.subr.bf16.mxu0 0
    %1700 = vmatpush1.bf16.msra.mxu0 %v1507
    %1701 = vmatprep.subr.bf16.mxu0 0
    %1702 = vmatpush1.bf16.msra.mxu0 %v1508
    %1703 = vmatprep.subr.bf16.mxu0 0
    %1704 = vmatpush1.bf16.msra.mxu0 %v1509
    %1705 = vmatprep.subr.bf16.mxu0 0
    %1706 = vmatpush1.bf16.msra.mxu0 %v1510
    %1707 = vmatprep.subr.bf16.mxu0 0
    %1708 = vmatpush1.bf16.msra.mxu0 %v1511
    %1709 = vmatprep.subr.bf16.mxu0 0
    %1710 = vmatpush1.bf16.msra.mxu0 %v1512
    %1711 = vmatprep.subr.bf16.mxu0 0
    %1712 = vmatpush1.bf16.msra.mxu0 %v1513
    %1713 = vmatprep.subr.bf16.mxu0 0
    %1714 = vmatpush1.bf16.msra.mxu0 %v1514
    %1715 = vmatprep.subr.bf16.mxu0 0
    %1716 = vmatpush1.bf16.msra.mxu0 %v1515
    %1717 = vmatprep.subr.bf16.mxu0 0
    %1718 = vmatpush1.bf16.msra.mxu0 %v1516
    %1719 = vmatprep.subr.bf16.mxu0 0
    %1720 = vmatpush1.bf16.msra.mxu0 %v1517
    %1721 = vmatprep.subr.bf16.mxu0 0
    %1722 = vmatpush1.bf16.msra.mxu0 %v1518
    %1723 = vmatprep.subr.bf16.mxu0 0
    %1724 = vmatpush1.bf16.msra.mxu0 %v1519
    %1725 = vmatprep.subr.bf16.mxu0 0
    %1726 = vmatpush1.bf16.msra.mxu0 %v1520
    %1727 = vmatprep.subr.bf16.mxu0 0
    %1728 = vmatpush1.bf16.msra.mxu0 %v1521
    %1729 = vmatprep.subr.bf16.mxu0 0
    %1730 = vmatpush1.bf16.msra.mxu0 %v1522
    %1731 = vmatprep.mubr.bf16.mxu0 %v1636
    %1732 = vmatmul.mubr.bf16.gmra.mrb[0].mxu0 %v1635
    %v1733 = vpop.f32.mrb[0].mxu0
    %v1734 = vadd.f32 0.0, %v1733
    %v1735 = vpop.f32.mrb[0].mxu0
    %v1736 = vpop.f32.mrb[0].mxu0
    %v1737 = vadd.f32 0.0, %v1736
    %v1738 = vpop.f32.mrb[0].mxu0
    %1739 = vmatprep.mubr.bf16.mxu0 %v1640
    %1740 = vmatmul.mubr.bf16.gmra.mrb[0].mxu0 %v1639
    %v1741 = vpop.f32.mrb[0].mxu0
    %v1742 = vadd.f32 0.0, %v1741
    %v1743 = vpop.f32.mrb[0].mxu0
    %v1744 = vpop.f32.mrb[0].mxu0
    %v1745 = vadd.f32 0.0, %v1744
    %v1746 = vpop.f32.mrb[0].mxu0
    %1747 = vmatprep.mubr.bf16.mxu0 %v1644
    %1748 = vmatmul.mubr.bf16.gmra.mrb[0].mxu0 %v1643
    %v1749 = vpop.f32.mrb[0].mxu0
    %v1750 = vadd.f32 0.0, %v1749
    %v1751 = vpop.f32.mrb[0].mxu0
    %v1752 = vpop.f32.mrb[0].mxu0
    %v1753 = vadd.f32 0.0, %v1752
    %v1754 = vpop.f32.mrb[0].mxu0
    %1755 = vmatprep.mubr.bf16.mxu0 %v1648
    %1756 = vmatmul.mubr.bf16.gmra.mrb[0].mxu0 %v1647
    %v1757 = vpop.f32.mrb[0].mxu0
    %v1758 = vadd.f32 0.0, %v1757
    %v1759 = vpop.f32.mrb[0].mxu0
    %v1760 = vpop.f32.mrb[0].mxu0
    %v1761 = vadd.f32 0.0, %v1760
    %v1762 = vpop.f32.mrb[0].mxu0
    %1763 = vmatprep.mubr.bf16.mxu0 %v1652
    %1764 = vmatmul.mubr.bf16.gmra.mrb[0].mxu0 %v1651
    %v1765 = vpop.f32.mrb[0].mxu0
    %v1766 = vadd.f32 0.0, %v1765
    %v1767 = vpop.f32.mrb[0].mxu0
    %v1768 = vpop.f32.mrb[0].mxu0
    %v1769 = vadd.f32 0.0, %v1768
    %v1770 = vpop.f32.mrb[0].mxu0
    %1771 = vmatprep.mubr.bf16.mxu0 %v1656
    %1772 = vmatmul.mubr.bf16.gmra.mrb[0].mxu0 %v1655
    %v1773 = vpop.f32.mrb[0].mxu0
    %v1774 = vadd.f32 0.0, %v1773
    %v1775 = vpop.f32.mrb[0].mxu0
    %v1776 = vpop.f32.mrb[0].mxu0
    %v1777 = vadd.f32 0.0, %v1776
    %v1778 = vpop.f32.mrb[0].mxu0
    %1779 = vmatprep.mubr.bf16.mxu0 %v1660
    %1780 = vmatmul.mubr.bf16.gmra.mrb[0].mxu0 %v1659
    %v1781 = vpop.f32.mrb[0].mxu0
    %v1782 = vadd.f32 0.0, %v1781
    %v1783 = vpop.f32.mrb[0].mxu0
    %v1784 = vpop.f32.mrb[0].mxu0
    %v1785 = vadd.f32 0.0, %v1784
    %v1786 = vpop.f32.mrb[0].mxu0
    %1787 = vmatprep.mubr.bf16.mxu0 %v1664
    %1788 = vmatmul.mubr.bf16.gmra.mrb[0].mxu0 %v1663
    %v1789 = vpop.f32.mrb[0].mxu0
    %v1790 = vadd.f32 0.0, %v1789
    %v1791 = vpop.f32.mrb[0].mxu0
    %v1792 = vpop.f32.mrb[0].mxu0
    %v1793 = vadd.f32 0.0, %v1792
    %v1794 = vpop.f32.mrb[0].mxu0
    %1795 = vdwg.mxu0
    %1796 = vmatprep.subr.bf16.mxu0 0
    %1797 = vmatpush1.bf16.msra.mxu0 %v1523
    %1798 = vmatprep.subr.bf16.mxu0 0
    %1799 = vmatpush1.bf16.msra.mxu0 %v1524
    %1800 = vmatprep.subr.bf16.mxu0 0
    %1801 = vmatpush1.bf16.msra.mxu0 %v1525
    %1802 = vmatprep.subr.bf16.mxu0 0
    %1803 = vmatpush1.bf16.msra.mxu0 %v1526
    %1804 = vmatprep.subr.bf16.mxu0 0
    %1805 = vmatpush1.bf16.msra.mxu0 %v1527
    %1806 = vmatprep.subr.bf16.mxu0 0
    %1807 = vmatpush1.bf16.msra.mxu0 %v1528
    %1808 = vmatprep.subr.bf16.mxu0 0
    %1809 = vmatpush1.bf16.msra.mxu0 %v1529
    %1810 = vmatprep.subr.bf16.mxu0 0
    %1811 = vmatpush1.bf16.msra.mxu0 %v1530
    %1812 = vmatprep.subr.bf16.mxu0 0
    %1813 = vmatpush1.bf16.msra.mxu0 %v1531
    %1814 = vmatprep.subr.bf16.mxu0 0
    %1815 = vmatpush1.bf16.msra.mxu0 %v1532
    %1816 = vmatprep.subr.bf16.mxu0 0
    %1817 = vmatpush1.bf16.msra.mxu0 %v1533
    %1818 = vmatprep.subr.bf16.mxu0 0
    %1819 = vmatpush1.bf16.msra.mxu0 %v1534
    %1820 = vmatprep.subr.bf16.mxu0 0
    %1821 = vmatpush1.bf16.msra.mxu0 %v1535
    %1822 = vmatprep.subr.bf16.mxu0 0
    %1823 = vmatpush1.bf16.msra.mxu0 %v1536
    %1824 = vmatprep.subr.bf16.mxu0 0
    %1825 = vmatpush1.bf16.msra.mxu0 %v1537
    %1826 = vmatprep.subr.bf16.mxu0 0
    %1827 = vmatpush1.bf16.msra.mxu0 %v1538
    %1828 = vmatprep.mubr.bf16.mxu0 %v1638
    %1829 = vmatmul.mubr.bf16.gmra.mrb[0].mxu0 %v1637
    %v1830 = vpop.f32.mrb[0].mxu0
    %v1831 = vadd.f32 %v1734, %v1830
    %v1832 = vpop.f32.mrb[0].mxu0
    %v1833 = vpop.f32.mrb[0].mxu0
    %v1834 = vadd.f32 %v1737, %v1833
    %v1835 = vpop.f32.mrb[0].mxu0
    %1836 = vmatprep.mubr.bf16.mxu0 %v1642
    %1837 = vmatmul.mubr.bf16.gmra.mrb[0].mxu0 %v1641
    %v1838 = vpop.f32.mrb[0].mxu0
    %v1839 = vadd.f32 %v1742, %v1838
    %v1840 = vpop.f32.mrb[0].mxu0
    %v1841 = vpop.f32.mrb[0].mxu0
    %v1842 = vadd.f32 %v1745, %v1841
    %v1843 = vpop.f32.mrb[0].mxu0
    %1844 = vmatprep.mubr.bf16.mxu0 %v1646
    %1845 = vmatmul.mubr.bf16.gmra.mrb[0].mxu0 %v1645
    %v1846 = vpop.f32.mrb[0].mxu0
    %v1847 = vadd.f32 %v1750, %v1846
    %v1848 = vpop.f32.mrb[0].mxu0
    %v1849 = vpop.f32.mrb[0].mxu0
    %v1850 = vadd.f32 %v1753, %v1849
    %v1851 = vpop.f32.mrb[0].mxu0
    %1852 = vmatprep.mubr.bf16.mxu0 %v1650
    %1853 = vmatmul.mubr.bf16.gmra.mrb[0].mxu0 %v1649
    %v1854 = vpop.f32.mrb[0].mxu0
    %v1855 = vadd.f32 %v1758, %v1854
    %v1856 = vpop.f32.mrb[0].mxu0
    %v1857 = vpop.f32.mrb[0].mxu0
    %v1858 = vadd.f32 %v1761, %v1857
    %v1859 = vpop.f32.mrb[0].mxu0
    %1860 = vmatprep.mubr.bf16.mxu0 %v1654
    %1861 = vmatmul.mubr.bf16.gmra.mrb[0].mxu0 %v1653
    %v1862 = vpop.f32.mrb[0].mxu0
    %v1863 = vadd.f32 %v1766, %v1862
    %v1864 = vpop.f32.mrb[0].mxu0
    %v1865 = vpop.f32.mrb[0].mxu0
    %v1866 = vadd.f32 %v1769, %v1865
    %v1867 = vpop.f32.mrb[0].mxu0
    %1868 = vmatprep.mubr.bf16.mxu0 %v1658
    %1869 = vmatmul.mubr.bf16.gmra.mrb[0].mxu0 %v1657
    %v1870 = vpop.f32.mrb[0].mxu0
    %v1871 = vadd.f32 %v1774, %v1870
    %v1872 = vpop.f32.mrb[0].mxu0
    %v1873 = vpop.f32.mrb[0].mxu0
    %v1874 = vadd.f32 %v1777, %v1873
    %v1875 = vpop.f32.mrb[0].mxu0
    %1876 = vmatprep.mubr.bf16.mxu0 %v1662
    %1877 = vmatmul.mubr.bf16.gmra.mrb[0].mxu0 %v1661
    %v1878 = vpop.f32.mrb[0].mxu0
    %v1879 = vadd.f32 %v1782, %v1878
    %v1880 = vpop.f32.mrb[0].mxu0
    %v1881 = vpop.f32.mrb[0].mxu0
    %v1882 = vadd.f32 %v1785, %v1881
    %v1883 = vpop.f32.mrb[0].mxu0
    %1884 = vmatprep.mubr.bf16.mxu0 %v1666
    %1885 = vmatmul.mubr.bf16.gmra.mrb[0].mxu0 %v1665
    %v1886 = vpop.f32.mrb[0].mxu0
    %v1887 = vadd.f32 %v1790, %v1886
    %v1888 = vpop.f32.mrb[0].mxu0
    %v1889 = vpop.f32.mrb[0].mxu0
    %v1890 = vadd.f32 %v1793, %v1889
    %v1891 = vpop.f32.mrb[0].mxu0
    %1892 = vdwg.mxu0
    %v1893 = vpack.c.bf16 %v1834, %v1831
    %v1894 = vpack.c.bf16 %v1842, %v1839
    %v1895 = vpack.c.bf16 %v1850, %v1847
    %v1896 = vpack.c.bf16 %v1858, %v1855
    %v1897 = vpack.c.bf16 %v1866, %v1863
    %v1898 = vpack.c.bf16 %v1874, %v1871
    %v1899 = vpack.c.bf16 %v1882, %v1879
    %v1900 = vpack.c.bf16 %v1890, %v1887
    %v1909 = vunpack.c.l.b16 %v1893
    %v1910 = vunpack.c.h.b16 %v1893
    %v1911 = vunpack.c.l.b16 %v1894
    %v1912 = vunpack.c.h.b16 %v1894
    %v1913 = vunpack.c.l.b16 %v1895
    %v1914 = vunpack.c.h.b16 %v1895
    %v1915 = vunpack.c.l.b16 %v1896
    %v1916 = vunpack.c.h.b16 %v1896
    %v1917 = vunpack.c.l.b16 %v1897
    %v1918 = vunpack.c.h.b16 %v1897
    %v1919 = vunpack.c.l.b16 %v1898
    %v1920 = vunpack.c.h.b16 %v1898
    %v1921 = vunpack.c.l.b16 %v1899
    %v1922 = vunpack.c.h.b16 %v1899
    %v1923 = vunpack.c.l.b16 %v1900
    %v1924 = vunpack.c.h.b16 %v1900
    %v1925 = vpack.c.b16 %v1909, %v1909
    %v1926 = vpack.c.b16 %v1910, %v1910
    %v1927 = vpack.c.b16 %v1911, %v1911
    %v1928 = vpack.c.b16 %v1912, %v1912
    %v1929 = vpack.c.b16 %v1913, %v1913
    %v1930 = vpack.c.b16 %v1914, %v1914
    %v1931 = vpack.c.b16 %v1915, %v1915
    %v1932 = vpack.c.b16 %v1916, %v1916
    %v1933 = vpack.c.b16 %v1917, %v1917
    %v1934 = vpack.c.b16 %v1918, %v1918
    %v1935 = vpack.c.b16 %v1919, %v1919
    %v1936 = vpack.c.b16 %v1920, %v1920
    %v1937 = vpack.c.b16 %v1921, %v1921
    %v1938 = vpack.c.b16 %v1922, %v1922
    %v1939 = vpack.c.b16 %v1923, %v1923
    %v1940 = vpack.c.b16 %v1924, %v1924
    %1957 = vst [vmem:[#allocation3] sm:$0xf] %v1925
    %1958 = vst [vmem:[#allocation3 + $0x4] sm:$0xf] %v1926
    %1959 = vst [vmem:[#allocation3 + $0x8] sm:$0xf] %v1927
    %1960 = vst [vmem:[#allocation3 + $0xc] sm:$0xf] %v1928
    %1961 = vst [vmem:[#allocation3 + $0x10] sm:$0xf] %v1929
    %1962 = vst [vmem:[#allocation3 + $0x14] sm:$0xf] %v1930
    %1963 = vst [vmem:[#allocation3 + $0x18] sm:$0xf] %v1931
    %1964 = vst [vmem:[#allocation3 + $0x1c] sm:$0xf] %v1932
    %1965 = vst [vmem:[#allocation3 + $0x20] sm:$0xf] %v1933
    %1966 = vst [vmem:[#allocation3 + $0x24] sm:$0xf] %v1934
    %1967 = vst [vmem:[#allocation3 + $0x28] sm:$0xf] %v1935
    %1968 = vst [vmem:[#allocation3 + $0x2c] sm:$0xf] %v1936
    %1969 = vst [vmem:[#allocation3 + $0x30] sm:$0xf] %v1937
    %1970 = vst [vmem:[#allocation3 + $0x34] sm:$0xf] %v1938
    %1971 = vst [vmem:[#allocation3 + $0x38] sm:$0xf] %v1939
    %1972 = vst [vmem:[#allocation3 + $0x3c] sm:$0xf] %v1940
    %1973 = vst [vmem:[#allocation3 + $0x40] sm:$0xf] 0
    %1974 = vst [vmem:[#allocation3 + $0x44] sm:$0xf] 0
    %1975 = vst [vmem:[#allocation3 + $0x48] sm:$0xf] 0
    %1976 = vst [vmem:[#allocation3 + $0x4c] sm:$0xf] 0
    %1977 = vst [vmem:[#allocation3 + $0x50] sm:$0xf] 0
    %v1978 = vld [vmem:[#allocation3] sm:$0xf]
    %v1979 = vld [vmem:[#allocation3 + $0x4] sm:$0xf]
    %v1980 = vld [vmem:[#allocation3 + $0x8] sm:$0xf]
    %v1981 = vld [vmem:[#allocation3 + $0xc] sm:$0xf]
    %v1982 = vld [vmem:[#allocation3 + $0x10] sm:$0xf]
    %v1983 = vld [vmem:[#allocation3 + $0x14] sm:$0xf]
    %v1984 = vld [vmem:[#allocation3 + $0x18] sm:$0xf]
    %v1985 = vld [vmem:[#allocation3 + $0x1c] sm:$0xf]
    %v1986 = vld [vmem:[#allocation3 + $0x20] sm:$0xf]
    %v1987 = vld [vmem:[#allocation3 + $0x24] sm:$0xf]
    %v1988 = vld [vmem:[#allocation3 + $0x28] sm:$0xf]
    %v1989 = vld [vmem:[#allocation3 + $0x2c] sm:$0xf]
    %v1990 = vld [vmem:[#allocation3 + $0x30] sm:$0xf]
    %v1991 = vld [vmem:[#allocation3 + $0x34] sm:$0xf]
    %v1992 = vld [vmem:[#allocation3 + $0x38] sm:$0xf]
    %v1993 = vld [vmem:[#allocation3 + $0x3c] sm:$0xf]
    %v1994 = vld [vmem:[#allocation3 + $0x40] sm:$0xf]
    %v1995 = vld [vmem:[#allocation3 + $0x44] sm:$0xf]
    %v1996 = vld [vmem:[#allocation3 + $0x48] sm:$0xf]
    %v1997 = vld [vmem:[#allocation3 + $0x4c] sm:$0xf]
    %v1998 = vld [vmem:[#allocation3 + $0x50] sm:$0xf]
    %v1999 = vld [vmem:[%s5] sm:$0xff]
    %v2000 = vld [vmem:[%s5 + $0x34] sm:$0xff]
    %v2001 = vld [vmem:[%s5 + $0x68] sm:$0xff]
    %v2002 = vld [vmem:[%s5 + $0x9c] sm:$0xff]
    %v2003 = vld [vmem:[%s5 + $0xd0] sm:$0xff]
    %v2004 = vld [vmem:[%s5 + $0x104] sm:$0xff]
    %v2005 = vld [vmem:[%s5 + $0x138] sm:$0xff]
    %v2006 = vld [vmem:[%s5 + $0x16c] sm:$0xff]
    %v2007 = vld [vmem:[%s5 + $0x1a0] sm:$0xff]
    %v2008 = vld [vmem:[%s5 + $0x1d4] sm:$0xff]
    %v2009 = vld [vmem:[%s5 + $0x208] sm:$0xff]
    %v2010 = vld [vmem:[%s5 + $0x23c] sm:$0xff]
    %v2011 = vld [vmem:[%s5 + $0x270] sm:$0xff]
    %v2012 = vld [vmem:[%s5 + $0x2a4] sm:$0xff]
    %v2013 = vld [vmem:[%s5 + $0x2d8] sm:$0xff]
    %v2014 = vld [vmem:[%s5 + $0x30c] sm:$0xff]
    %v2036 = vunpack.c.l.b16 %v1978
    %v2037 = vunpack.c.l.b16 %v1979
    %v2038 = vunpack.c.l.b16 %v1980
    %v2039 = vunpack.c.l.b16 %v1981
    %v2040 = vunpack.c.l.b16 %v1982
    %v2041 = vunpack.c.l.b16 %v1983
    %v2042 = vunpack.c.l.b16 %v1984
    %v2043 = vunpack.c.l.b16 %v1985
    %v2044 = vunpack.c.l.b16 %v1986
    %v2045 = vunpack.c.l.b16 %v1987
    %v2046 = vunpack.c.l.b16 %v1988
    %v2047 = vunpack.c.l.b16 %v1989
    %v2048 = vunpack.c.l.b16 %v1990
    %v2049 = vunpack.c.l.b16 %v1991
    %v2050 = vunpack.c.l.b16 %v1992
    %v2051 = vunpack.c.l.b16 %v1993
    %v2052 = vunpack.c.l.b16 %v1994
    %v2053 = vunpack.c.l.b16 %v1995
    %v2054 = vunpack.c.l.b16 %v1996
    %v2055 = vunpack.c.l.b16 %v1997
    %v2056 = vunpack.c.l.b16 %v1998
    %v2057 = vpack.c.b16 %v2037, %v2036
    %v2058 = vpack.c.b16 %v2039, %v2038
    %v2059 = vpack.c.b16 %v2041, %v2040
    %v2060 = vpack.c.b16 %v2043, %v2042
    %v2061 = vpack.c.b16 %v2045, %v2044
    %v2062 = vpack.c.b16 %v2047, %v2046
    %v2063 = vpack.c.b16 %v2049, %v2048
    %v2064 = vpack.c.b16 %v2051, %v2050
    %v2065 = vpack.c.b16 %v2053, %v2052
    %v2066 = vpack.c.b16 %v2055, %v2054
    %v2067 = vpack.c.b16 %v2056, %v2056
    %v2095 = vunpack.c.l.b16 %v1999
    %v2096 = vunpack.c.h.b16 %v1999
    %v2097 = vunpack.c.l.b16 %v2000
    %v2098 = vunpack.c.h.b16 %v2000
    %v2099 = vunpack.c.l.b16 %v2001
    %v2100 = vunpack.c.h.b16 %v2001
    %v2101 = vunpack.c.l.b16 %v2002
    %v2102 = vunpack.c.h.b16 %v2002
    %v2103 = vunpack.c.l.b16 %v2003
    %v2104 = vunpack.c.h.b16 %v2003
    %v2105 = vunpack.c.l.b16 %v2004
    %v2106 = vunpack.c.h.b16 %v2004
    %v2107 = vunpack.c.l.b16 %v2005
    %v2108 = vunpack.c.h.b16 %v2005
    %v2109 = vunpack.c.l.b16 %v2006
    %v2110 = vunpack.c.h.b16 %v2006
    %v2111 = vunpack.c.l.b16 %v2007
    %v2112 = vunpack.c.h.b16 %v2007
    %v2113 = vunpack.c.l.b16 %v2008
    %v2114 = vunpack.c.h.b16 %v2008
    %v2115 = vunpack.c.l.b16 %v2009
    %v2116 = vunpack.c.h.b16 %v2009
    %v2117 = vunpack.c.l.b16 %v2010
    %v2118 = vunpack.c.h.b16 %v2010
    %v2119 = vunpack.c.l.b16 %v2011
    %v2120 = vunpack.c.h.b16 %v2011
    %v2121 = vunpack.c.l.b16 %v2012
    %v2122 = vunpack.c.h.b16 %v2012
    %v2123 = vunpack.c.l.b16 %v2013
    %v2124 = vunpack.c.h.b16 %v2013
    %v2125 = vunpack.c.l.b16 %v2014
    %v2126 = vunpack.c.h.b16 %v2014
    %v2127 = vpack.c.b16 %v2097, %v2095
    %v2128 = vpack.c.b16 %v2098, %v2096
    %v2129 = vpack.c.b16 %v2101, %v2099
    %v2130 = vpack.c.b16 %v2102, %v2100
    %v2131 = vpack.c.b16 %v2105, %v2103
    %v2132 = vpack.c.b16 %v2106, %v2104
    %v2133 = vpack.c.b16 %v2109, %v2107
    %v2134 = vpack.c.b16 %v2110, %v2108
    %v2135 = vpack.c.b16 %v2113, %v2111
    %v2136 = vpack.c.b16 %v2114, %v2112
    %v2137 = vpack.c.b16 %v2117, %v2115
    %v2138 = vpack.c.b16 %v2118, %v2116
    %v2139 = vpack.c.b16 %v2121, %v2119
    %v2140 = vpack.c.b16 %v2122, %v2120
    %v2141 = vpack.c.b16 %v2125, %v2123
    %v2142 = vpack.c.b16 %v2126, %v2124
    %2159 = vmatprep.subr.bf16.mxu0 %v2128
    %2160 = vmatpush1.bf16.msra.mxu0 %v2127
    %2161 = vmatprep.subr.bf16.mxu0 %v2130
    %2162 = vmatpush1.bf16.msra.mxu0 %v2129
    %2163 = vmatprep.subr.bf16.mxu0 %v2132
    %2164 = vmatpush1.bf16.msra.mxu0 %v2131
    %2165 = vmatprep.subr.bf16.mxu0 %v2134
    %2166 = vmatpush1.bf16.msra.mxu0 %v2133
    %2167 = vmatprep.subr.bf16.mxu0 %v2136
    %2168 = vmatpush1.bf16.msra.mxu0 %v2135
    %2169 = vmatprep.subr.bf16.mxu0 %v2138
    %2170 = vmatpush1.bf16.msra.mxu0 %v2137
    %2171 = vmatprep.subr.bf16.mxu0 %v2140
    %2172 = vmatpush1.bf16.msra.mxu0 %v2139
    %2173 = vmatprep.subr.bf16.mxu0 %v2142
    %2174 = vmatpush1.bf16.msra.mxu0 %v2141
    %2175 = vmatprep.subr.bf16.mxu0 0
    %2176 = vmatpush1.bf16.msra.mxu0 0
    %2177 = vmatprep.subr.bf16.mxu0 0
    %2178 = vmatpush1.bf16.msra.mxu0 0
    %2179 = vmatprep.subr.bf16.mxu0 0
    %2180 = vmatpush1.bf16.msra.mxu0 0
    %2181 = vmatprep.subr.bf16.mxu0 0
    %2182 = vmatpush1.bf16.msra.mxu0 0
    %2183 = vmatprep.subr.bf16.mxu0 0
    %2184 = vmatpush1.bf16.msra.mxu0 0
    %2185 = vmatprep.subr.bf16.mxu0 0
    %2186 = vmatpush1.bf16.msra.mxu0 0
    %2187 = vmatprep.subr.bf16.mxu0 0
    %2188 = vmatpush1.bf16.msra.mxu0 0
    %2189 = vmatprep.subr.bf16.mxu0 0
    %2190 = vmatpush1.bf16.msra.mxu0 0
    %2191 = vmatprep.mubr.bf16.mxu0 0
    %2192 = vmatmul.mubr.bf16.gmra.mrb[0].mxu0 %v2057
    %v2193 = vpop.f32.mrb[0].mxu0
    %v2194 = vadd.f32 0.0, %v2193
    %v2195 = vpop.f32.mrb[0].mxu0
    %v2196 = vadd.f32 0.0, %v2195
    %v2197 = vpop.f32.mrb[0].mxu0
    %v2198 = vadd.f32 0.0, %v2197
    %v2199 = vpop.f32.mrb[0].mxu0
    %v2200 = vadd.f32 0.0, %v2199
    %2201 = vmatprep.mubr.bf16.mxu0 0
    %2202 = vmatmul.mubr.bf16.gmra.mrb[0].mxu0 %v2058
    %v2203 = vpop.f32.mrb[0].mxu0
    %v2204 = vadd.f32 0.0, %v2203
    %v2205 = vpop.f32.mrb[0].mxu0
    %v2206 = vadd.f32 0.0, %v2205
    %v2207 = vpop.f32.mrb[0].mxu0
    %v2208 = vadd.f32 0.0, %v2207
    %v2209 = vpop.f32.mrb[0].mxu0
    %v2210 = vadd.f32 0.0, %v2209
    %2211 = vmatprep.mubr.bf16.mxu0 0
    %2212 = vmatmul.mubr.bf16.gmra.mrb[0].mxu0 %v2059
    %v2213 = vpop.f32.mrb[0].mxu0
    %v2214 = vadd.f32 0.0, %v2213
    %v2215 = vpop.f32.mrb[0].mxu0
    %v2216 = vadd.f32 0.0, %v2215
    %v2217 = vpop.f32.mrb[0].mxu0
    %v2218 = vadd.f32 0.0, %v2217
    %v2219 = vpop.f32.mrb[0].mxu0
    %v2220 = vadd.f32 0.0, %v2219
    %2221 = vmatprep.mubr.bf16.mxu0 0
    %2222 = vmatmul.mubr.bf16.gmra.mrb[0].mxu0 %v2060
    %v2223 = vpop.f32.mrb[0].mxu0
    %v2224 = vadd.f32 0.0, %v2223
    %v2225 = vpop.f32.mrb[0].mxu0
    %v2226 = vadd.f32 0.0, %v2225
    %v2227 = vpop.f32.mrb[0].mxu0
    %v2228 = vadd.f32 0.0, %v2227
    %v2229 = vpop.f32.mrb[0].mxu0
    %v2230 = vadd.f32 0.0, %v2229
    %2231 = vmatprep.mubr.bf16.mxu0 0
    %2232 = vmatmul.mubr.bf16.gmra.mrb[0].mxu0 %v2061
    %v2233 = vpop.f32.mrb[0].mxu0
    %v2234 = vadd.f32 0.0, %v2233
    %v2235 = vpop.f32.mrb[0].mxu0
    %v2236 = vadd.f32 0.0, %v2235
    %v2237 = vpop.f32.mrb[0].mxu0
    %v2238 = vadd.f32 0.0, %v2237
    %v2239 = vpop.f32.mrb[0].mxu0
    %v2240 = vadd.f32 0.0, %v2239
    %2241 = vmatprep.mubr.bf16.mxu0 0
    %2242 = vmatmul.mubr.bf16.gmra.mrb[0].mxu0 %v2062
    %v2243 = vpop.f32.mrb[0].mxu0
    %v2244 = vadd.f32 0.0, %v2243
    %v2245 = vpop.f32.mrb[0].mxu0
    %v2246 = vadd.f32 0.0, %v2245
    %v2247 = vpop.f32.mrb[0].mxu0
    %v2248 = vadd.f32 0.0, %v2247
    %v2249 = vpop.f32.mrb[0].mxu0
    %v2250 = vadd.f32 0.0, %v2249
    %2251 = vmatprep.mubr.bf16.mxu0 0
    %2252 = vmatmul.mubr.bf16.gmra.mrb[0].mxu0 %v2063
    %v2253 = vpop.f32.mrb[0].mxu0
    %v2254 = vadd.f32 0.0, %v2253
    %v2255 = vpop.f32.mrb[0].mxu0
    %v2256 = vadd.f32 0.0, %v2255
    %v2257 = vpop.f32.mrb[0].mxu0
    %v2258 = vadd.f32 0.0, %v2257
    %v2259 = vpop.f32.mrb[0].mxu0
    %v2260 = vadd.f32 0.0, %v2259
    %2261 = vmatprep.mubr.bf16.mxu0 0
    %2262 = vmatmul.mubr.bf16.gmra.mrb[0].mxu0 %v2064
    %v2263 = vpop.f32.mrb[0].mxu0
    %v2264 = vadd.f32 0.0, %v2263
    %v2265 = vpop.f32.mrb[0].mxu0
    %v2266 = vadd.f32 0.0, %v2265
    %v2267 = vpop.f32.mrb[0].mxu0
    %v2268 = vadd.f32 0.0, %v2267
    %v2269 = vpop.f32.mrb[0].mxu0
    %v2270 = vadd.f32 0.0, %v2269
    %2271 = vmatprep.mubr.bf16.mxu0 0
    %2272 = vmatmul.mubr.bf16.gmra.mrb[0].mxu0 %v2065
    %v2273 = vpop.f32.mrb[0].mxu0
    %v2274 = vadd.f32 0.0, %v2273
    %v2275 = vpop.f32.mrb[0].mxu0
    %v2276 = vadd.f32 0.0, %v2275
    %v2277 = vpop.f32.mrb[0].mxu0
    %v2278 = vadd.f32 0.0, %v2277
    %v2279 = vpop.f32.mrb[0].mxu0
    %v2280 = vadd.f32 0.0, %v2279
    %2281 = vmatprep.mubr.bf16.mxu0 0
    %2282 = vmatmul.mubr.bf16.gmra.mrb[0].mxu0 %v2066
    %v2283 = vpop.f32.mrb[0].mxu0
    %v2284 = vadd.f32 0.0, %v2283
    %v2285 = vpop.f32.mrb[0].mxu0
    %v2286 = vadd.f32 0.0, %v2285
    %v2287 = vpop.f32.mrb[0].mxu0
    %v2288 = vadd.f32 0.0, %v2287
    %v2289 = vpop.f32.mrb[0].mxu0
    %v2290 = vadd.f32 0.0, %v2289
    %2291 = vmatprep.mubr.bf16.mxu0 0
    %2292 = vmatmul.mubr.bf16.gmra.mrb[0].mxu0 %v2067
    %v2293 = vpop.f32.mrb[0].mxu0
    %v2294 = vadd.f32 0.0, %v2293
    %v2295 = vpop.f32.mrb[0].mxu0
    %v2296 = vadd.f32 0.0, %v2295
    %v2297 = vpop.f32.mrb[0].mxu0
    %v2298 = vpop.f32.mrb[0].mxu0
    %2299 = vdwg.mxu0
    %2300 = vst [vmem:[#allocation4] sm:$0xff] %v2194
    %2301 = vst [vmem:[#allocation4 + $0x8] sm:$0xff] %v2196
    %2302 = vst [vmem:[#allocation4 + $0x68] sm:$0xff] %v2198
    %2303 = vst [vmem:[#allocation4 + $0x70] sm:$0xff] %v2200
    %2304 = vst [vmem:[#allocation4 + $0xd0] sm:$0xff] %v2204
    %2305 = vst [vmem:[#allocation4 + $0xd8] sm:$0xff] %v2206
    %2306 = vst [vmem:[#allocation4 + $0x138] sm:$0xff] %v2208
    %2307 = vst [vmem:[#allocation4 + $0x140] sm:$0xff] %v2210
    %2308 = vst [vmem:[#allocation4 + $0x1a0] sm:$0xff] %v2214
    %2309 = vst [vmem:[#allocation4 + $0x1a8] sm:$0xff] %v2216
    %2310 = vst [vmem:[#allocation4 + $0x208] sm:$0xff] %v2218
    %2311 = vst [vmem:[#allocation4 + $0x210] sm:$0xff] %v2220
    %2312 = vst [vmem:[#allocation4 + $0x270] sm:$0xff] %v2224
    %2313 = vst [vmem:[#allocation4 + $0x278] sm:$0xff] %v2226
    %2314 = vst [vmem:[#allocation4 + $0x2d8] sm:$0xff] %v2228
    %2315 = vst [vmem:[#allocation4 + $0x2e0] sm:$0xff] %v2230
    %2316 = vst [vmem:[#allocation4 + $0x340] sm:$0xff] %v2234
    %2317 = vst [vmem:[#allocation4 + $0x348] sm:$0xff] %v2236
    %2318 = vst [vmem:[#allocation4 + $0x3a8] sm:$0xff] %v2238
    %2319 = vst [vmem:[#allocation4 + $0x3b0] sm:$0xff] %v2240
    %2320 = vst [vmem:[#allocation4 + $0x410] sm:$0xff] %v2244
    %2321 = vst [vmem:[#allocation4 + $0x418] sm:$0xff] %v2246
    %2322 = vst [vmem:[#allocation4 + $0x478] sm:$0xff] %v2248
    %2323 = vst [vmem:[#allocation4 + $0x480] sm:$0xff] %v2250
    %2324 = vst [vmem:[#allocation4 + $0x4e0] sm:$0xff] %v2254
    %2325 = vst [vmem:[#allocation4 + $0x4e8] sm:$0xff] %v2256
    %2326 = vst [vmem:[#allocation4 + $0x548] sm:$0xff] %v2258
    %2327 = vst [vmem:[#allocation4 + $0x550] sm:$0xff] %v2260
    %2328 = vst [vmem:[#allocation4 + $0x5b0] sm:$0xff] %v2264
    %2329 = vst [vmem:[#allocation4 + $0x5b8] sm:$0xff] %v2266
    %2330 = vst [vmem:[#allocation4 + $0x618] sm:$0xff] %v2268
    %2331 = vst [vmem:[#allocation4 + $0x620] sm:$0xff] %v2270
    %2332 = vst [vmem:[#allocation4 + $0x680] sm:$0xff] %v2274
    %2333 = vst [vmem:[#allocation4 + $0x688] sm:$0xff] %v2276
    %2334 = vst [vmem:[#allocation4 + $0x6e8] sm:$0xff] %v2278
    %2335 = vst [vmem:[#allocation4 + $0x6f0] sm:$0xff] %v2280
    %2336 = vst [vmem:[#allocation4 + $0x750] sm:$0xff] %v2284
    %2337 = vst [vmem:[#allocation4 + $0x758] sm:$0xff] %v2286
    %2338 = vst [vmem:[#allocation4 + $0x7b8] sm:$0xff] %v2288
    %2339 = vst [vmem:[#allocation4 + $0x7c0] sm:$0xff] %v2290
    %2340 = vst [vmem:[#allocation4 + $0x820] sm:$0xff] %v2294
    %2341 = vst [vmem:[#allocation4 + $0x828] sm:$0xff] %v2296
    %v2342 = vld [vmem:[%s5 + $0x8] sm:$0xff]
    %v2343 = vld [vmem:[%s5 + $0x3c] sm:$0xff]
    %v2344 = vld [vmem:[%s5 + $0x70] sm:$0xff]
    %v2345 = vld [vmem:[%s5 + $0xa4] sm:$0xff]
    %v2346 = vld [vmem:[%s5 + $0xd8] sm:$0xff]
    %v2347 = vld [vmem:[%s5 + $0x10c] sm:$0xff]
    %v2348 = vld [vmem:[%s5 + $0x140] sm:$0xff]
    %v2349 = vld [vmem:[%s5 + $0x174] sm:$0xff]
    %v2350 = vld [vmem:[%s5 + $0x1a8] sm:$0xff]
    %v2351 = vld [vmem:[%s5 + $0x1dc] sm:$0xff]
    %v2352 = vld [vmem:[%s5 + $0x210] sm:$0xff]
    %v2353 = vld [vmem:[%s5 + $0x244] sm:$0xff]
    %v2354 = vld [vmem:[%s5 + $0x278] sm:$0xff]
    %v2355 = vld [vmem:[%s5 + $0x2ac] sm:$0xff]
    %v2356 = vld [vmem:[%s5 + $0x2e0] sm:$0xff]
    %v2357 = vld [vmem:[%s5 + $0x314] sm:$0xff]
    %v2374 = vunpack.c.l.b16 %v2342
    %v2375 = vunpack.c.h.b16 %v2342
    %v2376 = vunpack.c.l.b16 %v2343
    %v2377 = vunpack.c.h.b16 %v2343
    %v2378 = vunpack.c.l.b16 %v2344
    %v2379 = vunpack.c.h.b16 %v2344
    %v2380 = vunpack.c.l.b16 %v2345
    %v2381 = vunpack.c.h.b16 %v2345
    %v2382 = vunpack.c.l.b16 %v2346
    %v2383 = vunpack.c.h.b16 %v2346
    %v2384 = vunpack.c.l.b16 %v2347
    %v2385 = vunpack.c.h.b16 %v2347
    %v2386 = vunpack.c.l.b16 %v2348
    %v2387 = vunpack.c.h.b16 %v2348
    %v2388 = vunpack.c.l.b16 %v2349
    %v2389 = vunpack.c.h.b16 %v2349
    %v2390 = vunpack.c.l.b16 %v2350
    %v2391 = vunpack.c.h.b16 %v2350
    %v2392 = vunpack.c.l.b16 %v2351
    %v2393 = vunpack.c.h.b16 %v2351
    %v2394 = vunpack.c.l.b16 %v2352
    %v2395 = vunpack.c.h.b16 %v2352
    %v2396 = vunpack.c.l.b16 %v2353
    %v2397 = vunpack.c.h.b16 %v2353
    %v2398 = vunpack.c.l.b16 %v2354
    %v2399 = vunpack.c.h.b16 %v2354
    %v2400 = vunpack.c.l.b16 %v2355
    %v2401 = vunpack.c.h.b16 %v2355
    %v2402 = vunpack.c.l.b16 %v2356
    %v2403 = vunpack.c.h.b16 %v2356
    %v2404 = vunpack.c.l.b16 %v2357
    %v2405 = vunpack.c.h.b16 %v2357
    %v2406 = vpack.c.b16 %v2376, %v2374
    %v2407 = vpack.c.b16 %v2377, %v2375
    %v2408 = vpack.c.b16 %v2380, %v2378
    %v2409 = vpack.c.b16 %v2381, %v2379
    %v2410 = vpack.c.b16 %v2384, %v2382
    %v2411 = vpack.c.b16 %v2385, %v2383
    %v2412 = vpack.c.b16 %v2388, %v2386
    %v2413 = vpack.c.b16 %v2389, %v2387
    %v2414 = vpack.c.b16 %v2392, %v2390
    %v2415 = vpack.c.b16 %v2393, %v2391
    %v2416 = vpack.c.b16 %v2396, %v2394
    %v2417 = vpack.c.b16 %v2397, %v2395
    %v2418 = vpack.c.b16 %v2400, %v2398
    %v2419 = vpack.c.b16 %v2401, %v2399
    %v2420 = vpack.c.b16 %v2404, %v2402
    %v2421 = vpack.c.b16 %v2405, %v2403
    %2438 = vmatprep.subr.bf16.mxu0 %v2407
    %2439 = vmatpush1.bf16.msra.mxu0 %v2406
    %2440 = vmatprep.subr.bf16.mxu0 %v2409
    %2441 = vmatpush1.bf16.msra.mxu0 %v2408
    %2442 = vmatprep.subr.bf16.mxu0 %v2411
    %2443 = vmatpush1.bf16.msra.mxu0 %v2410
    %2444 = vmatprep.subr.bf16.mxu0 %v2413
    %2445 = vmatpush1.bf16.msra.mxu0 %v2412
    %2446 = vmatprep.subr.bf16.mxu0 %v2415
    %2447 = vmatpush1.bf16.msra.mxu0 %v2414
    %2448 = vmatprep.subr.bf16.mxu0 %v2417
    %2449 = vmatpush1.bf16.msra.mxu0 %v2416
    %2450 = vmatprep.subr.bf16.mxu0 %v2419
    %2451 = vmatpush1.bf16.msra.mxu0 %v2418
    %2452 = vmatprep.subr.bf16.mxu0 %v2421
    %2453 = vmatpush1.bf16.msra.mxu0 %v2420
    %2454 = vmatprep.subr.bf16.mxu0 0
    %2455 = vmatpush1.bf16.msra.mxu0 0
    %2456 = vmatprep.subr.bf16.mxu0 0
    %2457 = vmatpush1.bf16.msra.mxu0 0
    %2458 = vmatprep.subr.bf16.mxu0 0
    %2459 = vmatpush1.bf16.msra.mxu0 0
    %2460 = vmatprep.subr.bf16.mxu0 0
    %2461 = vmatpush1.bf16.msra.mxu0 0
    %2462 = vmatprep.subr.bf16.mxu0 0
    %2463 = vmatpush1.bf16.msra.mxu0 0
    %2464 = vmatprep.subr.bf16.mxu0 0
    %2465 = vmatpush1.bf16.msra.mxu0 0
    %2466 = vmatprep.subr.bf16.mxu0 0
    %2467 = vmatpush1.bf16.msra.mxu0 0
    %2468 = vmatprep.subr.bf16.mxu0 0
    %2469 = vmatpush1.bf16.msra.mxu0 0
    %2470 = vmatprep.mubr.bf16.mxu0 0
    %2471 = vmatmul.mubr.bf16.gmra.mrb[0].mxu0 %v2057
    %v2472 = vpop.f32.mrb[0].mxu0
    %v2473 = vadd.f32 0.0, %v2472
    %v2474 = vpop.f32.mrb[0].mxu0
    %v2475 = vadd.f32 0.0, %v2474
    %v2476 = vpop.f32.mrb[0].mxu0
    %v2477 = vadd.f32 0.0, %v2476
    %v2478 = vpop.f32.mrb[0].mxu0
    %v2479 = vadd.f32 0.0, %v2478
    %2480 = vmatprep.mubr.bf16.mxu0 0
    %2481 = vmatmul.mubr.bf16.gmra.mrb[0].mxu0 %v2058
    %v2482 = vpop.f32.mrb[0].mxu0
    %v2483 = vadd.f32 0.0, %v2482
    %v2484 = vpop.f32.mrb[0].mxu0
    %v2485 = vadd.f32 0.0, %v2484
    %v2486 = vpop.f32.mrb[0].mxu0
    %v2487 = vadd.f32 0.0, %v2486
    %v2488 = vpop.f32.mrb[0].mxu0
    %v2489 = vadd.f32 0.0, %v2488
    %2490 = vmatprep.mubr.bf16.mxu0 0
    %2491 = vmatmul.mubr.bf16.gmra.mrb[0].mxu0 %v2059
    %v2492 = vpop.f32.mrb[0].mxu0
    %v2493 = vadd.f32 0.0, %v2492
    %v2494 = vpop.f32.mrb[0].mxu0
    %v2495 = vadd.f32 0.0, %v2494
    %v2496 = vpop.f32.mrb[0].mxu0
    %v2497 = vadd.f32 0.0, %v2496
    %v2498 = vpop.f32.mrb[0].mxu0
    %v2499 = vadd.f32 0.0, %v2498
    %2500 = vmatprep.mubr.bf16.mxu0 0
    %2501 = vmatmul.mubr.bf16.gmra.mrb[0].mxu0 %v2060
    %v2502 = vpop.f32.mrb[0].mxu0
    %v2503 = vadd.f32 0.0, %v2502
    %v2504 = vpop.f32.mrb[0].mxu0
    %v2505 = vadd.f32 0.0, %v2504
    %v2506 = vpop.f32.mrb[0].mxu0
    %v2507 = vadd.f32 0.0, %v2506
    %v2508 = vpop.f32.mrb[0].mxu0
    %v2509 = vadd.f32 0.0, %v2508
    %2510 = vmatprep.mubr.bf16.mxu0 0
    %2511 = vmatmul.mubr.bf16.gmra.mrb[0].mxu0 %v2061
    %v2512 = vpop.f32.mrb[0].mxu0
    %v2513 = vadd.f32 0.0, %v2512
    %v2514 = vpop.f32.mrb[0].mxu0
    %v2515 = vadd.f32 0.0, %v2514
    %v2516 = vpop.f32.mrb[0].mxu0
    %v2517 = vadd.f32 0.0, %v2516
    %v2518 = vpop.f32.mrb[0].mxu0
    %v2519 = vadd.f32 0.0, %v2518
    %2520 = vmatprep.mubr.bf16.mxu0 0
    %2521 = vmatmul.mubr.bf16.gmra.mrb[0].mxu0 %v2062
    %v2522 = vpop.f32.mrb[0].mxu0
    %v2523 = vadd.f32 0.0, %v2522
    %v2524 = vpop.f32.mrb[0].mxu0
    %v2525 = vadd.f32 0.0, %v2524
    %v2526 = vpop.f32.mrb[0].mxu0
    %v2527 = vadd.f32 0.0, %v2526
    %v2528 = vpop.f32.mrb[0].mxu0
    %v2529 = vadd.f32 0.0, %v2528
    %2530 = vmatprep.mubr.bf16.mxu0 0
    %2531 = vmatmul.mubr.bf16.gmra.mrb[0].mxu0 %v2063
    %v2532 = vpop.f32.mrb[0].mxu0
    %v2533 = vadd.f32 0.0, %v2532
    %v2534 = vpop.f32.mrb[0].mxu0
    %v2535 = vadd.f32 0.0, %v2534
    %v2536 = vpop.f32.mrb[0].mxu0
    %v2537 = vadd.f32 0.0, %v2536
    %v2538 = vpop.f32.mrb[0].mxu0
    %v2539 = vadd.f32 0.0, %v2538
    %2540 = vmatprep.mubr.bf16.mxu0 0
    %2541 = vmatmul.mubr.bf16.gmra.mrb[0].mxu0 %v2064
    %v2542 = vpop.f32.mrb[0].mxu0
    %v2543 = vadd.f32 0.0, %v2542
    %v2544 = vpop.f32.mrb[0].mxu0
    %v2545 = vadd.f32 0.0, %v2544
    %v2546 = vpop.f32.mrb[0].mxu0
    %v2547 = vadd.f32 0.0, %v2546
    %v2548 = vpop.f32.mrb[0].mxu0
    %v2549 = vadd.f32 0.0, %v2548
    %2550 = vmatprep.mubr.bf16.mxu0 0
    %2551 = vmatmul.mubr.bf16.gmra.mrb[0].mxu0 %v2065
    %v2552 = vpop.f32.mrb[0].mxu0
    %v2553 = vadd.f32 0.0, %v2552
    %v2554 = vpop.f32.mrb[0].mxu0
    %v2555 = vadd.f32 0.0, %v2554
    %v2556 = vpop.f32.mrb[0].mxu0
    %v2557 = vadd.f32 0.0, %v2556
    %v2558 = vpop.f32.mrb[0].mxu0
    %v2559 = vadd.f32 0.0, %v2558
    %2560 = vmatprep.mubr.bf16.mxu0 0
    %2561 = vmatmul.mubr.bf16.gmra.mrb[0].mxu0 %v2066
    %v2562 = vpop.f32.mrb[0].mxu0
    %v2563 = vadd.f32 0.0, %v2562
    %v2564 = vpop.f32.mrb[0].mxu0
    %v2565 = vadd.f32 0.0, %v2564
    %v2566 = vpop.f32.mrb[0].mxu0
    %v2567 = vadd.f32 0.0, %v2566
    %v2568 = vpop.f32.mrb[0].mxu0
    %v2569 = vadd.f32 0.0, %v2568
    %2570 = vmatprep.mubr.bf16.mxu0 0
    %2571 = vmatmul.mubr.bf16.gmra.mrb[0].mxu0 %v2067
    %v2572 = vpop.f32.mrb[0].mxu0
    %v2573 = vadd.f32 0.0, %v2572
    %v2574 = vpop.f32.mrb[0].mxu0
    %v2575 = vadd.f32 0.0, %v2574
    %v2576 = vpop.f32.mrb[0].mxu0
    %v2577 = vpop.f32.mrb[0].mxu0
    %2578 = vdwg.mxu0
    %2579 = vst [vmem:[#allocation4 + $0x10] sm:$0xff] %v2473
    %2580 = vst [vmem:[#allocation4 + $0x18] sm:$0xff] %v2475
    %2581 = vst [vmem:[#allocation4 + $0x78] sm:$0xff] %v2477
    %2582 = vst [vmem:[#allocation4 + $0x80] sm:$0xff] %v2479
    %2583 = vst [vmem:[#allocation4 + $0xe0] sm:$0xff] %v2483
    %2584 = vst [vmem:[#allocation4 + $0xe8] sm:$0xff] %v2485
    %2585 = vst [vmem:[#allocation4 + $0x148] sm:$0xff] %v2487
    %2586 = vst [vmem:[#allocation4 + $0x150] sm:$0xff] %v2489
    %2587 = vst [vmem:[#allocation4 + $0x1b0] sm:$0xff] %v2493
    %2588 = vst [vmem:[#allocation4 + $0x1b8] sm:$0xff] %v2495
    %2589 = vst [vmem:[#allocation4 + $0x218] sm:$0xff] %v2497
    %2590 = vst [vmem:[#allocation4 + $0x220] sm:$0xff] %v2499
    %2591 = vst [vmem:[#allocation4 + $0x280] sm:$0xff] %v2503
    %2592 = vst [vmem:[#allocation4 + $0x288] sm:$0xff] %v2505
    %2593 = vst [vmem:[#allocation4 + $0x2e8] sm:$0xff] %v2507
    %2594 = vst [vmem:[#allocation4 + $0x2f0] sm:$0xff] %v2509
    %2595 = vst [vmem:[#allocation4 + $0x350] sm:$0xff] %v2513
    %2596 = vst [vmem:[#allocation4 + $0x358] sm:$0xff] %v2515
    %2597 = vst [vmem:[#allocation4 + $0x3b8] sm:$0xff] %v2517
    %2598 = vst [vmem:[#allocation4 + $0x3c0] sm:$0xff] %v2519
    %2599 = vst [vmem:[#allocation4 + $0x420] sm:$0xff] %v2523
    %2600 = vst [vmem:[#allocation4 + $0x428] sm:$0xff] %v2525
    %2601 = vst [vmem:[#allocation4 + $0x488] sm:$0xff] %v2527
    %2602 = vst [vmem:[#allocation4 + $0x490] sm:$0xff] %v2529
    %2603 = vst [vmem:[#allocation4 + $0x4f0] sm:$0xff] %v2533
    %2604 = vst [vmem:[#allocation4 + $0x4f8] sm:$0xff] %v2535
    %2605 = vst [vmem:[#allocation4 + $0x558] sm:$0xff] %v2537
    %2606 = vst [vmem:[#allocation4 + $0x560] sm:$0xff] %v2539
    %2607 = vst [vmem:[#allocation4 + $0x5c0] sm:$0xff] %v2543
    %2608 = vst [vmem:[#allocation4 + $0x5c8] sm:$0xff] %v2545
    %2609 = vst [vmem:[#allocation4 + $0x628] sm:$0xff] %v2547
    %2610 = vst [vmem:[#allocation4 + $0x630] sm:$0xff] %v2549
    %2611 = vst [vmem:[#allocation4 + $0x690] sm:$0xff] %v2553
    %2612 = vst [vmem:[#allocation4 + $0x698] sm:$0xff] %v2555
    %2613 = vst [vmem:[#allocation4 + $0x6f8] sm:$0xff] %v2557
    %2614 = vst [vmem:[#allocation4 + $0x700] sm:$0xff] %v2559
    %2615 = vst [vmem:[#allocation4 + $0x760] sm:$0xff] %v2563
    %2616 = vst [vmem:[#allocation4 + $0x768] sm:$0xff] %v2565
    %2617 = vst [vmem:[#allocation4 + $0x7c8] sm:$0xff] %v2567
    %2618 = vst [vmem:[#allocation4 + $0x7d0] sm:$0xff] %v2569
    %2619 = vst [vmem:[#allocation4 + $0x830] sm:$0xff] %v2573
    %2620 = vst [vmem:[#allocation4 + $0x838] sm:$0xff] %v2575
    %v2621 = vld [vmem:[%s5 + $0x10] sm:$0xff]
    %v2622 = vld [vmem:[%s5 + $0x44] sm:$0xff]
    %v2623 = vld [vmem:[%s5 + $0x78] sm:$0xff]
    %v2624 = vld [vmem:[%s5 + $0xac] sm:$0xff]
    %v2625 = vld [vmem:[%s5 + $0xe0] sm:$0xff]
    %v2626 = vld [vmem:[%s5 + $0x114] sm:$0xff]
    %v2627 = vld [vmem:[%s5 + $0x148] sm:$0xff]
    %v2628 = vld [vmem:[%s5 + $0x17c] sm:$0xff]
    %v2629 = vld [vmem:[%s5 + $0x1b0] sm:$0xff]
    %v2630 = vld [vmem:[%s5 + $0x1e4] sm:$0xff]
    %v2631 = vld [vmem:[%s5 + $0x218] sm:$0xff]
    %v2632 = vld [vmem:[%s5 + $0x24c] sm:$0xff]
    %v2633 = vld [vmem:[%s5 + $0x280] sm:$0xff]
    %v2634 = vld [vmem:[%s5 + $0x2b4] sm:$0xff]
    %v2635 = vld [vmem:[%s5 + $0x2e8] sm:$0xff]
    %v2636 = vld [vmem:[%s5 + $0x31c] sm:$0xff]
    %v2653 = vunpack.c.l.b16 %v2621
    %v2654 = vunpack.c.h.b16 %v2621
    %v2655 = vunpack.c.l.b16 %v2622
    %v2656 = vunpack.c.h.b16 %v2622
    %v2657 = vunpack.c.l.b16 %v2623
    %v2658 = vunpack.c.h.b16 %v2623
    %v2659 = vunpack.c.l.b16 %v2624
    %v2660 = vunpack.c.h.b16 %v2624
    %v2661 = vunpack.c.l.b16 %v2625
    %v2662 = vunpack.c.h.b16 %v2625
    %v2663 = vunpack.c.l.b16 %v2626
    %v2664 = vunpack.c.h.b16 %v2626
    %v2665 = vunpack.c.l.b16 %v2627
    %v2666 = vunpack.c.h.b16 %v2627
    %v2667 = vunpack.c.l.b16 %v2628
    %v2668 = vunpack.c.h.b16 %v2628
    %v2669 = vunpack.c.l.b16 %v2629
    %v2670 = vunpack.c.h.b16 %v2629
    %v2671 = vunpack.c.l.b16 %v2630
    %v2672 = vunpack.c.h.b16 %v2630
    %v2673 = vunpack.c.l.b16 %v2631
    %v2674 = vunpack.c.h.b16 %v2631
    %v2675 = vunpack.c.l.b16 %v2632
    %v2676 = vunpack.c.h.b16 %v2632
    %v2677 = vunpack.c.l.b16 %v2633
    %v2678 = vunpack.c.h.b16 %v2633
    %v2679 = vunpack.c.l.b16 %v2634
    %v2680 = vunpack.c.h.b16 %v2634
    %v2681 = vunpack.c.l.b16 %v2635
    %v2682 = vunpack.c.h.b16 %v2635
    %v2683 = vunpack.c.l.b16 %v2636
    %v2684 = vunpack.c.h.b16 %v2636
    %v2685 = vpack.c.b16 %v2655, %v2653
    %v2686 = vpack.c.b16 %v2656, %v2654
    %v2687 = vpack.c.b16 %v2659, %v2657
    %v2688 = vpack.c.b16 %v2660, %v2658
    %v2689 = vpack.c.b16 %v2663, %v2661
    %v2690 = vpack.c.b16 %v2664, %v2662
    %v2691 = vpack.c.b16 %v2667, %v2665
    %v2692 = vpack.c.b16 %v2668, %v2666
    %v2693 = vpack.c.b16 %v2671, %v2669
    %v2694 = vpack.c.b16 %v2672, %v2670
    %v2695 = vpack.c.b16 %v2675, %v2673
    %v2696 = vpack.c.b16 %v2676, %v2674
    %v2697 = vpack.c.b16 %v2679, %v2677
    %v2698 = vpack.c.b16 %v2680, %v2678
    %v2699 = vpack.c.b16 %v2683, %v2681
    %v2700 = vpack.c.b16 %v2684, %v2682
    %2717 = vmatprep.subr.bf16.mxu0 %v2686
    %2718 = vmatpush1.bf16.msra.mxu0 %v2685
    %2719 = vmatprep.subr.bf16.mxu0 %v2688
    %2720 = vmatpush1.bf16.msra.mxu0 %v2687
    %2721 = vmatprep.subr.bf16.mxu0 %v2690
    %2722 = vmatpush1.bf16.msra.mxu0 %v2689
    %2723 = vmatprep.subr.bf16.mxu0 %v2692
    %2724 = vmatpush1.bf16.msra.mxu0 %v2691
    %2725 = vmatprep.subr.bf16.mxu0 %v2694
    %2726 = vmatpush1.bf16.msra.mxu0 %v2693
    %2727 = vmatprep.subr.bf16.mxu0 %v2696
    %2728 = vmatpush1.bf16.msra.mxu0 %v2695
    %2729 = vmatprep.subr.bf16.mxu0 %v2698
    %2730 = vmatpush1.bf16.msra.mxu0 %v2697
    %2731 = vmatprep.subr.bf16.mxu0 %v2700
    %2732 = vmatpush1.bf16.msra.mxu0 %v2699
    %2733 = vmatprep.subr.bf16.mxu0 0
    %2734 = vmatpush1.bf16.msra.mxu0 0
    %2735 = vmatprep.subr.bf16.mxu0 0
    %2736 = vmatpush1.bf16.msra.mxu0 0
    %2737 = vmatprep.subr.bf16.mxu0 0
    %2738 = vmatpush1.bf16.msra.mxu0 0
    %2739 = vmatprep.subr.bf16.mxu0 0
    %2740 = vmatpush1.bf16.msra.mxu0 0
    %2741 = vmatprep.subr.bf16.mxu0 0
    %2742 = vmatpush1.bf16.msra.mxu0 0
    %2743 = vmatprep.subr.bf16.mxu0 0
    %2744 = vmatpush1.bf16.msra.mxu0 0
    %2745 = vmatprep.subr.bf16.mxu0 0
    %2746 = vmatpush1.bf16.msra.mxu0 0
    %2747 = vmatprep.subr.bf16.mxu0 0
    %2748 = vmatpush1.bf16.msra.mxu0 0
    %2749 = vmatprep.mubr.bf16.mxu0 0
    %2750 = vmatmul.mubr.bf16.gmra.mrb[0].mxu0 %v2057
    %v2751 = vpop.f32.mrb[0].mxu0
    %v2752 = vadd.f32 0.0, %v2751
    %v2753 = vpop.f32.mrb[0].mxu0
    %v2754 = vadd.f32 0.0, %v2753
    %v2755 = vpop.f32.mrb[0].mxu0
    %v2756 = vadd.f32 0.0, %v2755
    %v2757 = vpop.f32.mrb[0].mxu0
    %v2758 = vadd.f32 0.0, %v2757
    %2759 = vmatprep.mubr.bf16.mxu0 0
    %2760 = vmatmul.mubr.bf16.gmra.mrb[0].mxu0 %v2058
    %v2761 = vpop.f32.mrb[0].mxu0
    %v2762 = vadd.f32 0.0, %v2761
    %v2763 = vpop.f32.mrb[0].mxu0
    %v2764 = vadd.f32 0.0, %v2763
    %v2765 = vpop.f32.mrb[0].mxu0
    %v2766 = vadd.f32 0.0, %v2765
    %v2767 = vpop.f32.mrb[0].mxu0
    %v2768 = vadd.f32 0.0, %v2767
    %2769 = vmatprep.mubr.bf16.mxu0 0
    %2770 = vmatmul.mubr.bf16.gmra.mrb[0].mxu0 %v2059
    %v2771 = vpop.f32.mrb[0].mxu0
    %v2772 = vadd.f32 0.0, %v2771
    %v2773 = vpop.f32.mrb[0].mxu0
    %v2774 = vadd.f32 0.0, %v2773
    %v2775 = vpop.f32.mrb[0].mxu0
    %v2776 = vadd.f32 0.0, %v2775
    %v2777 = vpop.f32.mrb[0].mxu0
    %v2778 = vadd.f32 0.0, %v2777
    %2779 = vmatprep.mubr.bf16.mxu0 0
    %2780 = vmatmul.mubr.bf16.gmra.mrb[0].mxu0 %v2060
    %v2781 = vpop.f32.mrb[0].mxu0
    %v2782 = vadd.f32 0.0, %v2781
    %v2783 = vpop.f32.mrb[0].mxu0
    %v2784 = vadd.f32 0.0, %v2783
    %v2785 = vpop.f32.mrb[0].mxu0
    %v2786 = vadd.f32 0.0, %v2785
    %v2787 = vpop.f32.mrb[0].mxu0
    %v2788 = vadd.f32 0.0, %v2787
    %2789 = vmatprep.mubr.bf16.mxu0 0
    %2790 = vmatmul.mubr.bf16.gmra.mrb[0].mxu0 %v2061
    %v2791 = vpop.f32.mrb[0].mxu0
    %v2792 = vadd.f32 0.0, %v2791
    %v2793 = vpop.f32.mrb[0].mxu0
    %v2794 = vadd.f32 0.0, %v2793
    %v2795 = vpop.f32.mrb[0].mxu0
    %v2796 = vadd.f32 0.0, %v2795
    %v2797 = vpop.f32.mrb[0].mxu0
    %v2798 = vadd.f32 0.0, %v2797
    %2799 = vmatprep.mubr.bf16.mxu0 0
    %2800 = vmatmul.mubr.bf16.gmra.mrb[0].mxu0 %v2062
    %v2801 = vpop.f32.mrb[0].mxu0
    %v2802 = vadd.f32 0.0, %v2801
    %v2803 = vpop.f32.mrb[0].mxu0
    %v2804 = vadd.f32 0.0, %v2803
    %v2805 = vpop.f32.mrb[0].mxu0
    %v2806 = vadd.f32 0.0, %v2805
    %v2807 = vpop.f32.mrb[0].mxu0
    %v2808 = vadd.f32 0.0, %v2807
    %2809 = vmatprep.mubr.bf16.mxu0 0
    %2810 = vmatmul.mubr.bf16.gmra.mrb[0].mxu0 %v2063
    %v2811 = vpop.f32.mrb[0].mxu0
    %v2812 = vadd.f32 0.0, %v2811
    %v2813 = vpop.f32.mrb[0].mxu0
    %v2814 = vadd.f32 0.0, %v2813
    %v2815 = vpop.f32.mrb[0].mxu0
    %v2816 = vadd.f32 0.0, %v2815
    %v2817 = vpop.f32.mrb[0].mxu0
    %v2818 = vadd.f32 0.0, %v2817
    %2819 = vmatprep.mubr.bf16.mxu0 0
    %2820 = vmatmul.mubr.bf16.gmra.mrb[0].mxu0 %v2064
    %v2821 = vpop.f32.mrb[0].mxu0
    %v2822 = vadd.f32 0.0, %v2821
    %v2823 = vpop.f32.mrb[0].mxu0
    %v2824 = vadd.f32 0.0, %v2823
    %v2825 = vpop.f32.mrb[0].mxu0
    %v2826 = vadd.f32 0.0, %v2825
    %v2827 = vpop.f32.mrb[0].mxu0
    %v2828 = vadd.f32 0.0, %v2827
    %2829 = vmatprep.mubr.bf16.mxu0 0
    %2830 = vmatmul.mubr.bf16.gmra.mrb[0].mxu0 %v2065
    %v2831 = vpop.f32.mrb[0].mxu0
    %v2832 = vadd.f32 0.0, %v2831
    %v2833 = vpop.f32.mrb[0].mxu0
    %v2834 = vadd.f32 0.0, %v2833
    %v2835 = vpop.f32.mrb[0].mxu0
    %v2836 = vadd.f32 0.0, %v2835
    %v2837 = vpop.f32.mrb[0].mxu0
    %v2838 = vadd.f32 0.0, %v2837
    %2839 = vmatprep.mubr.bf16.mxu0 0
    %2840 = vmatmul.mubr.bf16.gmra.mrb[0].mxu0 %v2066
    %v2841 = vpop.f32.mrb[0].mxu0
    %v2842 = vadd.f32 0.0, %v2841
    %v2843 = vpop.f32.mrb[0].mxu0
    %v2844 = vadd.f32 0.0, %v2843
    %v2845 = vpop.f32.mrb[0].mxu0
    %v2846 = vadd.f32 0.0, %v2845
    %v2847 = vpop.f32.mrb[0].mxu0
    %v2848 = vadd.f32 0.0, %v2847
    %2849 = vmatprep.mubr.bf16.mxu0 0
    %2850 = vmatmul.mubr.bf16.gmra.mrb[0].mxu0 %v2067
    %v2851 = vpop.f32.mrb[0].mxu0
    %v2852 = vadd.f32 0.0, %v2851
    %v2853 = vpop.f32.mrb[0].mxu0
    %v2854 = vadd.f32 0.0, %v2853
    %v2855 = vpop.f32.mrb[0].mxu0
    %v2856 = vpop.f32.mrb[0].mxu0
    %2857 = vdwg.mxu0
    %2858 = vst [vmem:[#allocation4 + $0x20] sm:$0xff] %v2752
    %2859 = vst [vmem:[#allocation4 + $0x28] sm:$0xff] %v2754
    %2860 = vst [vmem:[#allocation4 + $0x88] sm:$0xff] %v2756
    %2861 = vst [vmem:[#allocation4 + $0x90] sm:$0xff] %v2758
    %2862 = vst [vmem:[#allocation4 + $0xf0] sm:$0xff] %v2762
    %2863 = vst [vmem:[#allocation4 + $0xf8] sm:$0xff] %v2764
    %2864 = vst [vmem:[#allocation4 + $0x158] sm:$0xff] %v2766
    %2865 = vst [vmem:[#allocation4 + $0x160] sm:$0xff] %v2768
    %2866 = vst [vmem:[#allocation4 + $0x1c0] sm:$0xff] %v2772
    %2867 = vst [vmem:[#allocation4 + $0x1c8] sm:$0xff] %v2774
    %2868 = vst [vmem:[#allocation4 + $0x228] sm:$0xff] %v2776
    %2869 = vst [vmem:[#allocation4 + $0x230] sm:$0xff] %v2778
    %2870 = vst [vmem:[#allocation4 + $0x290] sm:$0xff] %v2782
    %2871 = vst [vmem:[#allocation4 + $0x298] sm:$0xff] %v2784
    %2872 = vst [vmem:[#allocation4 + $0x2f8] sm:$0xff] %v2786
    %2873 = vst [vmem:[#allocation4 + $0x300] sm:$0xff] %v2788
    %2874 = vst [vmem:[#allocation4 + $0x360] sm:$0xff] %v2792
    %2875 = vst [vmem:[#allocation4 + $0x368] sm:$0xff] %v2794
    %2876 = vst [vmem:[#allocation4 + $0x3c8] sm:$0xff] %v2796
    %2877 = vst [vmem:[#allocation4 + $0x3d0] sm:$0xff] %v2798
    %2878 = vst [vmem:[#allocation4 + $0x430] sm:$0xff] %v2802
    %2879 = vst [vmem:[#allocation4 + $0x438] sm:$0xff] %v2804
    %2880 = vst [vmem:[#allocation4 + $0x498] sm:$0xff] %v2806
    %2881 = vst [vmem:[#allocation4 + $0x4a0] sm:$0xff] %v2808
    %2882 = vst [vmem:[#allocation4 + $0x500] sm:$0xff] %v2812
    %2883 = vst [vmem:[#allocation4 + $0x508] sm:$0xff] %v2814
    %2884 = vst [vmem:[#allocation4 + $0x568] sm:$0xff] %v2816
    %2885 = vst [vmem:[#allocation4 + $0x570] sm:$0xff] %v2818
    %2886 = vst [vmem:[#allocation4 + $0x5d0] sm:$0xff] %v2822
    %2887 = vst [vmem:[#allocation4 + $0x5d8] sm:$0xff] %v2824
    %2888 = vst [vmem:[#allocation4 + $0x638] sm:$0xff] %v2826
    %2889 = vst [vmem:[#allocation4 + $0x640] sm:$0xff] %v2828
    %2890 = vst [vmem:[#allocation4 + $0x6a0] sm:$0xff] %v2832
    %2891 = vst [vmem:[#allocation4 + $0x6a8] sm:$0xff] %v2834
    %2892 = vst [vmem:[#allocation4 + $0x708] sm:$0xff] %v2836
    %2893 = vst [vmem:[#allocation4 + $0x710] sm:$0xff] %v2838
    %2894 = vst [vmem:[#allocation4 + $0x770] sm:$0xff] %v2842
    %2895 = vst [vmem:[#allocation4 + $0x778] sm:$0xff] %v2844
    %2896 = vst [vmem:[#allocation4 + $0x7d8] sm:$0xff] %v2846
    %2897 = vst [vmem:[#allocation4 + $0x7e0] sm:$0xff] %v2848
    %2898 = vst [vmem:[#allocation4 + $0x840] sm:$0xff] %v2852
    %2899 = vst [vmem:[#allocation4 + $0x848] sm:$0xff] %v2854
    %v2900 = vld [vmem:[%s5 + $0x18] sm:$0xff]
    %v2901 = vld [vmem:[%s5 + $0x4c] sm:$0xff]
    %v2902 = vld [vmem:[%s5 + $0x80] sm:$0xff]
    %v2903 = vld [vmem:[%s5 + $0xb4] sm:$0xff]
    %v2904 = vld [vmem:[%s5 + $0xe8] sm:$0xff]
    %v2905 = vld [vmem:[%s5 + $0x11c] sm:$0xff]
    %v2906 = vld [vmem:[%s5 + $0x150] sm:$0xff]
    %v2907 = vld [vmem:[%s5 + $0x184] sm:$0xff]
    %v2908 = vld [vmem:[%s5 + $0x1b8] sm:$0xff]
    %v2909 = vld [vmem:[%s5 + $0x1ec] sm:$0xff]
    %v2910 = vld [vmem:[%s5 + $0x220] sm:$0xff]
    %v2911 = vld [vmem:[%s5 + $0x254] sm:$0xff]
    %v2912 = vld [vmem:[%s5 + $0x288] sm:$0xff]
    %v2913 = vld [vmem:[%s5 + $0x2bc] sm:$0xff]
    %v2914 = vld [vmem:[%s5 + $0x2f0] sm:$0xff]
    %v2915 = vld [vmem:[%s5 + $0x324] sm:$0xff]
    %v2932 = vunpack.c.l.b16 %v2900
    %v2933 = vunpack.c.h.b16 %v2900
    %v2934 = vunpack.c.l.b16 %v2901
    %v2935 = vunpack.c.h.b16 %v2901
    %v2936 = vunpack.c.l.b16 %v2902
    %v2937 = vunpack.c.h.b16 %v2902
    %v2938 = vunpack.c.l.b16 %v2903
    %v2939 = vunpack.c.h.b16 %v2903
    %v2940 = vunpack.c.l.b16 %v2904
    %v2941 = vunpack.c.h.b16 %v2904
    %v2942 = vunpack.c.l.b16 %v2905
    %v2943 = vunpack.c.h.b16 %v2905
    %v2944 = vunpack.c.l.b16 %v2906
    %v2945 = vunpack.c.h.b16 %v2906
    %v2946 = vunpack.c.l.b16 %v2907
    %v2947 = vunpack.c.h.b16 %v2907
    %v2948 = vunpack.c.l.b16 %v2908
    %v2949 = vunpack.c.h.b16 %v2908
    %v2950 = vunpack.c.l.b16 %v2909
    %v2951 = vunpack.c.h.b16 %v2909
    %v2952 = vunpack.c.l.b16 %v2910
    %v2953 = vunpack.c.h.b16 %v2910
    %v2954 = vunpack.c.l.b16 %v2911
    %v2955 = vunpack.c.h.b16 %v2911
    %v2956 = vunpack.c.l.b16 %v2912
    %v2957 = vunpack.c.h.b16 %v2912
    %v2958 = vunpack.c.l.b16 %v2913
    %v2959 = vunpack.c.h.b16 %v2913
    %v2960 = vunpack.c.l.b16 %v2914
    %v2961 = vunpack.c.h.b16 %v2914
    %v2962 = vunpack.c.l.b16 %v2915
    %v2963 = vunpack.c.h.b16 %v2915
    %v2964 = vpack.c.b16 %v2934, %v2932
    %v2965 = vpack.c.b16 %v2935, %v2933
    %v2966 = vpack.c.b16 %v2938, %v2936
    %v2967 = vpack.c.b16 %v2939, %v2937
    %v2968 = vpack.c.b16 %v2942, %v2940
    %v2969 = vpack.c.b16 %v2943, %v2941
    %v2970 = vpack.c.b16 %v2946, %v2944
    %v2971 = vpack.c.b16 %v2947, %v2945
    %v2972 = vpack.c.b16 %v2950, %v2948
    %v2973 = vpack.c.b16 %v2951, %v2949
    %v2974 = vpack.c.b16 %v2954, %v2952
    %v2975 = vpack.c.b16 %v2955, %v2953
    %v2976 = vpack.c.b16 %v2958, %v2956
    %v2977 = vpack.c.b16 %v2959, %v2957
    %v2978 = vpack.c.b16 %v2962, %v2960
    %v2979 = vpack.c.b16 %v2963, %v2961
    %2996 = vmatprep.subr.bf16.mxu0 %v2965
    %2997 = vmatpush1.bf16.msra.mxu0 %v2964
    %2998 = vmatprep.subr.bf16.mxu0 %v2967
    %2999 = vmatpush1.bf16.msra.mxu0 %v2966
    %3000 = vmatprep.subr.bf16.mxu0 %v2969
    %3001 = vmatpush1.bf16.msra.mxu0 %v2968
    %3002 = vmatprep.subr.bf16.mxu0 %v2971
    %3003 = vmatpush1.bf16.msra.mxu0 %v2970
    %3004 = vmatprep.subr.bf16.mxu0 %v2973
    %3005 = vmatpush1.bf16.msra.mxu0 %v2972
    %3006 = vmatprep.subr.bf16.mxu0 %v2975
    %3007 = vmatpush1.bf16.msra.mxu0 %v2974
    %3008 = vmatprep.subr.bf16.mxu0 %v2977
    %3009 = vmatpush1.bf16.msra.mxu0 %v2976
    %3010 = vmatprep.subr.bf16.mxu0 %v2979
    %3011 = vmatpush1.bf16.msra.mxu0 %v2978
    %3012 = vmatprep.subr.bf16.mxu0 0
    %3013 = vmatpush1.bf16.msra.mxu0 0
    %3014 = vmatprep.subr.bf16.mxu0 0
    %3015 = vmatpush1.bf16.msra.mxu0 0
    %3016 = vmatprep.subr.bf16.mxu0 0
    %3017 = vmatpush1.bf16.msra.mxu0 0
    %3018 = vmatprep.subr.bf16.mxu0 0
    %3019 = vmatpush1.bf16.msra.mxu0 0
    %3020 = vmatprep.subr.bf16.mxu0 0
    %3021 = vmatpush1.bf16.msra.mxu0 0
    %3022 = vmatprep.subr.bf16.mxu0 0
    %3023 = vmatpush1.bf16.msra.mxu0 0
    %3024 = vmatprep.subr.bf16.mxu0 0
    %3025 = vmatpush1.bf16.msra.mxu0 0
    %3026 = vmatprep.subr.bf16.mxu0 0
    %3027 = vmatpush1.bf16.msra.mxu0 0
    %3028 = vmatprep.mubr.bf16.mxu0 0
    %3029 = vmatmul.mubr.bf16.gmra.mrb[0].mxu0 %v2057
    %v3030 = vpop.f32.mrb[0].mxu0
    %v3031 = vadd.f32 0.0, %v3030
    %v3032 = vpop.f32.mrb[0].mxu0
    %v3033 = vadd.f32 0.0, %v3032
    %v3034 = vpop.f32.mrb[0].mxu0
    %v3035 = vadd.f32 0.0, %v3034
    %v3036 = vpop.f32.mrb[0].mxu0
    %v3037 = vadd.f32 0.0, %v3036
    %3038 = vmatprep.mubr.bf16.mxu0 0
    %3039 = vmatmul.mubr.bf16.gmra.mrb[0].mxu0 %v2058
    %v3040 = vpop.f32.mrb[0].mxu0
    %v3041 = vadd.f32 0.0, %v3040
    %v3042 = vpop.f32.mrb[0].mxu0
    %v3043 = vadd.f32 0.0, %v3042
    %v3044 = vpop.f32.mrb[0].mxu0
    %v3045 = vadd.f32 0.0, %v3044
    %v3046 = vpop.f32.mrb[0].mxu0
    %v3047 = vadd.f32 0.0, %v3046
    %3048 = vmatprep.mubr.bf16.mxu0 0
    %3049 = vmatmul.mubr.bf16.gmra.mrb[0].mxu0 %v2059
    %v3050 = vpop.f32.mrb[0].mxu0
    %v3051 = vadd.f32 0.0, %v3050
    %v3052 = vpop.f32.mrb[0].mxu0
    %v3053 = vadd.f32 0.0, %v3052
    %v3054 = vpop.f32.mrb[0].mxu0
    %v3055 = vadd.f32 0.0, %v3054
    %v3056 = vpop.f32.mrb[0].mxu0
    %v3057 = vadd.f32 0.0, %v3056
    %3058 = vmatprep.mubr.bf16.mxu0 0
    %3059 = vmatmul.mubr.bf16.gmra.mrb[0].mxu0 %v2060
    %v3060 = vpop.f32.mrb[0].mxu0
    %v3061 = vadd.f32 0.0, %v3060
    %v3062 = vpop.f32.mrb[0].mxu0
    %v3063 = vadd.f32 0.0, %v3062
    %v3064 = vpop.f32.mrb[0].mxu0
    %v3065 = vadd.f32 0.0, %v3064
    %v3066 = vpop.f32.mrb[0].mxu0
    %v3067 = vadd.f32 0.0, %v3066
    %3068 = vmatprep.mubr.bf16.mxu0 0
    %3069 = vmatmul.mubr.bf16.gmra.mrb[0].mxu0 %v2061
    %v3070 = vpop.f32.mrb[0].mxu0
    %v3071 = vadd.f32 0.0, %v3070
    %v3072 = vpop.f32.mrb[0].mxu0
    %v3073 = vadd.f32 0.0, %v3072
    %v3074 = vpop.f32.mrb[0].mxu0
    %v3075 = vadd.f32 0.0, %v3074
    %v3076 = vpop.f32.mrb[0].mxu0
    %v3077 = vadd.f32 0.0, %v3076
    %3078 = vmatprep.mubr.bf16.mxu0 0
    %3079 = vmatmul.mubr.bf16.gmra.mrb[0].mxu0 %v2062
    %v3080 = vpop.f32.mrb[0].mxu0
    %v3081 = vadd.f32 0.0, %v3080
    %v3082 = vpop.f32.mrb[0].mxu0
    %v3083 = vadd.f32 0.0, %v3082
    %v3084 = vpop.f32.mrb[0].mxu0
    %v3085 = vadd.f32 0.0, %v3084
    %v3086 = vpop.f32.mrb[0].mxu0
    %v3087 = vadd.f32 0.0, %v3086
    %3088 = vmatprep.mubr.bf16.mxu0 0
    %3089 = vmatmul.mubr.bf16.gmra.mrb[0].mxu0 %v2063
    %v3090 = vpop.f32.mrb[0].mxu0
    %v3091 = vadd.f32 0.0, %v3090
    %v3092 = vpop.f32.mrb[0].mxu0
    %v3093 = vadd.f32 0.0, %v3092
    %v3094 = vpop.f32.mrb[0].mxu0
    %v3095 = vadd.f32 0.0, %v3094
    %v3096 = vpop.f32.mrb[0].mxu0
    %v3097 = vadd.f32 0.0, %v3096
    %3098 = vmatprep.mubr.bf16.mxu0 0
    %3099 = vmatmul.mubr.bf16.gmra.mrb[0].mxu0 %v2064
    %v3100 = vpop.f32.mrb[0].mxu0
    %v3101 = vadd.f32 0.0, %v3100
    %v3102 = vpop.f32.mrb[0].mxu0
    %v3103 = vadd.f32 0.0, %v3102
    %v3104 = vpop.f32.mrb[0].mxu0
    %v3105 = vadd.f32 0.0, %v3104
    %v3106 = vpop.f32.mrb[0].mxu0
    %v3107 = vadd.f32 0.0, %v3106
    %3108 = vmatprep.mubr.bf16.mxu0 0
    %3109 = vmatmul.mubr.bf16.gmra.mrb[0].mxu0 %v2065
    %v3110 = vpop.f32.mrb[0].mxu0
    %v3111 = vadd.f32 0.0, %v3110
    %v3112 = vpop.f32.mrb[0].mxu0
    %v3113 = vadd.f32 0.0, %v3112
    %v3114 = vpop.f32.mrb[0].mxu0
    %v3115 = vadd.f32 0.0, %v3114
    %v3116 = vpop.f32.mrb[0].mxu0
    %v3117 = vadd.f32 0.0, %v3116
    %3118 = vmatprep.mubr.bf16.mxu0 0
    %3119 = vmatmul.mubr.bf16.gmra.mrb[0].mxu0 %v2066
    %v3120 = vpop.f32.mrb[0].mxu0
    %v3121 = vadd.f32 0.0, %v3120
    %v3122 = vpop.f32.mrb[0].mxu0
    %v3123 = vadd.f32 0.0, %v3122
    %v3124 = vpop.f32.mrb[0].mxu0
    %v3125 = vadd.f32 0.0, %v3124
    %v3126 = vpop.f32.mrb[0].mxu0
    %v3127 = vadd.f32 0.0, %v3126
    %3128 = vmatprep.mubr.bf16.mxu0 0
    %3129 = vmatmul.mubr.bf16.gmra.mrb[0].mxu0 %v2067
    %v3130 = vpop.f32.mrb[0].mxu0
    %v3131 = vadd.f32 0.0, %v3130
    %v3132 = vpop.f32.mrb[0].mxu0
    %v3133 = vadd.f32 0.0, %v3132
    %v3134 = vpop.f32.mrb[0].mxu0
    %v3135 = vpop.f32.mrb[0].mxu0
    %3136 = vdwg.mxu0
    %3137 = vst [vmem:[#allocation4 + $0x30] sm:$0xff] %v3031
    %3138 = vst [vmem:[#allocation4 + $0x38] sm:$0xff] %v3033
    %3139 = vst [vmem:[#allocation4 + $0x98] sm:$0xff] %v3035
    %3140 = vst [vmem:[#allocation4 + $0xa0] sm:$0xff] %v3037
    %3141 = vst [vmem:[#allocation4 + $0x100] sm:$0xff] %v3041
    %3142 = vst [vmem:[#allocation4 + $0x108] sm:$0xff] %v3043
    %3143 = vst [vmem:[#allocation4 + $0x168] sm:$0xff] %v3045
    %3144 = vst [vmem:[#allocation4 + $0x170] sm:$0xff] %v3047
    %3145 = vst [vmem:[#allocation4 + $0x1d0] sm:$0xff] %v3051
    %3146 = vst [vmem:[#allocation4 + $0x1d8] sm:$0xff] %v3053
    %3147 = vst [vmem:[#allocation4 + $0x238] sm:$0xff] %v3055
    %3148 = vst [vmem:[#allocation4 + $0x240] sm:$0xff] %v3057
    %3149 = vst [vmem:[#allocation4 + $0x2a0] sm:$0xff] %v3061
    %3150 = vst [vmem:[#allocation4 + $0x2a8] sm:$0xff] %v3063
    %3151 = vst [vmem:[#allocation4 + $0x308] sm:$0xff] %v3065
    %3152 = vst [vmem:[#allocation4 + $0x310] sm:$0xff] %v3067
    %3153 = vst [vmem:[#allocation4 + $0x370] sm:$0xff] %v3071
    %3154 = vst [vmem:[#allocation4 + $0x378] sm:$0xff] %v3073
    %3155 = vst [vmem:[#allocation4 + $0x3d8] sm:$0xff] %v3075
    %3156 = vst [vmem:[#allocation4 + $0x3e0] sm:$0xff] %v3077
    %3157 = vst [vmem:[#allocation4 + $0x440] sm:$0xff] %v3081
    %3158 = vst [vmem:[#allocation4 + $0x448] sm:$0xff] %v3083
    %3159 = vst [vmem:[#allocation4 + $0x4a8] sm:$0xff] %v3085
    %3160 = vst [vmem:[#allocation4 + $0x4b0] sm:$0xff] %v3087
    %3161 = vst [vmem:[#allocation4 + $0x510] sm:$0xff] %v3091
    %3162 = vst [vmem:[#allocation4 + $0x518] sm:$0xff] %v3093
    %3163 = vst [vmem:[#allocation4 + $0x578] sm:$0xff] %v3095
    %3164 = vst [vmem:[#allocation4 + $0x580] sm:$0xff] %v3097
    %3165 = vst [vmem:[#allocation4 + $0x5e0] sm:$0xff] %v3101
    %3166 = vst [vmem:[#allocation4 + $0x5e8] sm:$0xff] %v3103
    %3167 = vst [vmem:[#allocation4 + $0x648] sm:$0xff] %v3105
    %3168 = vst [vmem:[#allocation4 + $0x650] sm:$0xff] %v3107
    %3169 = vst [vmem:[#allocation4 + $0x6b0] sm:$0xff] %v3111
    %3170 = vst [vmem:[#allocation4 + $0x6b8] sm:$0xff] %v3113
    %3171 = vst [vmem:[#allocation4 + $0x718] sm:$0xff] %v3115
    %3172 = vst [vmem:[#allocation4 + $0x720] sm:$0xff] %v3117
    %3173 = vst [vmem:[#allocation4 + $0x780] sm:$0xff] %v3121
    %3174 = vst [vmem:[#allocation4 + $0x788] sm:$0xff] %v3123
    %3175 = vst [vmem:[#allocation4 + $0x7e8] sm:$0xff] %v3125
    %3176 = vst [vmem:[#allocation4 + $0x7f0] sm:$0xff] %v3127
    %3177 = vst [vmem:[#allocation4 + $0x850] sm:$0xff] %v3131
    %3178 = vst [vmem:[#allocation4 + $0x858] sm:$0xff] %v3133
    %v3179 = vld [vmem:[%s5 + $0x20] sm:$0xff]
    %v3180 = vld [vmem:[%s5 + $0x54] sm:$0xff]
    %v3181 = vld [vmem:[%s5 + $0x88] sm:$0xff]
    %v3182 = vld [vmem:[%s5 + $0xbc] sm:$0xff]
    %v3183 = vld [vmem:[%s5 + $0xf0] sm:$0xff]
    %v3184 = vld [vmem:[%s5 + $0x124] sm:$0xff]
    %v3185 = vld [vmem:[%s5 + $0x158] sm:$0xff]
    %v3186 = vld [vmem:[%s5 + $0x18c] sm:$0xff]
    %v3187 = vld [vmem:[%s5 + $0x1c0] sm:$0xff]
    %v3188 = vld [vmem:[%s5 + $0x1f4] sm:$0xff]
    %v3189 = vld [vmem:[%s5 + $0x228] sm:$0xff]
    %v3190 = vld [vmem:[%s5 + $0x25c] sm:$0xff]
    %v3191 = vld [vmem:[%s5 + $0x290] sm:$0xff]
    %v3192 = vld [vmem:[%s5 + $0x2c4] sm:$0xff]
    %v3193 = vld [vmem:[%s5 + $0x2f8] sm:$0xff]
    %v3194 = vld [vmem:[%s5 + $0x32c] sm:$0xff]
    %v3211 = vunpack.c.l.b16 %v3179
    %v3212 = vunpack.c.h.b16 %v3179
    %v3213 = vunpack.c.l.b16 %v3180
    %v3214 = vunpack.c.h.b16 %v3180
    %v3215 = vunpack.c.l.b16 %v3181
    %v3216 = vunpack.c.h.b16 %v3181
    %v3217 = vunpack.c.l.b16 %v3182
    %v3218 = vunpack.c.h.b16 %v3182
    %v3219 = vunpack.c.l.b16 %v3183
    %v3220 = vunpack.c.h.b16 %v3183
    %v3221 = vunpack.c.l.b16 %v3184
    %v3222 = vunpack.c.h.b16 %v3184
    %v3223 = vunpack.c.l.b16 %v3185
    %v3224 = vunpack.c.h.b16 %v3185
    %v3225 = vunpack.c.l.b16 %v3186
    %v3226 = vunpack.c.h.b16 %v3186
    %v3227 = vunpack.c.l.b16 %v3187
    %v3228 = vunpack.c.h.b16 %v3187
    %v3229 = vunpack.c.l.b16 %v3188
    %v3230 = vunpack.c.h.b16 %v3188
    %v3231 = vunpack.c.l.b16 %v3189
    %v3232 = vunpack.c.h.b16 %v3189
    %v3233 = vunpack.c.l.b16 %v3190
    %v3234 = vunpack.c.h.b16 %v3190
    %v3235 = vunpack.c.l.b16 %v3191
    %v3236 = vunpack.c.h.b16 %v3191
    %v3237 = vunpack.c.l.b16 %v3192
    %v3238 = vunpack.c.h.b16 %v3192
    %v3239 = vunpack.c.l.b16 %v3193
    %v3240 = vunpack.c.h.b16 %v3193
    %v3241 = vunpack.c.l.b16 %v3194
    %v3242 = vunpack.c.h.b16 %v3194
    %v3243 = vpack.c.b16 %v3213, %v3211
    %v3244 = vpack.c.b16 %v3214, %v3212
    %v3245 = vpack.c.b16 %v3217, %v3215
    %v3246 = vpack.c.b16 %v3218, %v3216
    %v3247 = vpack.c.b16 %v3221, %v3219
    %v3248 = vpack.c.b16 %v3222, %v3220
    %v3249 = vpack.c.b16 %v3225, %v3223
    %v3250 = vpack.c.b16 %v3226, %v3224
    %v3251 = vpack.c.b16 %v3229, %v3227
    %v3252 = vpack.c.b16 %v3230, %v3228
    %v3253 = vpack.c.b16 %v3233, %v3231
    %v3254 = vpack.c.b16 %v3234, %v3232
    %v3255 = vpack.c.b16 %v3237, %v3235
    %v3256 = vpack.c.b16 %v3238, %v3236
    %v3257 = vpack.c.b16 %v3241, %v3239
    %v3258 = vpack.c.b16 %v3242, %v3240
    %3275 = vmatprep.subr.bf16.mxu0 %v3244
    %3276 = vmatpush1.bf16.msra.mxu0 %v3243
    %3277 = vmatprep.subr.bf16.mxu0 %v3246
    %3278 = vmatpush1.bf16.msra.mxu0 %v3245
    %3279 = vmatprep.subr.bf16.mxu0 %v3248
    %3280 = vmatpush1.bf16.msra.mxu0 %v3247
    %3281 = vmatprep.subr.bf16.mxu0 %v3250
    %3282 = vmatpush1.bf16.msra.mxu0 %v3249
    %3283 = vmatprep.subr.bf16.mxu0 %v3252
    %3284 = vmatpush1.bf16.msra.mxu0 %v3251
    %3285 = vmatprep.subr.bf16.mxu0 %v3254
    %3286 = vmatpush1.bf16.msra.mxu0 %v3253
    %3287 = vmatprep.subr.bf16.mxu0 %v3256
    %3288 = vmatpush1.bf16.msra.mxu0 %v3255
    %3289 = vmatprep.subr.bf16.mxu0 %v3258
    %3290 = vmatpush1.bf16.msra.mxu0 %v3257
    %3291 = vmatprep.subr.bf16.mxu0 0
    %3292 = vmatpush1.bf16.msra.mxu0 0
    %3293 = vmatprep.subr.bf16.mxu0 0
    %3294 = vmatpush1.bf16.msra.mxu0 0
    %3295 = vmatprep.subr.bf16.mxu0 0
    %3296 = vmatpush1.bf16.msra.mxu0 0
    %3297 = vmatprep.subr.bf16.mxu0 0
    %3298 = vmatpush1.bf16.msra.mxu0 0
    %3299 = vmatprep.subr.bf16.mxu0 0
    %3300 = vmatpush1.bf16.msra.mxu0 0
    %3301 = vmatprep.subr.bf16.mxu0 0
    %3302 = vmatpush1.bf16.msra.mxu0 0
    %3303 = vmatprep.subr.bf16.mxu0 0
    %3304 = vmatpush1.bf16.msra.mxu0 0
    %3305 = vmatprep.subr.bf16.mxu0 0
    %3306 = vmatpush1.bf16.msra.mxu0 0
    %3307 = vmatprep.mubr.bf16.mxu0 0
    %3308 = vmatmul.mubr.bf16.gmra.mrb[0].mxu0 %v2057
    %v3309 = vpop.f32.mrb[0].mxu0
    %v3310 = vadd.f32 0.0, %v3309
    %v3311 = vpop.f32.mrb[0].mxu0
    %v3312 = vadd.f32 0.0, %v3311
    %v3313 = vpop.f32.mrb[0].mxu0
    %v3314 = vadd.f32 0.0, %v3313
    %v3315 = vpop.f32.mrb[0].mxu0
    %v3316 = vadd.f32 0.0, %v3315
    %3317 = vmatprep.mubr.bf16.mxu0 0
    %3318 = vmatmul.mubr.bf16.gmra.mrb[0].mxu0 %v2058
    %v3319 = vpop.f32.mrb[0].mxu0
    %v3320 = vadd.f32 0.0, %v3319
    %v3321 = vpop.f32.mrb[0].mxu0
    %v3322 = vadd.f32 0.0, %v3321
    %v3323 = vpop.f32.mrb[0].mxu0
    %v3324 = vadd.f32 0.0, %v3323
    %v3325 = vpop.f32.mrb[0].mxu0
    %v3326 = vadd.f32 0.0, %v3325
    %3327 = vmatprep.mubr.bf16.mxu0 0
    %3328 = vmatmul.mubr.bf16.gmra.mrb[0].mxu0 %v2059
    %v3329 = vpop.f32.mrb[0].mxu0
    %v3330 = vadd.f32 0.0, %v3329
    %v3331 = vpop.f32.mrb[0].mxu0
    %v3332 = vadd.f32 0.0, %v3331
    %v3333 = vpop.f32.mrb[0].mxu0
    %v3334 = vadd.f32 0.0, %v3333
    %v3335 = vpop.f32.mrb[0].mxu0
    %v3336 = vadd.f32 0.0, %v3335
    %3337 = vmatprep.mubr.bf16.mxu0 0
    %3338 = vmatmul.mubr.bf16.gmra.mrb[0].mxu0 %v2060
    %v3339 = vpop.f32.mrb[0].mxu0
    %v3340 = vadd.f32 0.0, %v3339
    %v3341 = vpop.f32.mrb[0].mxu0
    %v3342 = vadd.f32 0.0, %v3341
    %v3343 = vpop.f32.mrb[0].mxu0
    %v3344 = vadd.f32 0.0, %v3343
    %v3345 = vpop.f32.mrb[0].mxu0
    %v3346 = vadd.f32 0.0, %v3345
    %3347 = vmatprep.mubr.bf16.mxu0 0
    %3348 = vmatmul.mubr.bf16.gmra.mrb[0].mxu0 %v2061
    %v3349 = vpop.f32.mrb[0].mxu0
    %v3350 = vadd.f32 0.0, %v3349
    %v3351 = vpop.f32.mrb[0].mxu0
    %v3352 = vadd.f32 0.0, %v3351
    %v3353 = vpop.f32.mrb[0].mxu0
    %v3354 = vadd.f32 0.0, %v3353
    %v3355 = vpop.f32.mrb[0].mxu0
    %v3356 = vadd.f32 0.0, %v3355
    %3357 = vmatprep.mubr.bf16.mxu0 0
    %3358 = vmatmul.mubr.bf16.gmra.mrb[0].mxu0 %v2062
    %v3359 = vpop.f32.mrb[0].mxu0
    %v3360 = vadd.f32 0.0, %v3359
    %v3361 = vpop.f32.mrb[0].mxu0
    %v3362 = vadd.f32 0.0, %v3361
    %v3363 = vpop.f32.mrb[0].mxu0
    %v3364 = vadd.f32 0.0, %v3363
    %v3365 = vpop.f32.mrb[0].mxu0
    %v3366 = vadd.f32 0.0, %v3365
    %3367 = vmatprep.mubr.bf16.mxu0 0
    %3368 = vmatmul.mubr.bf16.gmra.mrb[0].mxu0 %v2063
    %v3369 = vpop.f32.mrb[0].mxu0
    %v3370 = vadd.f32 0.0, %v3369
    %v3371 = vpop.f32.mrb[0].mxu0
    %v3372 = vadd.f32 0.0, %v3371
    %v3373 = vpop.f32.mrb[0].mxu0
    %v3374 = vadd.f32 0.0, %v3373
    %v3375 = vpop.f32.mrb[0].mxu0
    %v3376 = vadd.f32 0.0, %v3375
    %3377 = vmatprep.mubr.bf16.mxu0 0
    %3378 = vmatmul.mubr.bf16.gmra.mrb[0].mxu0 %v2064
    %v3379 = vpop.f32.mrb[0].mxu0
    %v3380 = vadd.f32 0.0, %v3379
    %v3381 = vpop.f32.mrb[0].mxu0
    %v3382 = vadd.f32 0.0, %v3381
    %v3383 = vpop.f32.mrb[0].mxu0
    %v3384 = vadd.f32 0.0, %v3383
    %v3385 = vpop.f32.mrb[0].mxu0
    %v3386 = vadd.f32 0.0, %v3385
    %3387 = vmatprep.mubr.bf16.mxu0 0
    %3388 = vmatmul.mubr.bf16.gmra.mrb[0].mxu0 %v2065
    %v3389 = vpop.f32.mrb[0].mxu0
    %v3390 = vadd.f32 0.0, %v3389
    %v3391 = vpop.f32.mrb[0].mxu0
    %v3392 = vadd.f32 0.0, %v3391
    %v3393 = vpop.f32.mrb[0].mxu0
    %v3394 = vadd.f32 0.0, %v3393
    %v3395 = vpop.f32.mrb[0].mxu0
    %v3396 = vadd.f32 0.0, %v3395
    %3397 = vmatprep.mubr.bf16.mxu0 0
    %3398 = vmatmul.mubr.bf16.gmra.mrb[0].mxu0 %v2066
    %v3399 = vpop.f32.mrb[0].mxu0
    %v3400 = vadd.f32 0.0, %v3399
    %v3401 = vpop.f32.mrb[0].mxu0
    %v3402 = vadd.f32 0.0, %v3401
    %v3403 = vpop.f32.mrb[0].mxu0
    %v3404 = vadd.f32 0.0, %v3403
    %v3405 = vpop.f32.mrb[0].mxu0
    %v3406 = vadd.f32 0.0, %v3405
    %3407 = vmatprep.mubr.bf16.mxu0 0
    %3408 = vmatmul.mubr.bf16.gmra.mrb[0].mxu0 %v2067
    %v3409 = vpop.f32.mrb[0].mxu0
    %v3410 = vadd.f32 0.0, %v3409
    %v3411 = vpop.f32.mrb[0].mxu0
    %v3412 = vadd.f32 0.0, %v3411
    %v3413 = vpop.f32.mrb[0].mxu0
    %v3414 = vpop.f32.mrb[0].mxu0
    %3415 = vdwg.mxu0
    %3416 = vst [vmem:[#allocation4 + $0x40] sm:$0xff] %v3310
    %3417 = vst [vmem:[#allocation4 + $0x48] sm:$0xff] %v3312
    %3418 = vst [vmem:[#allocation4 + $0xa8] sm:$0xff] %v3314
    %3419 = vst [vmem:[#allocation4 + $0xb0] sm:$0xff] %v3316
    %3420 = vst [vmem:[#allocation4 + $0x110] sm:$0xff] %v3320
    %3421 = vst [vmem:[#allocation4 + $0x118] sm:$0xff] %v3322
    %3422 = vst [vmem:[#allocation4 + $0x178] sm:$0xff] %v3324
    %3423 = vst [vmem:[#allocation4 + $0x180] sm:$0xff] %v3326
    %3424 = vst [vmem:[#allocation4 + $0x1e0] sm:$0xff] %v3330
    %3425 = vst [vmem:[#allocation4 + $0x1e8] sm:$0xff] %v3332
    %3426 = vst [vmem:[#allocation4 + $0x248] sm:$0xff] %v3334
    %3427 = vst [vmem:[#allocation4 + $0x250] sm:$0xff] %v3336
    %3428 = vst [vmem:[#allocation4 + $0x2b0] sm:$0xff] %v3340
    %3429 = vst [vmem:[#allocation4 + $0x2b8] sm:$0xff] %v3342
    %3430 = vst [vmem:[#allocation4 + $0x318] sm:$0xff] %v3344
    %3431 = vst [vmem:[#allocation4 + $0x320] sm:$0xff] %v3346
    %3432 = vst [vmem:[#allocation4 + $0x380] sm:$0xff] %v3350
    %3433 = vst [vmem:[#allocation4 + $0x388] sm:$0xff] %v3352
    %3434 = vst [vmem:[#allocation4 + $0x3e8] sm:$0xff] %v3354
    %3435 = vst [vmem:[#allocation4 + $0x3f0] sm:$0xff] %v3356
    %3436 = vst [vmem:[#allocation4 + $0x450] sm:$0xff] %v3360
    %3437 = vst [vmem:[#allocation4 + $0x458] sm:$0xff] %v3362
    %3438 = vst [vmem:[#allocation4 + $0x4b8] sm:$0xff] %v3364
    %3439 = vst [vmem:[#allocation4 + $0x4c0] sm:$0xff] %v3366
    %3440 = vst [vmem:[#allocation4 + $0x520] sm:$0xff] %v3370
    %3441 = vst [vmem:[#allocation4 + $0x528] sm:$0xff] %v3372
    %3442 = vst [vmem:[#allocation4 + $0x588] sm:$0xff] %v3374
    %3443 = vst [vmem:[#allocation4 + $0x590] sm:$0xff] %v3376
    %3444 = vst [vmem:[#allocation4 + $0x5f0] sm:$0xff] %v3380
    %3445 = vst [vmem:[#allocation4 + $0x5f8] sm:$0xff] %v3382
    %3446 = vst [vmem:[#allocation4 + $0x658] sm:$0xff] %v3384
    %3447 = vst [vmem:[#allocation4 + $0x660] sm:$0xff] %v3386
    %3448 = vst [vmem:[#allocation4 + $0x6c0] sm:$0xff] %v3390
    %3449 = vst [vmem:[#allocation4 + $0x6c8] sm:$0xff] %v3392
    %3450 = vst [vmem:[#allocation4 + $0x728] sm:$0xff] %v3394
    %3451 = vst [vmem:[#allocation4 + $0x730] sm:$0xff] %v3396
    %3452 = vst [vmem:[#allocation4 + $0x790] sm:$0xff] %v3400
    %3453 = vst [vmem:[#allocation4 + $0x798] sm:$0xff] %v3402
    %3454 = vst [vmem:[#allocation4 + $0x7f8] sm:$0xff] %v3404
    %3455 = vst [vmem:[#allocation4 + $0x800] sm:$0xff] %v3406
    %3456 = vst [vmem:[#allocation4 + $0x860] sm:$0xff] %v3410
    %3457 = vst [vmem:[#allocation4 + $0x868] sm:$0xff] %v3412
    %v3458 = vld [vmem:[%s5 + $0x28] sm:$0xff]
    %v3459 = vld [vmem:[%s5 + $0x5c] sm:$0xff]
    %v3460 = vld [vmem:[%s5 + $0x90] sm:$0xff]
    %v3461 = vld [vmem:[%s5 + $0xc4] sm:$0xff]
    %v3462 = vld [vmem:[%s5 + $0xf8] sm:$0xff]
    %v3463 = vld [vmem:[%s5 + $0x12c] sm:$0xff]
    %v3464 = vld [vmem:[%s5 + $0x160] sm:$0xff]
    %v3465 = vld [vmem:[%s5 + $0x194] sm:$0xff]
    %v3466 = vld [vmem:[%s5 + $0x1c8] sm:$0xff]
    %v3467 = vld [vmem:[%s5 + $0x1fc] sm:$0xff]
    %v3468 = vld [vmem:[%s5 + $0x230] sm:$0xff]
    %v3469 = vld [vmem:[%s5 + $0x264] sm:$0xff]
    %v3470 = vld [vmem:[%s5 + $0x298] sm:$0xff]
    %v3471 = vld [vmem:[%s5 + $0x2cc] sm:$0xff]
    %v3472 = vld [vmem:[%s5 + $0x300] sm:$0xff]
    %v3473 = vld [vmem:[%s5 + $0x334] sm:$0xff]
    %v3490 = vunpack.c.l.b16 %v3458
    %v3491 = vunpack.c.h.b16 %v3458
    %v3492 = vunpack.c.l.b16 %v3459
    %v3493 = vunpack.c.h.b16 %v3459
    %v3494 = vunpack.c.l.b16 %v3460
    %v3495 = vunpack.c.h.b16 %v3460
    %v3496 = vunpack.c.l.b16 %v3461
    %v3497 = vunpack.c.h.b16 %v3461
    %v3498 = vunpack.c.l.b16 %v3462
    %v3499 = vunpack.c.h.b16 %v3462
    %v3500 = vunpack.c.l.b16 %v3463
    %v3501 = vunpack.c.h.b16 %v3463
    %v3502 = vunpack.c.l.b16 %v3464
    %v3503 = vunpack.c.h.b16 %v3464
    %v3504 = vunpack.c.l.b16 %v3465
    %v3505 = vunpack.c.h.b16 %v3465
    %v3506 = vunpack.c.l.b16 %v3466
    %v3507 = vunpack.c.h.b16 %v3466
    %v3508 = vunpack.c.l.b16 %v3467
    %v3509 = vunpack.c.h.b16 %v3467
    %v3510 = vunpack.c.l.b16 %v3468
    %v3511 = vunpack.c.h.b16 %v3468
    %v3512 = vunpack.c.l.b16 %v3469
    %v3513 = vunpack.c.h.b16 %v3469
    %v3514 = vunpack.c.l.b16 %v3470
    %v3515 = vunpack.c.h.b16 %v3470
    %v3516 = vunpack.c.l.b16 %v3471
    %v3517 = vunpack.c.h.b16 %v3471
    %v3518 = vunpack.c.l.b16 %v3472
    %v3519 = vunpack.c.h.b16 %v3472
    %v3520 = vunpack.c.l.b16 %v3473
    %v3521 = vunpack.c.h.b16 %v3473
    %v3522 = vpack.c.b16 %v3492, %v3490
    %v3523 = vpack.c.b16 %v3493, %v3491
    %v3524 = vpack.c.b16 %v3496, %v3494
    %v3525 = vpack.c.b16 %v3497, %v3495
    %v3526 = vpack.c.b16 %v3500, %v3498
    %v3527 = vpack.c.b16 %v3501, %v3499
    %v3528 = vpack.c.b16 %v3504, %v3502
    %v3529 = vpack.c.b16 %v3505, %v3503
    %v3530 = vpack.c.b16 %v3508, %v3506
    %v3531 = vpack.c.b16 %v3509, %v3507
    %v3532 = vpack.c.b16 %v3512, %v3510
    %v3533 = vpack.c.b16 %v3513, %v3511
    %v3534 = vpack.c.b16 %v3516, %v3514
    %v3535 = vpack.c.b16 %v3517, %v3515
    %v3536 = vpack.c.b16 %v3520, %v3518
    %v3537 = vpack.c.b16 %v3521, %v3519
    %3554 = vmatprep.subr.bf16.mxu0 %v3523
    %3555 = vmatpush1.bf16.msra.mxu0 %v3522
    %3556 = vmatprep.subr.bf16.mxu0 %v3525
    %3557 = vmatpush1.bf16.msra.mxu0 %v3524
    %3558 = vmatprep.subr.bf16.mxu0 %v3527
    %3559 = vmatpush1.bf16.msra.mxu0 %v3526
    %3560 = vmatprep.subr.bf16.mxu0 %v3529
    %3561 = vmatpush1.bf16.msra.mxu0 %v3528
    %3562 = vmatprep.subr.bf16.mxu0 %v3531
    %3563 = vmatpush1.bf16.msra.mxu0 %v3530
    %3564 = vmatprep.subr.bf16.mxu0 %v3533
    %3565 = vmatpush1.bf16.msra.mxu0 %v3532
    %3566 = vmatprep.subr.bf16.mxu0 %v3535
    %3567 = vmatpush1.bf16.msra.mxu0 %v3534
    %3568 = vmatprep.subr.bf16.mxu0 %v3537
    %3569 = vmatpush1.bf16.msra.mxu0 %v3536
    %3570 = vmatprep.subr.bf16.mxu0 0
    %3571 = vmatpush1.bf16.msra.mxu0 0
    %3572 = vmatprep.subr.bf16.mxu0 0
    %3573 = vmatpush1.bf16.msra.mxu0 0
    %3574 = vmatprep.subr.bf16.mxu0 0
    %3575 = vmatpush1.bf16.msra.mxu0 0
    %3576 = vmatprep.subr.bf16.mxu0 0
    %3577 = vmatpush1.bf16.msra.mxu0 0
    %3578 = vmatprep.subr.bf16.mxu0 0
    %3579 = vmatpush1.bf16.msra.mxu0 0
    %3580 = vmatprep.subr.bf16.mxu0 0
    %3581 = vmatpush1.bf16.msra.mxu0 0
    %3582 = vmatprep.subr.bf16.mxu0 0
    %3583 = vmatpush1.bf16.msra.mxu0 0
    %3584 = vmatprep.subr.bf16.mxu0 0
    %3585 = vmatpush1.bf16.msra.mxu0 0
    %3586 = vmatprep.mubr.bf16.mxu0 0
    %3587 = vmatmul.mubr.bf16.gmra.mrb[0].mxu0 %v2057
    %v3588 = vpop.f32.mrb[0].mxu0
    %v3589 = vadd.f32 0.0, %v3588
    %v3590 = vpop.f32.mrb[0].mxu0
    %v3591 = vadd.f32 0.0, %v3590
    %v3592 = vpop.f32.mrb[0].mxu0
    %v3593 = vadd.f32 0.0, %v3592
    %v3594 = vpop.f32.mrb[0].mxu0
    %v3595 = vadd.f32 0.0, %v3594
    %3596 = vmatprep.mubr.bf16.mxu0 0
    %3597 = vmatmul.mubr.bf16.gmra.mrb[0].mxu0 %v2058
    %v3598 = vpop.f32.mrb[0].mxu0
    %v3599 = vadd.f32 0.0, %v3598
    %v3600 = vpop.f32.mrb[0].mxu0
    %v3601 = vadd.f32 0.0, %v3600
    %v3602 = vpop.f32.mrb[0].mxu0
    %v3603 = vadd.f32 0.0, %v3602
    %v3604 = vpop.f32.mrb[0].mxu0
    %v3605 = vadd.f32 0.0, %v3604
    %3606 = vmatprep.mubr.bf16.mxu0 0
    %3607 = vmatmul.mubr.bf16.gmra.mrb[0].mxu0 %v2059
    %v3608 = vpop.f32.mrb[0].mxu0
    %v3609 = vadd.f32 0.0, %v3608
    %v3610 = vpop.f32.mrb[0].mxu0
    %v3611 = vadd.f32 0.0, %v3610
    %v3612 = vpop.f32.mrb[0].mxu0
    %v3613 = vadd.f32 0.0, %v3612
    %v3614 = vpop.f32.mrb[0].mxu0
    %v3615 = vadd.f32 0.0, %v3614
    %3616 = vmatprep.mubr.bf16.mxu0 0
    %3617 = vmatmul.mubr.bf16.gmra.mrb[0].mxu0 %v2060
    %v3618 = vpop.f32.mrb[0].mxu0
    %v3619 = vadd.f32 0.0, %v3618
    %v3620 = vpop.f32.mrb[0].mxu0
    %v3621 = vadd.f32 0.0, %v3620
    %v3622 = vpop.f32.mrb[0].mxu0
    %v3623 = vadd.f32 0.0, %v3622
    %v3624 = vpop.f32.mrb[0].mxu0
    %v3625 = vadd.f32 0.0, %v3624
    %3626 = vmatprep.mubr.bf16.mxu0 0
    %3627 = vmatmul.mubr.bf16.gmra.mrb[0].mxu0 %v2061
    %v3628 = vpop.f32.mrb[0].mxu0
    %v3629 = vadd.f32 0.0, %v3628
    %v3630 = vpop.f32.mrb[0].mxu0
    %v3631 = vadd.f32 0.0, %v3630
    %v3632 = vpop.f32.mrb[0].mxu0
    %v3633 = vadd.f32 0.0, %v3632
    %v3634 = vpop.f32.mrb[0].mxu0
    %v3635 = vadd.f32 0.0, %v3634
    %3636 = vmatprep.mubr.bf16.mxu0 0
    %3637 = vmatmul.mubr.bf16.gmra.mrb[0].mxu0 %v2062
    %v3638 = vpop.f32.mrb[0].mxu0
    %v3639 = vadd.f32 0.0, %v3638
    %v3640 = vpop.f32.mrb[0].mxu0
    %v3641 = vadd.f32 0.0, %v3640
    %v3642 = vpop.f32.mrb[0].mxu0
    %v3643 = vadd.f32 0.0, %v3642
    %v3644 = vpop.f32.mrb[0].mxu0
    %v3645 = vadd.f32 0.0, %v3644
    %3646 = vmatprep.mubr.bf16.mxu0 0
    %3647 = vmatmul.mubr.bf16.gmra.mrb[0].mxu0 %v2063
    %v3648 = vpop.f32.mrb[0].mxu0
    %v3649 = vadd.f32 0.0, %v3648
    %v3650 = vpop.f32.mrb[0].mxu0
    %v3651 = vadd.f32 0.0, %v3650
    %v3652 = vpop.f32.mrb[0].mxu0
    %v3653 = vadd.f32 0.0, %v3652
    %v3654 = vpop.f32.mrb[0].mxu0
    %v3655 = vadd.f32 0.0, %v3654
    %3656 = vmatprep.mubr.bf16.mxu0 0
    %3657 = vmatmul.mubr.bf16.gmra.mrb[0].mxu0 %v2064
    %v3658 = vpop.f32.mrb[0].mxu0
    %v3659 = vadd.f32 0.0, %v3658
    %v3660 = vpop.f32.mrb[0].mxu0
    %v3661 = vadd.f32 0.0, %v3660
    %v3662 = vpop.f32.mrb[0].mxu0
    %v3663 = vadd.f32 0.0, %v3662
    %v3664 = vpop.f32.mrb[0].mxu0
    %v3665 = vadd.f32 0.0, %v3664
    %3666 = vmatprep.mubr.bf16.mxu0 0
    %3667 = vmatmul.mubr.bf16.gmra.mrb[0].mxu0 %v2065
    %v3668 = vpop.f32.mrb[0].mxu0
    %v3669 = vadd.f32 0.0, %v3668
    %v3670 = vpop.f32.mrb[0].mxu0
    %v3671 = vadd.f32 0.0, %v3670
    %v3672 = vpop.f32.mrb[0].mxu0
    %v3673 = vadd.f32 0.0, %v3672
    %v3674 = vpop.f32.mrb[0].mxu0
    %v3675 = vadd.f32 0.0, %v3674
    %3676 = vmatprep.mubr.bf16.mxu0 0
    %3677 = vmatmul.mubr.bf16.gmra.mrb[0].mxu0 %v2066
    %v3678 = vpop.f32.mrb[0].mxu0
    %v3679 = vadd.f32 0.0, %v3678
    %v3680 = vpop.f32.mrb[0].mxu0
    %v3681 = vadd.f32 0.0, %v3680
    %v3682 = vpop.f32.mrb[0].mxu0
    %v3683 = vadd.f32 0.0, %v3682
    %v3684 = vpop.f32.mrb[0].mxu0
    %v3685 = vadd.f32 0.0, %v3684
    %3686 = vmatprep.mubr.bf16.mxu0 0
    %3687 = vmatmul.mubr.bf16.gmra.mrb[0].mxu0 %v2067
    %v3688 = vpop.f32.mrb[0].mxu0
    %v3689 = vadd.f32 0.0, %v3688
    %v3690 = vpop.f32.mrb[0].mxu0
    %v3691 = vadd.f32 0.0, %v3690
    %v3692 = vpop.f32.mrb[0].mxu0
    %v3693 = vpop.f32.mrb[0].mxu0
    %3694 = vdwg.mxu0
    %3695 = vst [vmem:[#allocation4 + $0x50] sm:$0xff] %v3589
    %3696 = vst [vmem:[#allocation4 + $0x58] sm:$0xff] %v3591
    %3697 = vst [vmem:[#allocation4 + $0xb8] sm:$0xff] %v3593
    %3698 = vst [vmem:[#allocation4 + $0xc0] sm:$0xff] %v3595
    %3699 = vst [vmem:[#allocation4 + $0x120] sm:$0xff] %v3599
    %3700 = vst [vmem:[#allocation4 + $0x128] sm:$0xff] %v3601
    %3701 = vst [vmem:[#allocation4 + $0x188] sm:$0xff] %v3603
    %3702 = vst [vmem:[#allocation4 + $0x190] sm:$0xff] %v3605
    %3703 = vst [vmem:[#allocation4 + $0x1f0] sm:$0xff] %v3609
    %3704 = vst [vmem:[#allocation4 + $0x1f8] sm:$0xff] %v3611
    %3705 = vst [vmem:[#allocation4 + $0x258] sm:$0xff] %v3613
    %3706 = vst [vmem:[#allocation4 + $0x260] sm:$0xff] %v3615
    %3707 = vst [vmem:[#allocation4 + $0x2c0] sm:$0xff] %v3619
    %3708 = vst [vmem:[#allocation4 + $0x2c8] sm:$0xff] %v3621
    %3709 = vst [vmem:[#allocation4 + $0x328] sm:$0xff] %v3623
    %3710 = vst [vmem:[#allocation4 + $0x330] sm:$0xff] %v3625
    %3711 = vst [vmem:[#allocation4 + $0x390] sm:$0xff] %v3629
    %3712 = vst [vmem:[#allocation4 + $0x398] sm:$0xff] %v3631
    %3713 = vst [vmem:[#allocation4 + $0x3f8] sm:$0xff] %v3633
    %3714 = vst [vmem:[#allocation4 + $0x400] sm:$0xff] %v3635
    %3715 = vst [vmem:[#allocation4 + $0x460] sm:$0xff] %v3639
    %3716 = vst [vmem:[#allocation4 + $0x468] sm:$0xff] %v3641
    %3717 = vst [vmem:[#allocation4 + $0x4c8] sm:$0xff] %v3643
    %3718 = vst [vmem:[#allocation4 + $0x4d0] sm:$0xff] %v3645
    %3719 = vst [vmem:[#allocation4 + $0x530] sm:$0xff] %v3649
    %3720 = vst [vmem:[#allocation4 + $0x538] sm:$0xff] %v3651
    %3721 = vst [vmem:[#allocation4 + $0x598] sm:$0xff] %v3653
    %3722 = vst [vmem:[#allocation4 + $0x5a0] sm:$0xff] %v3655
    %3723 = vst [vmem:[#allocation4 + $0x600] sm:$0xff] %v3659
    %3724 = vst [vmem:[#allocation4 + $0x608] sm:$0xff] %v3661
    %3725 = vst [vmem:[#allocation4 + $0x668] sm:$0xff] %v3663
    %3726 = vst [vmem:[#allocation4 + $0x670] sm:$0xff] %v3665
    %3727 = vst [vmem:[#allocation4 + $0x6d0] sm:$0xff] %v3669
    %3728 = vst [vmem:[#allocation4 + $0x6d8] sm:$0xff] %v3671
    %3729 = vst [vmem:[#allocation4 + $0x738] sm:$0xff] %v3673
    %3730 = vst [vmem:[#allocation4 + $0x740] sm:$0xff] %v3675
    %3731 = vst [vmem:[#allocation4 + $0x7a0] sm:$0xff] %v3679
    %3732 = vst [vmem:[#allocation4 + $0x7a8] sm:$0xff] %v3681
    %3733 = vst [vmem:[#allocation4 + $0x808] sm:$0xff] %v3683
    %3734 = vst [vmem:[#allocation4 + $0x810] sm:$0xff] %v3685
    %3735 = vst [vmem:[#allocation4 + $0x870] sm:$0xff] %v3689
    %3736 = vst [vmem:[#allocation4 + $0x878] sm:$0xff] %v3691
    %v3737 = vld [vmem:[%s5 + $0x30] sm:$0xf]
    %v3738 = vld [vmem:[%s5 + $0x64] sm:$0xf]
    %v3739 = vld [vmem:[%s5 + $0x98] sm:$0xf]
    %v3740 = vld [vmem:[%s5 + $0xcc] sm:$0xf]
    %v3741 = vld [vmem:[%s5 + $0x100] sm:$0xf]
    %v3742 = vld [vmem:[%s5 + $0x134] sm:$0xf]
    %v3743 = vld [vmem:[%s5 + $0x168] sm:$0xf]
    %v3744 = vld [vmem:[%s5 + $0x19c] sm:$0xf]
    %v3745 = vld [vmem:[%s5 + $0x1d0] sm:$0xf]
    %v3746 = vld [vmem:[%s5 + $0x204] sm:$0xf]
    %v3747 = vld [vmem:[%s5 + $0x238] sm:$0xf]
    %v3748 = vld [vmem:[%s5 + $0x26c] sm:$0xf]
    %v3749 = vld [vmem:[%s5 + $0x2a0] sm:$0xf]
    %v3750 = vld [vmem:[%s5 + $0x2d4] sm:$0xf]
    %v3751 = vld [vmem:[%s5 + $0x308] sm:$0xf]
    %v3752 = vld [vmem:[%s5 + $0x33c] sm:$0xf]
    %v3769 = vunpack.c.l.b16 %v3737
    %v3770 = vunpack.c.l.b16 %v3738
    %v3771 = vunpack.c.l.b16 %v3739
    %v3772 = vunpack.c.l.b16 %v3740
    %v3773 = vunpack.c.l.b16 %v3741
    %v3774 = vunpack.c.l.b16 %v3742
    %v3775 = vunpack.c.l.b16 %v3743
    %v3776 = vunpack.c.l.b16 %v3744
    %v3777 = vunpack.c.l.b16 %v3745
    %v3778 = vunpack.c.l.b16 %v3746
    %v3779 = vunpack.c.l.b16 %v3747
    %v3780 = vunpack.c.l.b16 %v3748
    %v3781 = vunpack.c.l.b16 %v3749
    %v3782 = vunpack.c.l.b16 %v3750
    %v3783 = vunpack.c.l.b16 %v3751
    %v3784 = vunpack.c.l.b16 %v3752
    %v3785 = vpack.c.b16 %v3770, %v3769
    %v3786 = vpack.c.b16 %v3772, %v3771
    %v3787 = vpack.c.b16 %v3774, %v3773
    %v3788 = vpack.c.b16 %v3776, %v3775
    %v3789 = vpack.c.b16 %v3778, %v3777
    %v3790 = vpack.c.b16 %v3780, %v3779
    %v3791 = vpack.c.b16 %v3782, %v3781
    %v3792 = vpack.c.b16 %v3784, %v3783
    %3801 = vmatprep.subr.bf16.mxu0 0
    %3802 = vmatpush1.bf16.msra.mxu0 %v3785
    %3803 = vmatprep.subr.bf16.mxu0 0
    %3804 = vmatpush1.bf16.msra.mxu0 %v3786
    %3805 = vmatprep.subr.bf16.mxu0 0
    %3806 = vmatpush1.bf16.msra.mxu0 %v3787
    %3807 = vmatprep.subr.bf16.mxu0 0
    %3808 = vmatpush1.bf16.msra.mxu0 %v3788
    %3809 = vmatprep.subr.bf16.mxu0 0
    %3810 = vmatpush1.bf16.msra.mxu0 %v3789
    %3811 = vmatprep.subr.bf16.mxu0 0
    %3812 = vmatpush1.bf16.msra.mxu0 %v3790
    %3813 = vmatprep.subr.bf16.mxu0 0
    %3814 = vmatpush1.bf16.msra.mxu0 %v3791
    %3815 = vmatprep.subr.bf16.mxu0 0
    %3816 = vmatpush1.bf16.msra.mxu0 %v3792
    %3817 = vmatprep.subr.bf16.mxu0 0
    %3818 = vmatpush1.bf16.msra.mxu0 0
    %3819 = vmatprep.subr.bf16.mxu0 0
    %3820 = vmatpush1.bf16.msra.mxu0 0
    %3821 = vmatprep.subr.bf16.mxu0 0
    %3822 = vmatpush1.bf16.msra.mxu0 0
    %3823 = vmatprep.subr.bf16.mxu0 0
    %3824 = vmatpush1.bf16.msra.mxu0 0
    %3825 = vmatprep.subr.bf16.mxu0 0
    %3826 = vmatpush1.bf16.msra.mxu0 0
    %3827 = vmatprep.subr.bf16.mxu0 0
    %3828 = vmatpush1.bf16.msra.mxu0 0
    %3829 = vmatprep.subr.bf16.mxu0 0
    %3830 = vmatpush1.bf16.msra.mxu0 0
    %3831 = vmatprep.subr.bf16.mxu0 0
    %3832 = vmatpush1.bf16.msra.mxu0 0
    %3833 = vmatprep.mubr.bf16.mxu0 0
    %3834 = vmatmul.mubr.bf16.gmra.mrb[0].mxu0 %v2057
    %v3835 = vpop.f32.mrb[0].mxu0
    %v3836 = vadd.f32 0.0, %v3835
    %v3837 = vpop.f32.mrb[0].mxu0
    %v3838 = vpop.f32.mrb[0].mxu0
    %v3839 = vadd.f32 0.0, %v3838
    %v3840 = vpop.f32.mrb[0].mxu0
    %3841 = vmatprep.mubr.bf16.mxu0 0
    %3842 = vmatmul.mubr.bf16.gmra.mrb[0].mxu0 %v2058
    %v3843 = vpop.f32.mrb[0].mxu0
    %v3844 = vadd.f32 0.0, %v3843
    %v3845 = vpop.f32.mrb[0].mxu0
    %v3846 = vpop.f32.mrb[0].mxu0
    %v3847 = vadd.f32 0.0, %v3846
    %v3848 = vpop.f32.mrb[0].mxu0
    %3849 = vmatprep.mubr.bf16.mxu0 0
    %3850 = vmatmul.mubr.bf16.gmra.mrb[0].mxu0 %v2059
    %v3851 = vpop.f32.mrb[0].mxu0
    %v3852 = vadd.f32 0.0, %v3851
    %v3853 = vpop.f32.mrb[0].mxu0
    %v3854 = vpop.f32.mrb[0].mxu0
    %v3855 = vadd.f32 0.0, %v3854
    %v3856 = vpop.f32.mrb[0].mxu0
    %3857 = vmatprep.mubr.bf16.mxu0 0
    %3858 = vmatmul.mubr.bf16.gmra.mrb[0].mxu0 %v2060
    %v3859 = vpop.f32.mrb[0].mxu0
    %v3860 = vadd.f32 0.0, %v3859
    %v3861 = vpop.f32.mrb[0].mxu0
    %v3862 = vpop.f32.mrb[0].mxu0
    %v3863 = vadd.f32 0.0, %v3862
    %v3864 = vpop.f32.mrb[0].mxu0
    %3865 = vmatprep.mubr.bf16.mxu0 0
    %3866 = vmatmul.mubr.bf16.gmra.mrb[0].mxu0 %v2061
    %v3867 = vpop.f32.mrb[0].mxu0
    %v3868 = vadd.f32 0.0, %v3867
    %v3869 = vpop.f32.mrb[0].mxu0
    %v3870 = vpop.f32.mrb[0].mxu0
    %v3871 = vadd.f32 0.0, %v3870
    %v3872 = vpop.f32.mrb[0].mxu0
    %3873 = vmatprep.mubr.bf16.mxu0 0
    %3874 = vmatmul.mubr.bf16.gmra.mrb[0].mxu0 %v2062
    %v3875 = vpop.f32.mrb[0].mxu0
    %v3876 = vadd.f32 0.0, %v3875
    %v3877 = vpop.f32.mrb[0].mxu0
    %v3878 = vpop.f32.mrb[0].mxu0
    %v3879 = vadd.f32 0.0, %v3878
    %v3880 = vpop.f32.mrb[0].mxu0
    %3881 = vmatprep.mubr.bf16.mxu0 0
    %3882 = vmatmul.mubr.bf16.gmra.mrb[0].mxu0 %v2063
    %v3883 = vpop.f32.mrb[0].mxu0
    %v3884 = vadd.f32 0.0, %v3883
    %v3885 = vpop.f32.mrb[0].mxu0
    %v3886 = vpop.f32.mrb[0].mxu0
    %v3887 = vadd.f32 0.0, %v3886
    %v3888 = vpop.f32.mrb[0].mxu0
    %3889 = vmatprep.mubr.bf16.mxu0 0
    %3890 = vmatmul.mubr.bf16.gmra.mrb[0].mxu0 %v2064
    %v3891 = vpop.f32.mrb[0].mxu0
    %v3892 = vadd.f32 0.0, %v3891
    %v3893 = vpop.f32.mrb[0].mxu0
    %v3894 = vpop.f32.mrb[0].mxu0
    %v3895 = vadd.f32 0.0, %v3894
    %v3896 = vpop.f32.mrb[0].mxu0
    %3897 = vmatprep.mubr.bf16.mxu0 0
    %3898 = vmatmul.mubr.bf16.gmra.mrb[0].mxu0 %v2065
    %v3899 = vpop.f32.mrb[0].mxu0
    %v3900 = vadd.f32 0.0, %v3899
    %v3901 = vpop.f32.mrb[0].mxu0
    %v3902 = vpop.f32.mrb[0].mxu0
    %v3903 = vadd.f32 0.0, %v3902
    %v3904 = vpop.f32.mrb[0].mxu0
    %3905 = vmatprep.mubr.bf16.mxu0 0
    %3906 = vmatmul.mubr.bf16.gmra.mrb[0].mxu0 %v2066
    %v3907 = vpop.f32.mrb[0].mxu0
    %v3908 = vadd.f32 0.0, %v3907
    %v3909 = vpop.f32.mrb[0].mxu0
    %v3910 = vpop.f32.mrb[0].mxu0
    %v3911 = vadd.f32 0.0, %v3910
    %v3912 = vpop.f32.mrb[0].mxu0
    %3913 = vmatprep.mubr.bf16.mxu0 0
    %3914 = vmatmul.mubr.bf16.gmra.mrb[0].mxu0 %v2067
    %v3915 = vpop.f32.mrb[0].mxu0
    %v3916 = vadd.f32 0.0, %v3915
    %v3917 = vpop.f32.mrb[0].mxu0
    %v3918 = vpop.f32.mrb[0].mxu0
    %v3919 = vpop.f32.mrb[0].mxu0
    %3920 = vdwg.mxu0
    %3921 = vst [vmem:[#allocation4 + $0x60] sm:$0xff] %v3836
    %3922 = vst [vmem:[#allocation4 + $0xc8] sm:$0xff] %v3839
    %3923 = vst [vmem:[#allocation4 + $0x130] sm:$0xff] %v3844
    %3924 = vst [vmem:[#allocation4 + $0x198] sm:$0xff] %v3847
    %3925 = vst [vmem:[#allocation4 + $0x200] sm:$0xff] %v3852
    %3926 = vst [vmem:[#allocation4 + $0x268] sm:$0xff] %v3855
    %3927 = vst [vmem:[#allocation4 + $0x2d0] sm:$0xff] %v3860
    %3928 = vst [vmem:[#allocation4 + $0x338] sm:$0xff] %v3863
    %3929 = vst [vmem:[#allocation4 + $0x3a0] sm:$0xff] %v3868
    %3930 = vst [vmem:[#allocation4 + $0x408] sm:$0xff] %v3871
    %3931 = vst [vmem:[#allocation4 + $0x470] sm:$0xff] %v3876
    %3932 = vst [vmem:[#allocation4 + $0x4d8] sm:$0xff] %v3879
    %3933 = vst [vmem:[#allocation4 + $0x540] sm:$0xff] %v3884
    %3934 = vst [vmem:[#allocation4 + $0x5a8] sm:$0xff] %v3887
    %3935 = vst [vmem:[#allocation4 + $0x610] sm:$0xff] %v3892
    %3936 = vst [vmem:[#allocation4 + $0x678] sm:$0xff] %v3895
    %3937 = vst [vmem:[#allocation4 + $0x6e0] sm:$0xff] %v3900
    %3938 = vst [vmem:[#allocation4 + $0x748] sm:$0xff] %v3903
    %3939 = vst [vmem:[#allocation4 + $0x7b0] sm:$0xff] %v3908
    %3940 = vst [vmem:[#allocation4 + $0x818] sm:$0xff] %v3911
    %3941 = vst [vmem:[#allocation4 + $0x880] sm:$0xff] %v3916
    %v3942 = vld [vmem:[#allocation4] sm:$0xff]
    %v3943 = vld [vmem:[#allocation4 + $0x68] sm:$0xff]
    %v3944 = vld [vmem:[#allocation4 + $0xd0] sm:$0xff]
    %v3945 = vld [vmem:[#allocation4 + $0x138] sm:$0xff]
    %v3946 = vld [vmem:[#allocation4 + $0x1a0] sm:$0xff]
    %v3947 = vld [vmem:[#allocation4 + $0x208] sm:$0xff]
    %v3948 = vld [vmem:[#allocation4 + $0x270] sm:$0xff]
    %v3949 = vld [vmem:[#allocation4 + $0x2d8] sm:$0xff]
    %v3950 = vld [vmem:[#allocation4 + $0x340] sm:$0xff]
    %v3951 = vld [vmem:[#allocation4 + $0x3a8] sm:$0xff]
    %v3952 = vld [vmem:[#allocation4 + $0x410] sm:$0xff]
    %v3953 = vld [vmem:[#allocation4 + $0x478] sm:$0xff]
    %v3954 = vld [vmem:[#allocation4 + $0x4e0] sm:$0xff]
    %v3955 = vld [vmem:[#allocation4 + $0x548] sm:$0xff]
    %v3956 = vld [vmem:[#allocation4 + $0x5b0] sm:$0xff]
    %v3957 = vld [vmem:[#allocation4 + $0x618] sm:$0xff]
    %v3958 = vadd.f32 %v3942, 0.0
    %v3959 = vadd.f32 %v3943, 0.0
    %v3960 = vadd.f32 %v3944, 0.0
    %v3961 = vadd.f32 %v3945, 0.0
    %v3962 = vadd.f32 %v3946, 0.0
    %v3963 = vadd.f32 %v3947, 0.0
    %v3964 = vadd.f32 %v3948, 0.0
    %v3965 = vadd.f32 %v3949, 0.0
    %v3966 = vadd.f32 %v3950, 0.0
    %v3967 = vadd.f32 %v3951, 0.0
    %v3968 = vadd.f32 %v3952, 0.0
    %v3969 = vadd.f32 %v3953, 0.0
    %v3970 = vadd.f32 %v3954, 0.0
    %v3971 = vadd.f32 %v3955, 0.0
    %v3972 = vadd.f32 %v3956, 0.0
    %v3973 = vadd.f32 %v3957, 0.0
    %v3974 = vld [vmem:[#allocation4] sm:$0xfe]
    %v3975 = vld [vmem:[#allocation4 + $0x680] sm:$0x1]
    %v3976 = vadd.f32 %v3974, 0.0
    %v3977 = vadd.f32 %v3975, 0.0
    %v3978 = vld [vmem:[#allocation4 + $0x8] sm:$0xfc]
    %v3979 = vld [vmem:[#allocation4 + $0x70] sm:$0xff]
    %v3980 = vld [vmem:[#allocation4 + $0xd8] sm:$0xff]
    %v3981 = vld [vmem:[#allocation4 + $0x140] sm:$0xff]
    %v3982 = vld [vmem:[#allocation4 + $0x1a8] sm:$0xff]
    %v3983 = vld [vmem:[#allocation4 + $0x210] sm:$0xff]
    %v3984 = vld [vmem:[#allocation4 + $0x278] sm:$0xff]
    %v3985 = vld [vmem:[#allocation4 + $0x2e0] sm:$0xff]
    %v3986 = vld [vmem:[#allocation4 + $0x348] sm:$0xff]
    %v3987 = vld [vmem:[#allocation4 + $0x3b0] sm:$0xff]
    %v3988 = vld [vmem:[#allocation4 + $0x418] sm:$0xff]
    %v3989 = vld [vmem:[#allocation4 + $0x480] sm:$0xff]
    %v3990 = vld [vmem:[#allocation4 + $0x4e8] sm:$0xff]
    %v3991 = vld [vmem:[#allocation4 + $0x550] sm:$0xff]
    %v3992 = vld [vmem:[#allocation4 + $0x5b8] sm:$0xff]
    %v3993 = vld [vmem:[#allocation4 + $0x620] sm:$0xff]
    %v3994 = vld [vmem:[#allocation4 + $0x688] sm:$0x3]
    %vm4012 = vcmask 1045504
    %v4013 = vrot.slane %v3978, 2
    %v4014 = vrot.slane %v3979, 2
    %v4015 = vsel %vm4012, %v4013, %v4014
    %v4016 = vrot.slane %v3980, 2
    %v4017 = vsel %vm4012, %v4014, %v4016
    %v4018 = vrot.slane %v3981, 2
    %v4019 = vsel %vm4012, %v4016, %v4018
    %v4020 = vrot.slane %v3982, 2
    %v4021 = vsel %vm4012, %v4018, %v4020
    %v4022 = vrot.slane %v3983, 2
    %v4023 = vsel %vm4012, %v4020, %v4022
    %v4024 = vrot.slane %v3984, 2
    %v4025 = vsel %vm4012, %v4022, %v4024
    %v4026 = vrot.slane %v3985, 2
    %v4027 = vsel %vm4012, %v4024, %v4026
    %v4028 = vrot.slane %v3986, 2
    %v4029 = vsel %vm4012, %v4026, %v4028
    %v4030 = vrot.slane %v3987, 2
    %v4031 = vsel %vm4012, %v4028, %v4030
    %v4032 = vrot.slane %v3988, 2
    %v4033 = vsel %vm4012, %v4030, %v4032
    %v4034 = vrot.slane %v3989, 2
    %v4035 = vsel %vm4012, %v4032, %v4034
    %v4036 = vrot.slane %v3990, 2
    %v4037 = vsel %vm4012, %v4034, %v4036
    %v4038 = vrot.slane %v3991, 2
    %v4039 = vsel %vm4012, %v4036, %v4038
    %v4040 = vrot.slane %v3992, 2
    %v4041 = vsel %vm4012, %v4038, %v4040
    %v4042 = vrot.slane %v3993, 2
    %v4043 = vsel %vm4012, %v4040, %v4042
    %v4044 = vrot.slane %v3994, 2
    %v4045 = vsel %vm4012, %v4042, %v4044
    %v4062 = vadd.f32 %v3958, %v4015
    %v4063 = vadd.f32 %v3959, %v4017
    %v4064 = vadd.f32 %v3960, %v4019
    %v4065 = vadd.f32 %v3961, %v4021
    %v4066 = vadd.f32 %v3962, %v4023
    %v4067 = vadd.f32 %v3963, %v4025
    %v4068 = vadd.f32 %v3964, %v4027
    %v4069 = vadd.f32 %v3965, %v4029
    %v4070 = vadd.f32 %v3966, %v4031
    %v4071 = vadd.f32 %v3967, %v4033
    %v4072 = vadd.f32 %v3968, %v4035
    %v4073 = vadd.f32 %v3969, %v4037
    %v4074 = vadd.f32 %v3970, %v4039
    %v4075 = vadd.f32 %v3971, %v4041
    %v4076 = vadd.f32 %v3972, %v4043
    %v4077 = vadd.f32 %v3973, %v4045
    %v4078 = vld [vmem:[#allocation4 + $0x8] sm:$0xf8]
    %v4079 = vld [vmem:[#allocation4 + $0x688] sm:$0x7]
    %v4082 = vrot.slane %v4078, 2
    %v4083 = vsel %vm4012, %v4082, %v4014
    %v4084 = vrot.slane %v4079, 2
    %v4085 = vsel %vm4012, %v4042, %v4084
    %v4089 = vadd.f32 %v3976, %v4083
    %v4090 = vadd.f32 %v3973, %v4085
    %v4091 = vadd.f32 %v3977, %v4084
    %v4092 = vld [vmem:[#allocation4 + $0x10] sm:$0xf0]
    %v4093 = vld [vmem:[#allocation4 + $0x78] sm:$0xff]
    %v4094 = vld [vmem:[#allocation4 + $0xe0] sm:$0xff]
    %v4095 = vld [vmem:[#allocation4 + $0x148] sm:$0xff]
    %v4096 = vld [vmem:[#allocation4 + $0x1b0] sm:$0xff]
    %v4097 = vld [vmem:[#allocation4 + $0x218] sm:$0xff]
    %v4098 = vld [vmem:[#allocation4 + $0x280] sm:$0xff]
    %v4099 = vld [vmem:[#allocation4 + $0x2e8] sm:$0xff]
    %v4100 = vld [vmem:[#allocation4 + $0x350] sm:$0xff]
    %v4101 = vld [vmem:[#allocation4 + $0x3b8] sm:$0xff]
    %v4102 = vld [vmem:[#allocation4 + $0x420] sm:$0xff]
    %v4103 = vld [vmem:[#allocation4 + $0x488] sm:$0xff]
    %v4104 = vld [vmem:[#allocation4 + $0x4f0] sm:$0xff]
    %v4105 = vld [vmem:[#allocation4 + $0x558] sm:$0xff]
    %v4106 = vld [vmem:[#allocation4 + $0x5c0] sm:$0xff]
    %v4107 = vld [vmem:[#allocation4 + $0x628] sm:$0xff]
    %v4108 = vld [vmem:[#allocation4 + $0x690] sm:$0xf]
    %vm4126 = vcmask 1043456
    %v4127 = vrot.slane %v4092, 4
    %v4128 = vrot.slane %v4093, 4
    %v4129 = vsel %vm4126, %v4127, %v4128
    %v4130 = vrot.slane %v4094, 4
    %v4131 = vsel %vm4126, %v4128, %v4130
    %v4132 = vrot.slane %v4095, 4
    %v4133 = vsel %vm4126, %v4130, %v4132
    %v4134 = vrot.slane %v4096, 4
    %v4135 = vsel %vm4126, %v4132, %v4134
    %v4136 = vrot.slane %v4097, 4
    %v4137 = vsel %vm4126, %v4134, %v4136
    %v4138 = vrot.slane %v4098, 4
    %v4139 = vsel %vm4126, %v4136, %v4138
    %v4140 = vrot.slane %v4099, 4
    %v4141 = vsel %vm4126, %v4138, %v4140
    %v4142 = vrot.slane %v4100, 4
    %v4143 = vsel %vm4126, %v4140, %v4142
    %v4144 = vrot.slane %v4101, 4
    %v4145 = vsel %vm4126, %v4142, %v4144
    %v4146 = vrot.slane %v4102, 4
    %v4147 = vsel %vm4126, %v4144, %v4146
    %v4148 = vrot.slane %v4103, 4
    %v4149 = vsel %vm4126, %v4146, %v4148
    %v4150 = vrot.slane %v4104, 4
    %v4151 = vsel %vm4126, %v4148, %v4150
    %v4152 = vrot.slane %v4105, 4
    %v4153 = vsel %vm4126, %v4150, %v4152
    %v4154 = vrot.slane %v4106, 4
    %v4155 = vsel %vm4126, %v4152, %v4154
    %v4156 = vrot.slane %v4107, 4
    %v4157 = vsel %vm4126, %v4154, %v4156
    %v4158 = vrot.slane %v4108, 4
    %v4159 = vsel %vm4126, %v4156, %v4158
    %v4176 = vadd.f32 %v4062, %v4129
    %v4177 = vadd.f32 %v4063, %v4131
    %v4178 = vadd.f32 %v4064, %v4133
    %v4179 = vadd.f32 %v4065, %v4135
    %v4180 = vadd.f32 %v4066, %v4137
    %v4181 = vadd.f32 %v4067, %v4139
    %v4182 = vadd.f32 %v4068, %v4141
    %v4183 = vadd.f32 %v4069, %v4143
    %v4184 = vadd.f32 %v4070, %v4145
    %v4185 = vadd.f32 %v4071, %v4147
    %v4186 = vadd.f32 %v4072, %v4149
    %v4187 = vadd.f32 %v4073, %v4151
    %v4188 = vadd.f32 %v4074, %v4153
    %v4189 = vadd.f32 %v4075, %v4155
    %v4190 = vadd.f32 %v4076, %v4157
    %v4191 = vadd.f32 %v4077, %v4159
    %v4192 = vld [vmem:[#allocation4 + $0x690] sm:$0xff]
    %vm4194 = vcmask 1040384
    %v4195 = vrot.slane %v4093, 7
    %v4196 = vrot.slane %v4094, 7
    %v4197 = vsel %vm4194, %v4195, %v4196
    %v4198 = vrot.slane %v4095, 7
    %v4199 = vsel %vm4194, %v4196, %v4198
    %v4200 = vrot.slane %v4096, 7
    %v4201 = vsel %vm4194, %v4198, %v4200
    %v4202 = vrot.slane %v4097, 7
    %v4203 = vsel %vm4194, %v4200, %v4202
    %v4204 = vrot.slane %v4098, 7
    %v4205 = vsel %vm4194, %v4202, %v4204
    %v4206 = vrot.slane %v4099, 7
    %v4207 = vsel %vm4194, %v4204, %v4206
    %v4208 = vrot.slane %v4100, 7
    %v4209 = vsel %vm4194, %v4206, %v4208
    %v4210 = vrot.slane %v4101, 7
    %v4211 = vsel %vm4194, %v4208, %v4210
    %v4212 = vrot.slane %v4102, 7
    %v4213 = vsel %vm4194, %v4210, %v4212
    %v4214 = vrot.slane %v4103, 7
    %v4215 = vsel %vm4194, %v4212, %v4214
    %v4216 = vrot.slane %v4104, 7
    %v4217 = vsel %vm4194, %v4214, %v4216
    %v4218 = vrot.slane %v4105, 7
    %v4219 = vsel %vm4194, %v4216, %v4218
    %v4220 = vrot.slane %v4106, 7
    %v4221 = vsel %vm4194, %v4218, %v4220
    %v4222 = vrot.slane %v4107, 7
    %v4223 = vsel %vm4194, %v4220, %v4222
    %v4224 = vrot.slane %v4192, 7
    %v4225 = vsel %vm4194, %v4222, %v4224
    %v4243 = vadd.f32 %v4089, %v4195
    %v4244 = vadd.f32 %v4063, %v4197
    %v4245 = vadd.f32 %v4064, %v4199
    %v4246 = vadd.f32 %v4065, %v4201
    %v4247 = vadd.f32 %v4066, %v4203
    %v4248 = vadd.f32 %v4067, %v4205
    %v4249 = vadd.f32 %v4068, %v4207
    %v4250 = vadd.f32 %v4069, %v4209
    %v4251 = vadd.f32 %v4070, %v4211
    %v4252 = vadd.f32 %v4071, %v4213
    %v4253 = vadd.f32 %v4072, %v4215
    %v4254 = vadd.f32 %v4073, %v4217
    %v4255 = vadd.f32 %v4074, %v4219
    %v4256 = vadd.f32 %v4075, %v4221
    %v4257 = vadd.f32 %v4076, %v4223
    %v4258 = vadd.f32 %v4090, %v4225
    %v4259 = vadd.f32 %v4091, %v4224
    %v4260 = vld [vmem:[#allocation4 + $0x80] sm:$0xfe]
    %v4261 = vld [vmem:[#allocation4 + $0xe8] sm:$0xff]
    %v4262 = vld [vmem:[#allocation4 + $0x150] sm:$0xff]
    %v4263 = vld [vmem:[#allocation4 + $0x1b8] sm:$0xff]
    %v4264 = vld [vmem:[#allocation4 + $0x220] sm:$0xff]
    %v4265 = vld [vmem:[#allocation4 + $0x288] sm:$0xff]
    %v4266 = vld [vmem:[#allocation4 + $0x2f0] sm:$0xff]
    %v4267 = vld [vmem:[#allocation4 + $0x358] sm:$0xff]
    %v4268 = vld [vmem:[#allocation4 + $0x3c0] sm:$0xff]
    %v4269 = vld [vmem:[#allocation4 + $0x428] sm:$0xff]
    %v4270 = vld [vmem:[#allocation4 + $0x490] sm:$0xff]
    %v4271 = vld [vmem:[#allocation4 + $0x4f8] sm:$0xff]
    %v4272 = vld [vmem:[#allocation4 + $0x560] sm:$0xff]
    %v4273 = vld [vmem:[#allocation4 + $0x5c8] sm:$0xff]
    %v4274 = vld [vmem:[#allocation4 + $0x630] sm:$0xff]
    %v4275 = vld [vmem:[#allocation4 + $0x698] sm:$0xff]
    %v4276 = vld [vmem:[#allocation4 + $0x700] sm:$0x1]
    %vm4294 = vcmask 1046528
    %v4295 = vrot.slane %v4260, 1
    %v4296 = vrot.slane %v4261, 1
    %v4297 = vsel %vm4294, %v4295, %v4296
    %v4298 = vrot.slane %v4262, 1
    %v4299 = vsel %vm4294, %v4296, %v4298
    %v4300 = vrot.slane %v4263, 1
    %v4301 = vsel %vm4294, %v4298, %v4300
    %v4302 = vrot.slane %v4264, 1
    %v4303 = vsel %vm4294, %v4300, %v4302
    %v4304 = vrot.slane %v4265, 1
    %v4305 = vsel %vm4294, %v4302, %v4304
    %v4306 = vrot.slane %v4266, 1
    %v4307 = vsel %vm4294, %v4304, %v4306
    %v4308 = vrot.slane %v4267, 1
    %v4309 = vsel %vm4294, %v4306, %v4308
    %v4310 = vrot.slane %v4268, 1
    %v4311 = vsel %vm4294, %v4308, %v4310
    %v4312 = vrot.slane %v4269, 1
    %v4313 = vsel %vm4294, %v4310, %v4312
    %v4314 = vrot.slane %v4270, 1
    %v4315 = vsel %vm4294, %v4312, %v4314
    %v4316 = vrot.slane %v4271, 1
    %v4317 = vsel %vm4294, %v4314, %v4316
    %v4318 = vrot.slane %v4272, 1
    %v4319 = vsel %vm4294, %v4316, %v4318
    %v4320 = vrot.slane %v4273, 1
    %v4321 = vsel %vm4294, %v4318, %v4320
    %v4322 = vrot.slane %v4274, 1
    %v4323 = vsel %vm4294, %v4320, %v4322
    %v4324 = vrot.slane %v4275, 1
    %v4325 = vsel %vm4294, %v4322, %v4324
    %v4326 = vrot.slane %v4276, 1
    %v4327 = vsel %vm4294, %v4324, %v4326
    %v4344 = vadd.f32 %v4176, %v4297
    %v4345 = vadd.f32 %v4177, %v4299
    %v4346 = vadd.f32 %v4178, %v4301
    %v4347 = vadd.f32 %v4179, %v4303
    %v4348 = vadd.f32 %v4180, %v4305
    %v4349 = vadd.f32 %v4181, %v4307
    %v4350 = vadd.f32 %v4182, %v4309
    %v4351 = vadd.f32 %v4183, %v4311
    %v4352 = vadd.f32 %v4184, %v4313
    %v4353 = vadd.f32 %v4185, %v4315
    %v4354 = vadd.f32 %v4186, %v4317
    %v4355 = vadd.f32 %v4187, %v4319
    %v4356 = vadd.f32 %v4188, %v4321
    %v4357 = vadd.f32 %v4189, %v4323
    %v4358 = vadd.f32 %v4190, %v4325
    %v4359 = vadd.f32 %v4191, %v4327
    %v4360 = vld [vmem:[#allocation4 + $0x80] sm:$0xfc]
    %v4361 = vld [vmem:[#allocation4 + $0x700] sm:$0x3]
    %v4364 = vrot.slane %v4360, 1
    %v4365 = vsel %vm4294, %v4364, %v4296
    %v4366 = vrot.slane %v4361, 1
    %v4367 = vsel %vm4294, %v4324, %v4366
    %v4371 = vadd.f32 %v4243, %v4365
    %v4372 = vadd.f32 %v4244, %v4299
    %v4373 = vadd.f32 %v4245, %v4301
    %v4374 = vadd.f32 %v4246, %v4303
    %v4375 = vadd.f32 %v4247, %v4305
    %v4376 = vadd.f32 %v4248, %v4307
    %v4377 = vadd.f32 %v4249, %v4309
    %v4378 = vadd.f32 %v4250, %v4311
    %v4379 = vadd.f32 %v4251, %v4313
    %v4380 = vadd.f32 %v4252, %v4315
    %v4381 = vadd.f32 %v4253, %v4317
    %v4382 = vadd.f32 %v4254, %v4319
    %v4383 = vadd.f32 %v4255, %v4321
    %v4384 = vadd.f32 %v4256, %v4323
    %v4385 = vadd.f32 %v4257, %v4325
    %v4386 = vadd.f32 %v4258, %v4367
    %v4387 = vadd.f32 %v4259, %v4366
    %v4388 = vld [vmem:[#allocation4 + $0x88] sm:$0xf8]
    %v4389 = vld [vmem:[#allocation4 + $0xf0] sm:$0xff]
    %v4390 = vld [vmem:[#allocation4 + $0x158] sm:$0xff]
    %v4391 = vld [vmem:[#allocation4 + $0x1c0] sm:$0xff]
    %v4392 = vld [vmem:[#allocation4 + $0x228] sm:$0xff]
    %v4393 = vld [vmem:[#allocation4 + $0x290] sm:$0xff]
    %v4394 = vld [vmem:[#allocation4 + $0x2f8] sm:$0xff]
    %v4395 = vld [vmem:[#allocation4 + $0x360] sm:$0xff]
    %v4396 = vld [vmem:[#allocation4 + $0x3c8] sm:$0xff]
    %v4397 = vld [vmem:[#allocation4 + $0x430] sm:$0xff]
    %v4398 = vld [vmem:[#allocation4 + $0x498] sm:$0xff]
    %v4399 = vld [vmem:[#allocation4 + $0x500] sm:$0xff]
    %v4400 = vld [vmem:[#allocation4 + $0x568] sm:$0xff]
    %v4401 = vld [vmem:[#allocation4 + $0x5d0] sm:$0xff]
    %v4402 = vld [vmem:[#allocation4 + $0x638] sm:$0xff]
    %v4403 = vld [vmem:[#allocation4 + $0x6a0] sm:$0xff]
    %v4404 = vld [vmem:[#allocation4 + $0x708] sm:$0x7]
    %vm4422 = vcmask 1044480
    %v4423 = vrot.slane %v4388, 3
    %v4424 = vrot.slane %v4389, 3
    %v4425 = vsel %vm4422, %v4423, %v4424
    %v4426 = vrot.slane %v4390, 3
    %v4427 = vsel %vm4422, %v4424, %v4426
    %v4428 = vrot.slane %v4391, 3
    %v4429 = vsel %vm4422, %v4426, %v4428
    %v4430 = vrot.slane %v4392, 3
    %v4431 = vsel %vm4422, %v4428, %v4430
    %v4432 = vrot.slane %v4393, 3
    %v4433 = vsel %vm4422, %v4430, %v4432
    %v4434 = vrot.slane %v4394, 3
    %v4435 = vsel %vm4422, %v4432, %v4434
    %v4436 = vrot.slane %v4395, 3
    %v4437 = vsel %vm4422, %v4434, %v4436
    %v4438 = vrot.slane %v4396, 3
    %v4439 = vsel %vm4422, %v4436, %v4438
    %v4440 = vrot.slane %v4397, 3
    %v4441 = vsel %vm4422, %v4438, %v4440
    %v4442 = vrot.slane %v4398, 3
    %v4443 = vsel %vm4422, %v4440, %v4442
    %v4444 = vrot.slane %v4399, 3
    %v4445 = vsel %vm4422, %v4442, %v4444
    %v4446 = vrot.slane %v4400, 3
    %v4447 = vsel %vm4422, %v4444, %v4446
    %v4448 = vrot.slane %v4401, 3
    %v4449 = vsel %vm4422, %v4446, %v4448
    %v4450 = vrot.slane %v4402, 3
    %v4451 = vsel %vm4422, %v4448, %v4450
    %v4452 = vrot.slane %v4403, 3
    %v4453 = vsel %vm4422, %v4450, %v4452
    %v4454 = vrot.slane %v4404, 3
    %v4455 = vsel %vm4422, %v4452, %v4454
    %v4472 = vadd.f32 %v4344, %v4425
    %v4473 = vadd.f32 %v4345, %v4427
    %v4474 = vadd.f32 %v4346, %v4429
    %v4475 = vadd.f32 %v4347, %v4431
    %v4476 = vadd.f32 %v4348, %v4433
    %v4477 = vadd.f32 %v4349, %v4435
    %v4478 = vadd.f32 %v4350, %v4437
    %v4479 = vadd.f32 %v4351, %v4439
    %v4480 = vadd.f32 %v4352, %v4441
    %v4481 = vadd.f32 %v4353, %v4443
    %v4482 = vadd.f32 %v4354, %v4445
    %v4483 = vadd.f32 %v4355, %v4447
    %v4484 = vadd.f32 %v4356, %v4449
    %v4485 = vadd.f32 %v4357, %v4451
    %v4486 = vadd.f32 %v4358, %v4453
    %v4487 = vadd.f32 %v4359, %v4455
    %v4488 = vld [vmem:[#allocation4 + $0x88] sm:$0xf0]
    %v4489 = vld [vmem:[#allocation4 + $0x708] sm:$0xf]
    %v4492 = vrot.slane %v4488, 3
    %v4493 = vsel %vm4422, %v4492, %v4424
    %v4494 = vrot.slane %v4489, 3
    %v4495 = vsel %vm4422, %v4452, %v4494
    %v4499 = vadd.f32 %v4371, %v4493
    %v4500 = vadd.f32 %v4372, %v4427
    %v4501 = vadd.f32 %v4373, %v4429
    %v4502 = vadd.f32 %v4374, %v4431
    %v4503 = vadd.f32 %v4375, %v4433
    %v4504 = vadd.f32 %v4376, %v4435
    %v4505 = vadd.f32 %v4377, %v4437
    %v4506 = vadd.f32 %v4378, %v4439
    %v4507 = vadd.f32 %v4379, %v4441
    %v4508 = vadd.f32 %v4380, %v4443
    %v4509 = vadd.f32 %v4381, %v4445
    %v4510 = vadd.f32 %v4382, %v4447
    %v4511 = vadd.f32 %v4383, %v4449
    %v4512 = vadd.f32 %v4384, %v4451
    %v4513 = vadd.f32 %v4385, %v4453
    %v4514 = vadd.f32 %v4386, %v4495
    %v4515 = vadd.f32 %v4387, %v4494
    %v4516 = vld [vmem:[#allocation4 + $0xf8] sm:$0xff]
    %v4517 = vld [vmem:[#allocation4 + $0x160] sm:$0xff]
    %v4518 = vld [vmem:[#allocation4 + $0x1c8] sm:$0xff]
    %v4519 = vld [vmem:[#allocation4 + $0x230] sm:$0xff]
    %v4520 = vld [vmem:[#allocation4 + $0x298] sm:$0xff]
    %v4521 = vld [vmem:[#allocation4 + $0x300] sm:$0xff]
    %v4522 = vld [vmem:[#allocation4 + $0x368] sm:$0xff]
    %v4523 = vld [vmem:[#allocation4 + $0x3d0] sm:$0xff]
    %v4524 = vld [vmem:[#allocation4 + $0x438] sm:$0xff]
    %v4525 = vld [vmem:[#allocation4 + $0x4a0] sm:$0xff]
    %v4526 = vld [vmem:[#allocation4 + $0x508] sm:$0xff]
    %v4527 = vld [vmem:[#allocation4 + $0x570] sm:$0xff]
    %v4528 = vld [vmem:[#allocation4 + $0x5d8] sm:$0xff]
    %v4529 = vld [vmem:[#allocation4 + $0x640] sm:$0xff]
    %v4530 = vld [vmem:[#allocation4 + $0x6a8] sm:$0xff]
    %v4531 = vld [vmem:[#allocation4 + $0x710] sm:$0xff]
    %v4532 = vadd.f32 %v4472, %v4516
    %v4533 = vadd.f32 %v4473, %v4517
    %v4534 = vadd.f32 %v4474, %v4518
    %v4535 = vadd.f32 %v4475, %v4519
    %v4536 = vadd.f32 %v4476, %v4520
    %v4537 = vadd.f32 %v4477, %v4521
    %v4538 = vadd.f32 %v4478, %v4522
    %v4539 = vadd.f32 %v4479, %v4523
    %v4540 = vadd.f32 %v4480, %v4524
    %v4541 = vadd.f32 %v4481, %v4525
    %v4542 = vadd.f32 %v4482, %v4526
    %v4543 = vadd.f32 %v4483, %v4527
    %v4544 = vadd.f32 %v4484, %v4528
    %v4545 = vadd.f32 %v4485, %v4529
    %v4546 = vadd.f32 %v4486, %v4530
    %v4547 = vadd.f32 %v4487, %v4531
    %v4548 = vld [vmem:[#allocation4 + $0xf8] sm:$0xfe]
    %v4549 = vld [vmem:[#allocation4 + $0x778] sm:$0x1]
    %v4550 = vadd.f32 %v4499, %v4548
    %v4551 = vadd.f32 %v4500, %v4517
    %v4552 = vadd.f32 %v4501, %v4518
    %v4553 = vadd.f32 %v4502, %v4519
    %v4554 = vadd.f32 %v4503, %v4520
    %v4555 = vadd.f32 %v4504, %v4521
    %v4556 = vadd.f32 %v4505, %v4522
    %v4557 = vadd.f32 %v4506, %v4523
    %v4558 = vadd.f32 %v4507, %v4524
    %v4559 = vadd.f32 %v4508, %v4525
    %v4560 = vadd.f32 %v4509, %v4526
    %v4561 = vadd.f32 %v4510, %v4527
    %v4562 = vadd.f32 %v4511, %v4528
    %v4563 = vadd.f32 %v4512, %v4529
    %v4564 = vadd.f32 %v4513, %v4530
    %v4565 = vadd.f32 %v4514, %v4531
    %v4566 = vadd.f32 %v4515, %v4549
    %v4567 = vld [vmem:[#allocation4 + $0x100] sm:$0xfc]
    %v4568 = vld [vmem:[#allocation4 + $0x168] sm:$0xff]
    %v4569 = vld [vmem:[#allocation4 + $0x1d0] sm:$0xff]
    %v4570 = vld [vmem:[#allocation4 + $0x238] sm:$0xff]
    %v4571 = vld [vmem:[#allocation4 + $0x2a0] sm:$0xff]
    %v4572 = vld [vmem:[#allocation4 + $0x308] sm:$0xff]
    %v4573 = vld [vmem:[#allocation4 + $0x370] sm:$0xff]
    %v4574 = vld [vmem:[#allocation4 + $0x3d8] sm:$0xff]
    %v4575 = vld [vmem:[#allocation4 + $0x440] sm:$0xff]
    %v4576 = vld [vmem:[#allocation4 + $0x4a8] sm:$0xff]
    %v4577 = vld [vmem:[#allocation4 + $0x510] sm:$0xff]
    %v4578 = vld [vmem:[#allocation4 + $0x578] sm:$0xff]
    %v4579 = vld [vmem:[#allocation4 + $0x5e0] sm:$0xff]
    %v4580 = vld [vmem:[#allocation4 + $0x648] sm:$0xff]
    %v4581 = vld [vmem:[#allocation4 + $0x6b0] sm:$0xff]
    %v4582 = vld [vmem:[#allocation4 + $0x718] sm:$0xff]
    %v4583 = vld [vmem:[#allocation4 + $0x780] sm:$0x3]
    %v4601 = vrot.slane %v4567, 2
    %v4602 = vrot.slane %v4568, 2
    %v4603 = vsel %vm4012, %v4601, %v4602
    %v4604 = vrot.slane %v4569, 2
    %v4605 = vsel %vm4012, %v4602, %v4604
    %v4606 = vrot.slane %v4570, 2
    %v4607 = vsel %vm4012, %v4604, %v4606
    %v4608 = vrot.slane %v4571, 2
    %v4609 = vsel %vm4012, %v4606, %v4608
    %v4610 = vrot.slane %v4572, 2
    %v4611 = vsel %vm4012, %v4608, %v4610
    %v4612 = vrot.slane %v4573, 2
    %v4613 = vsel %vm4012, %v4610, %v4612
    %v4614 = vrot.slane %v4574, 2
    %v4615 = vsel %vm4012, %v4612, %v4614
    %v4616 = vrot.slane %v4575, 2
    %v4617 = vsel %vm4012, %v4614, %v4616
    %v4618 = vrot.slane %v4576, 2
    %v4619 = vsel %vm4012, %v4616, %v4618
    %v4620 = vrot.slane %v4577, 2
    %v4621 = vsel %vm4012, %v4618, %v4620
    %v4622 = vrot.slane %v4578, 2
    %v4623 = vsel %vm4012, %v4620, %v4622
    %v4624 = vrot.slane %v4579, 2
    %v4625 = vsel %vm4012, %v4622, %v4624
    %v4626 = vrot.slane %v4580, 2
    %v4627 = vsel %vm4012, %v4624, %v4626
    %v4628 = vrot.slane %v4581, 2
    %v4629 = vsel %vm4012, %v4626, %v4628
    %v4630 = vrot.slane %v4582, 2
    %v4631 = vsel %vm4012, %v4628, %v4630
    %v4632 = vrot.slane %v4583, 2
    %v4633 = vsel %vm4012, %v4630, %v4632
    %v4650 = vadd.f32 %v4532, %v4603
    %v4651 = vadd.f32 %v4533, %v4605
    %v4652 = vadd.f32 %v4534, %v4607
    %v4653 = vadd.f32 %v4535, %v4609
    %v4654 = vadd.f32 %v4536, %v4611
    %v4655 = vadd.f32 %v4537, %v4613
    %v4656 = vadd.f32 %v4538, %v4615
    %v4657 = vadd.f32 %v4539, %v4617
    %v4658 = vadd.f32 %v4540, %v4619
    %v4659 = vadd.f32 %v4541, %v4621
    %v4660 = vadd.f32 %v4542, %v4623
    %v4661 = vadd.f32 %v4543, %v4625
    %v4662 = vadd.f32 %v4544, %v4627
    %v4663 = vadd.f32 %v4545, %v4629
    %v4664 = vadd.f32 %v4546, %v4631
    %v4665 = vadd.f32 %v4547, %v4633
    %v4666 = vld [vmem:[#allocation4 + $0x100] sm:$0xf8]
    %v4667 = vld [vmem:[#allocation4 + $0x780] sm:$0x7]
    %v4670 = vrot.slane %v4666, 2
    %v4671 = vsel %vm4012, %v4670, %v4602
    %v4672 = vrot.slane %v4667, 2
    %v4673 = vsel %vm4012, %v4630, %v4672
    %v4677 = vadd.f32 %v4550, %v4671
    %v4678 = vadd.f32 %v4551, %v4605
    %v4679 = vadd.f32 %v4552, %v4607
    %v4680 = vadd.f32 %v4553, %v4609
    %v4681 = vadd.f32 %v4554, %v4611
    %v4682 = vadd.f32 %v4555, %v4613
    %v4683 = vadd.f32 %v4556, %v4615
    %v4684 = vadd.f32 %v4557, %v4617
    %v4685 = vadd.f32 %v4558, %v4619
    %v4686 = vadd.f32 %v4559, %v4621
    %v4687 = vadd.f32 %v4560, %v4623
    %v4688 = vadd.f32 %v4561, %v4625
    %v4689 = vadd.f32 %v4562, %v4627
    %v4690 = vadd.f32 %v4563, %v4629
    %v4691 = vadd.f32 %v4564, %v4631
    %v4692 = vadd.f32 %v4565, %v4673
    %v4693 = vadd.f32 %v4566, %v4672
    %v4694 = vld [vmem:[#allocation4 + $0x108] sm:$0xf0]
    %v4695 = vld [vmem:[#allocation4 + $0x170] sm:$0xff]
    %v4696 = vld [vmem:[#allocation4 + $0x1d8] sm:$0xff]
    %v4697 = vld [vmem:[#allocation4 + $0x240] sm:$0xff]
    %v4698 = vld [vmem:[#allocation4 + $0x2a8] sm:$0xff]
    %v4699 = vld [vmem:[#allocation4 + $0x310] sm:$0xff]
    %v4700 = vld [vmem:[#allocation4 + $0x378] sm:$0xff]
    %v4701 = vld [vmem:[#allocation4 + $0x3e0] sm:$0xff]
    %v4702 = vld [vmem:[#allocation4 + $0x448] sm:$0xff]
    %v4703 = vld [vmem:[#allocation4 + $0x4b0] sm:$0xff]
    %v4704 = vld [vmem:[#allocation4 + $0x518] sm:$0xff]
    %v4705 = vld [vmem:[#allocation4 + $0x580] sm:$0xff]
    %v4706 = vld [vmem:[#allocation4 + $0x5e8] sm:$0xff]
    %v4707 = vld [vmem:[#allocation4 + $0x650] sm:$0xff]
    %v4708 = vld [vmem:[#allocation4 + $0x6b8] sm:$0xff]
    %v4709 = vld [vmem:[#allocation4 + $0x720] sm:$0xff]
    %v4710 = vld [vmem:[#allocation4 + $0x788] sm:$0xf]
    %v4728 = vrot.slane %v4694, 4
    %v4729 = vrot.slane %v4695, 4
    %v4730 = vsel %vm4126, %v4728, %v4729
    %v4731 = vrot.slane %v4696, 4
    %v4732 = vsel %vm4126, %v4729, %v4731
    %v4733 = vrot.slane %v4697, 4
    %v4734 = vsel %vm4126, %v4731, %v4733
    %v4735 = vrot.slane %v4698, 4
    %v4736 = vsel %vm4126, %v4733, %v4735
    %v4737 = vrot.slane %v4699, 4
    %v4738 = vsel %vm4126, %v4735, %v4737
    %v4739 = vrot.slane %v4700, 4
    %v4740 = vsel %vm4126, %v4737, %v4739
    %v4741 = vrot.slane %v4701, 4
    %v4742 = vsel %vm4126, %v4739, %v4741
    %v4743 = vrot.slane %v4702, 4
    %v4744 = vsel %vm4126, %v4741, %v4743
    %v4745 = vrot.slane %v4703, 4
    %v4746 = vsel %vm4126, %v4743, %v4745
    %v4747 = vrot.slane %v4704, 4
    %v4748 = vsel %vm4126, %v4745, %v4747
    %v4749 = vrot.slane %v4705, 4
    %v4750 = vsel %vm4126, %v4747, %v4749
    %v4751 = vrot.slane %v4706, 4
    %v4752 = vsel %vm4126, %v4749, %v4751
    %v4753 = vrot.slane %v4707, 4
    %v4754 = vsel %vm4126, %v4751, %v4753
    %v4755 = vrot.slane %v4708, 4
    %v4756 = vsel %vm4126, %v4753, %v4755
    %v4757 = vrot.slane %v4709, 4
    %v4758 = vsel %vm4126, %v4755, %v4757
    %v4759 = vrot.slane %v4710, 4
    %v4760 = vsel %vm4126, %v4757, %v4759
    %v4777 = vadd.f32 %v4650, %v4730
    %v4778 = vadd.f32 %v4651, %v4732
    %v4779 = vadd.f32 %v4652, %v4734
    %v4780 = vadd.f32 %v4653, %v4736
    %v4781 = vadd.f32 %v4654, %v4738
    %v4782 = vadd.f32 %v4655, %v4740
    %v4783 = vadd.f32 %v4656, %v4742
    %v4784 = vadd.f32 %v4657, %v4744
    %v4785 = vadd.f32 %v4658, %v4746
    %v4786 = vadd.f32 %v4659, %v4748
    %v4787 = vadd.f32 %v4660, %v4750
    %v4788 = vadd.f32 %v4661, %v4752
    %v4789 = vadd.f32 %v4662, %v4754
    %v4790 = vadd.f32 %v4663, %v4756
    %v4791 = vadd.f32 %v4664, %v4758
    %v4792 = vadd.f32 %v4665, %v4760
    %v4793 = vld [vmem:[#allocation4 + $0x788] sm:$0xff]
    %v4795 = vrot.slane %v4695, 7
    %v4796 = vrot.slane %v4696, 7
    %v4797 = vsel %vm4194, %v4795, %v4796
    %v4798 = vrot.slane %v4697, 7
    %v4799 = vsel %vm4194, %v4796, %v4798
    %v4800 = vrot.slane %v4698, 7
    %v4801 = vsel %vm4194, %v4798, %v4800
    %v4802 = vrot.slane %v4699, 7
    %v4803 = vsel %vm4194, %v4800, %v4802
    %v4804 = vrot.slane %v4700, 7
    %v4805 = vsel %vm4194, %v4802, %v4804
    %v4806 = vrot.slane %v4701, 7
    %v4807 = vsel %vm4194, %v4804, %v4806
    %v4808 = vrot.slane %v4702, 7
    %v4809 = vsel %vm4194, %v4806, %v4808
    %v4810 = vrot.slane %v4703, 7
    %v4811 = vsel %vm4194, %v4808, %v4810
    %v4812 = vrot.slane %v4704, 7
    %v4813 = vsel %vm4194, %v4810, %v4812
    %v4814 = vrot.slane %v4705, 7
    %v4815 = vsel %vm4194, %v4812, %v4814
    %v4816 = vrot.slane %v4706, 7
    %v4817 = vsel %vm4194, %v4814, %v4816
    %v4818 = vrot.slane %v4707, 7
    %v4819 = vsel %vm4194, %v4816, %v4818
    %v4820 = vrot.slane %v4708, 7
    %v4821 = vsel %vm4194, %v4818, %v4820
    %v4822 = vrot.slane %v4709, 7
    %v4823 = vsel %vm4194, %v4820, %v4822
    %v4824 = vrot.slane %v4793, 7
    %v4825 = vsel %vm4194, %v4822, %v4824
    %v4843 = vadd.f32 %v4677, %v4795
    %v4844 = vadd.f32 %v4678, %v4797
    %v4845 = vadd.f32 %v4679, %v4799
    %v4846 = vadd.f32 %v4680, %v4801
    %v4847 = vadd.f32 %v4681, %v4803
    %v4848 = vadd.f32 %v4682, %v4805
    %v4849 = vadd.f32 %v4683, %v4807
    %v4850 = vadd.f32 %v4684, %v4809
    %v4851 = vadd.f32 %v4685, %v4811
    %v4852 = vadd.f32 %v4686, %v4813
    %v4853 = vadd.f32 %v4687, %v4815
    %v4854 = vadd.f32 %v4688, %v4817
    %v4855 = vadd.f32 %v4689, %v4819
    %v4856 = vadd.f32 %v4690, %v4821
    %v4857 = vadd.f32 %v4691, %v4823
    %v4858 = vadd.f32 %v4692, %v4825
    %v4859 = vadd.f32 %v4693, %v4824
    %v4860 = vld [vmem:[#allocation4 + $0x178] sm:$0xfe]
    %v4861 = vld [vmem:[#allocation4 + $0x1e0] sm:$0xff]
    %v4862 = vld [vmem:[#allocation4 + $0x248] sm:$0xff]
    %v4863 = vld [vmem:[#allocation4 + $0x2b0] sm:$0xff]
    %v4864 = vld [vmem:[#allocation4 + $0x318] sm:$0xff]
    %v4865 = vld [vmem:[#allocation4 + $0x380] sm:$0xff]
    %v4866 = vld [vmem:[#allocation4 + $0x3e8] sm:$0xff]
    %v4867 = vld [vmem:[#allocation4 + $0x450] sm:$0xff]
    %v4868 = vld [vmem:[#allocation4 + $0x4b8] sm:$0xff]
    %v4869 = vld [vmem:[#allocation4 + $0x520] sm:$0xff]
    %v4870 = vld [vmem:[#allocation4 + $0x588] sm:$0xff]
    %v4871 = vld [vmem:[#allocation4 + $0x5f0] sm:$0xff]
    %v4872 = vld [vmem:[#allocation4 + $0x658] sm:$0xff]
    %v4873 = vld [vmem:[#allocation4 + $0x6c0] sm:$0xff]
    %v4874 = vld [vmem:[#allocation4 + $0x728] sm:$0xff]
    %v4875 = vld [vmem:[#allocation4 + $0x790] sm:$0xff]
    %v4876 = vld [vmem:[#allocation4 + $0x7f8] sm:$0x1]
    %v4894 = vrot.slane %v4860, 1
    %v4895 = vrot.slane %v4861, 1
    %v4896 = vsel %vm4294, %v4894, %v4895
    %v4897 = vrot.slane %v4862, 1
    %v4898 = vsel %vm4294, %v4895, %v4897
    %v4899 = vrot.slane %v4863, 1
    %v4900 = vsel %vm4294, %v4897, %v4899
    %v4901 = vrot.slane %v4864, 1
    %v4902 = vsel %vm4294, %v4899, %v4901
    %v4903 = vrot.slane %v4865, 1
    %v4904 = vsel %vm4294, %v4901, %v4903
    %v4905 = vrot.slane %v4866, 1
    %v4906 = vsel %vm4294, %v4903, %v4905
    %v4907 = vrot.slane %v4867, 1
    %v4908 = vsel %vm4294, %v4905, %v4907
    %v4909 = vrot.slane %v4868, 1
    %v4910 = vsel %vm4294, %v4907, %v4909
    %v4911 = vrot.slane %v4869, 1
    %v4912 = vsel %vm4294, %v4909, %v4911
    %v4913 = vrot.slane %v4870, 1
    %v4914 = vsel %vm4294, %v4911, %v4913
    %v4915 = vrot.slane %v4871, 1
    %v4916 = vsel %vm4294, %v4913, %v4915
    %v4917 = vrot.slane %v4872, 1
    %v4918 = vsel %vm4294, %v4915, %v4917
    %v4919 = vrot.slane %v4873, 1
    %v4920 = vsel %vm4294, %v4917, %v4919
    %v4921 = vrot.slane %v4874, 1
    %v4922 = vsel %vm4294, %v4919, %v4921
    %v4923 = vrot.slane %v4875, 1
    %v4924 = vsel %vm4294, %v4921, %v4923
    %v4925 = vrot.slane %v4876, 1
    %v4926 = vsel %vm4294, %v4923, %v4925
    %v4943 = vadd.f32 %v4777, %v4896
    %v4944 = vadd.f32 %v4778, %v4898
    %v4945 = vadd.f32 %v4779, %v4900
    %v4946 = vadd.f32 %v4780, %v4902
    %v4947 = vadd.f32 %v4781, %v4904
    %v4948 = vadd.f32 %v4782, %v4906
    %v4949 = vadd.f32 %v4783, %v4908
    %v4950 = vadd.f32 %v4784, %v4910
    %v4951 = vadd.f32 %v4785, %v4912
    %v4952 = vadd.f32 %v4786, %v4914
    %v4953 = vadd.f32 %v4787, %v4916
    %v4954 = vadd.f32 %v4788, %v4918
    %v4955 = vadd.f32 %v4789, %v4920
    %v4956 = vadd.f32 %v4790, %v4922
    %v4957 = vadd.f32 %v4791, %v4924
    %v4958 = vadd.f32 %v4792, %v4926
    %v4959 = vld [vmem:[#allocation4 + $0x178] sm:$0xfc]
    %v4960 = vld [vmem:[#allocation4 + $0x7f8] sm:$0x3]
    %v4963 = vrot.slane %v4959, 1
    %v4964 = vsel %vm4294, %v4963, %v4895
    %v4965 = vrot.slane %v4960, 1
    %v4966 = vsel %vm4294, %v4923, %v4965
    %v4970 = vadd.f32 %v4843, %v4964
    %v4971 = vadd.f32 %v4844, %v4898
    %v4972 = vadd.f32 %v4845, %v4900
    %v4973 = vadd.f32 %v4846, %v4902
    %v4974 = vadd.f32 %v4847, %v4904
    %v4975 = vadd.f32 %v4848, %v4906
    %v4976 = vadd.f32 %v4849, %v4908
    %v4977 = vadd.f32 %v4850, %v4910
    %v4978 = vadd.f32 %v4851, %v4912
    %v4979 = vadd.f32 %v4852, %v4914
    %v4980 = vadd.f32 %v4853, %v4916
    %v4981 = vadd.f32 %v4854, %v4918
    %v4982 = vadd.f32 %v4855, %v4920
    %v4983 = vadd.f32 %v4856, %v4922
    %v4984 = vadd.f32 %v4857, %v4924
    %v4985 = vadd.f32 %v4858, %v4966
    %v4986 = vadd.f32 %v4859, %v4965
    %v4987 = vld [vmem:[#allocation4 + $0x180] sm:$0xf8]
    %v4988 = vld [vmem:[#allocation4 + $0x1e8] sm:$0xff]
    %v4989 = vld [vmem:[#allocation4 + $0x250] sm:$0xff]
    %v4990 = vld [vmem:[#allocation4 + $0x2b8] sm:$0xff]
    %v4991 = vld [vmem:[#allocation4 + $0x320] sm:$0xff]
    %v4992 = vld [vmem:[#allocation4 + $0x388] sm:$0xff]
    %v4993 = vld [vmem:[#allocation4 + $0x3f0] sm:$0xff]
    %v4994 = vld [vmem:[#allocation4 + $0x458] sm:$0xff]
    %v4995 = vld [vmem:[#allocation4 + $0x4c0] sm:$0xff]
    %v4996 = vld [vmem:[#allocation4 + $0x528] sm:$0xff]
    %v4997 = vld [vmem:[#allocation4 + $0x590] sm:$0xff]
    %v4998 = vld [vmem:[#allocation4 + $0x5f8] sm:$0xff]
    %v4999 = vld [vmem:[#allocation4 + $0x660] sm:$0xff]
    %v5000 = vld [vmem:[#allocation4 + $0x6c8] sm:$0xff]
    %v5001 = vld [vmem:[#allocation4 + $0x730] sm:$0xff]
    %v5002 = vld [vmem:[#allocation4 + $0x798] sm:$0xff]
    %v5003 = vld [vmem:[#allocation4 + $0x800] sm:$0x7]
    %v5021 = vrot.slane %v4987, 3
    %v5022 = vrot.slane %v4988, 3
    %v5023 = vsel %vm4422, %v5021, %v5022
    %v5024 = vrot.slane %v4989, 3
    %v5025 = vsel %vm4422, %v5022, %v5024
    %v5026 = vrot.slane %v4990, 3
    %v5027 = vsel %vm4422, %v5024, %v5026
    %v5028 = vrot.slane %v4991, 3
    %v5029 = vsel %vm4422, %v5026, %v5028
    %v5030 = vrot.slane %v4992, 3
    %v5031 = vsel %vm4422, %v5028, %v5030
    %v5032 = vrot.slane %v4993, 3
    %v5033 = vsel %vm4422, %v5030, %v5032
    %v5034 = vrot.slane %v4994, 3
    %v5035 = vsel %vm4422, %v5032, %v5034
    %v5036 = vrot.slane %v4995, 3
    %v5037 = vsel %vm4422, %v5034, %v5036
    %v5038 = vrot.slane %v4996, 3
    %v5039 = vsel %vm4422, %v5036, %v5038
    %v5040 = vrot.slane %v4997, 3
    %v5041 = vsel %vm4422, %v5038, %v5040
    %v5042 = vrot.slane %v4998, 3
    %v5043 = vsel %vm4422, %v5040, %v5042
    %v5044 = vrot.slane %v4999, 3
    %v5045 = vsel %vm4422, %v5042, %v5044
    %v5046 = vrot.slane %v5000, 3
    %v5047 = vsel %vm4422, %v5044, %v5046
    %v5048 = vrot.slane %v5001, 3
    %v5049 = vsel %vm4422, %v5046, %v5048
    %v5050 = vrot.slane %v5002, 3
    %v5051 = vsel %vm4422, %v5048, %v5050
    %v5052 = vrot.slane %v5003, 3
    %v5053 = vsel %vm4422, %v5050, %v5052
    %v5070 = vadd.f32 %v4943, %v5023
    %v5071 = vadd.f32 %v4944, %v5025
    %v5072 = vadd.f32 %v4945, %v5027
    %v5073 = vadd.f32 %v4946, %v5029
    %v5074 = vadd.f32 %v4947, %v5031
    %v5075 = vadd.f32 %v4948, %v5033
    %v5076 = vadd.f32 %v4949, %v5035
    %v5077 = vadd.f32 %v4950, %v5037
    %v5078 = vadd.f32 %v4951, %v5039
    %v5079 = vadd.f32 %v4952, %v5041
    %v5080 = vadd.f32 %v4953, %v5043
    %v5081 = vadd.f32 %v4954, %v5045
    %v5082 = vadd.f32 %v4955, %v5047
    %v5083 = vadd.f32 %v4956, %v5049
    %v5084 = vadd.f32 %v4957, %v5051
    %v5085 = vadd.f32 %v4958, %v5053
    %v5086 = vld [vmem:[#allocation4 + $0x180] sm:$0xf0]
    %v5087 = vld [vmem:[#allocation4 + $0x800] sm:$0xf]
    %v5090 = vrot.slane %v5086, 3
    %v5091 = vsel %vm4422, %v5090, %v5022
    %v5092 = vrot.slane %v5087, 3
    %v5093 = vsel %vm4422, %v5050, %v5092
    %v5097 = vadd.f32 %v4970, %v5091
    %v5098 = vadd.f32 %v4971, %v5025
    %v5099 = vadd.f32 %v4972, %v5027
    %v5100 = vadd.f32 %v4973, %v5029
    %v5101 = vadd.f32 %v4974, %v5031
    %v5102 = vadd.f32 %v4975, %v5033
    %v5103 = vadd.f32 %v4976, %v5035
    %v5104 = vadd.f32 %v4977, %v5037
    %v5105 = vadd.f32 %v4978, %v5039
    %v5106 = vadd.f32 %v4979, %v5041
    %v5107 = vadd.f32 %v4980, %v5043
    %v5108 = vadd.f32 %v4981, %v5045
    %v5109 = vadd.f32 %v4982, %v5047
    %v5110 = vadd.f32 %v4983, %v5049
    %v5111 = vadd.f32 %v4984, %v5051
    %v5112 = vadd.f32 %v4985, %v5093
    %v5113 = vadd.f32 %v4986, %v5092
    %v5114 = vld [vmem:[#allocation4 + $0x1f0] sm:$0xff]
    %v5115 = vld [vmem:[#allocation4 + $0x258] sm:$0xff]
    %v5116 = vld [vmem:[#allocation4 + $0x2c0] sm:$0xff]
    %v5117 = vld [vmem:[#allocation4 + $0x328] sm:$0xff]
    %v5118 = vld [vmem:[#allocation4 + $0x390] sm:$0xff]
    %v5119 = vld [vmem:[#allocation4 + $0x3f8] sm:$0xff]
    %v5120 = vld [vmem:[#allocation4 + $0x460] sm:$0xff]
    %v5121 = vld [vmem:[#allocation4 + $0x4c8] sm:$0xff]
    %v5122 = vld [vmem:[#allocation4 + $0x530] sm:$0xff]
    %v5123 = vld [vmem:[#allocation4 + $0x598] sm:$0xff]
    %v5124 = vld [vmem:[#allocation4 + $0x600] sm:$0xff]
    %v5125 = vld [vmem:[#allocation4 + $0x668] sm:$0xff]
    %v5126 = vld [vmem:[#allocation4 + $0x6d0] sm:$0xff]
    %v5127 = vld [vmem:[#allocation4 + $0x738] sm:$0xff]
    %v5128 = vld [vmem:[#allocation4 + $0x7a0] sm:$0xff]
    %v5129 = vld [vmem:[#allocation4 + $0x808] sm:$0xff]
    %v5130 = vadd.f32 %v5070, %v5114
    %v5131 = vadd.f32 %v5071, %v5115
    %v5132 = vadd.f32 %v5072, %v5116
    %v5133 = vadd.f32 %v5073, %v5117
    %v5134 = vadd.f32 %v5074, %v5118
    %v5135 = vadd.f32 %v5075, %v5119
    %v5136 = vadd.f32 %v5076, %v5120
    %v5137 = vadd.f32 %v5077, %v5121
    %v5138 = vadd.f32 %v5078, %v5122
    %v5139 = vadd.f32 %v5079, %v5123
    %v5140 = vadd.f32 %v5080, %v5124
    %v5141 = vadd.f32 %v5081, %v5125
    %v5142 = vadd.f32 %v5082, %v5126
    %v5143 = vadd.f32 %v5083, %v5127
    %v5144 = vadd.f32 %v5084, %v5128
    %v5145 = vadd.f32 %v5085, %v5129
    %v5146 = vld [vmem:[#allocation4 + $0x1f0] sm:$0xfe]
    %v5147 = vld [vmem:[#allocation4 + $0x870] sm:$0x1]
    %v5148 = vadd.f32 %v5097, %v5146
    %v5149 = vadd.f32 %v5098, %v5115
    %v5150 = vadd.f32 %v5099, %v5116
    %v5151 = vadd.f32 %v5100, %v5117
    %v5152 = vadd.f32 %v5101, %v5118
    %v5153 = vadd.f32 %v5102, %v5119
    %v5154 = vadd.f32 %v5103, %v5120
    %v5155 = vadd.f32 %v5104, %v5121
    %v5156 = vadd.f32 %v5105, %v5122
    %v5157 = vadd.f32 %v5106, %v5123
    %v5158 = vadd.f32 %v5107, %v5124
    %v5159 = vadd.f32 %v5108, %v5125
    %v5160 = vadd.f32 %v5109, %v5126
    %v5161 = vadd.f32 %v5110, %v5127
    %v5162 = vadd.f32 %v5111, %v5128
    %v5163 = vadd.f32 %v5112, %v5129
    %v5164 = vadd.f32 %v5113, %v5147
    %v5165 = vld [vmem:[#allocation4 + $0x1f8] sm:$0xfc]
    %v5166 = vld [vmem:[#allocation4 + $0x260] sm:$0xff]
    %v5167 = vld [vmem:[#allocation4 + $0x2c8] sm:$0xff]
    %v5168 = vld [vmem:[#allocation4 + $0x330] sm:$0xff]
    %v5169 = vld [vmem:[#allocation4 + $0x398] sm:$0xff]
    %v5170 = vld [vmem:[#allocation4 + $0x400] sm:$0xff]
    %v5171 = vld [vmem:[#allocation4 + $0x468] sm:$0xff]
    %v5172 = vld [vmem:[#allocation4 + $0x4d0] sm:$0xff]
    %v5173 = vld [vmem:[#allocation4 + $0x538] sm:$0xff]
    %v5174 = vld [vmem:[#allocation4 + $0x5a0] sm:$0xff]
    %v5175 = vld [vmem:[#allocation4 + $0x608] sm:$0xff]
    %v5176 = vld [vmem:[#allocation4 + $0x670] sm:$0xff]
    %v5177 = vld [vmem:[#allocation4 + $0x6d8] sm:$0xff]
    %v5178 = vld [vmem:[#allocation4 + $0x740] sm:$0xff]
    %v5179 = vld [vmem:[#allocation4 + $0x7a8] sm:$0xff]
    %v5180 = vld [vmem:[#allocation4 + $0x810] sm:$0xff]
    %v5181 = vld [vmem:[#allocation4 + $0x878] sm:$0x3]
    %v5199 = vrot.slane %v5165, 2
    %v5200 = vrot.slane %v5166, 2
    %v5201 = vsel %vm4012, %v5199, %v5200
    %v5202 = vrot.slane %v5167, 2
    %v5203 = vsel %vm4012, %v5200, %v5202
    %v5204 = vrot.slane %v5168, 2
    %v5205 = vsel %vm4012, %v5202, %v5204
    %v5206 = vrot.slane %v5169, 2
    %v5207 = vsel %vm4012, %v5204, %v5206
    %v5208 = vrot.slane %v5170, 2
    %v5209 = vsel %vm4012, %v5206, %v5208
    %v5210 = vrot.slane %v5171, 2
    %v5211 = vsel %vm4012, %v5208, %v5210
    %v5212 = vrot.slane %v5172, 2
    %v5213 = vsel %vm4012, %v5210, %v5212
    %v5214 = vrot.slane %v5173, 2
    %v5215 = vsel %vm4012, %v5212, %v5214
    %v5216 = vrot.slane %v5174, 2
    %v5217 = vsel %vm4012, %v5214, %v5216
    %v5218 = vrot.slane %v5175, 2
    %v5219 = vsel %vm4012, %v5216, %v5218
    %v5220 = vrot.slane %v5176, 2
    %v5221 = vsel %vm4012, %v5218, %v5220
    %v5222 = vrot.slane %v5177, 2
    %v5223 = vsel %vm4012, %v5220, %v5222
    %v5224 = vrot.slane %v5178, 2
    %v5225 = vsel %vm4012, %v5222, %v5224
    %v5226 = vrot.slane %v5179, 2
    %v5227 = vsel %vm4012, %v5224, %v5226
    %v5228 = vrot.slane %v5180, 2
    %v5229 = vsel %vm4012, %v5226, %v5228
    %v5230 = vrot.slane %v5181, 2
    %v5231 = vsel %vm4012, %v5228, %v5230
    %v5248 = vadd.f32 %v5130, %v5201
    %v5249 = vadd.f32 %v5131, %v5203
    %v5250 = vadd.f32 %v5132, %v5205
    %v5251 = vadd.f32 %v5133, %v5207
    %v5252 = vadd.f32 %v5134, %v5209
    %v5253 = vadd.f32 %v5135, %v5211
    %v5254 = vadd.f32 %v5136, %v5213
    %v5255 = vadd.f32 %v5137, %v5215
    %v5256 = vadd.f32 %v5138, %v5217
    %v5257 = vadd.f32 %v5139, %v5219
    %v5258 = vadd.f32 %v5140, %v5221
    %v5259 = vadd.f32 %v5141, %v5223
    %v5260 = vadd.f32 %v5142, %v5225
    %v5261 = vadd.f32 %v5143, %v5227
    %v5262 = vadd.f32 %v5144, %v5229
    %v5263 = vadd.f32 %v5145, %v5231
    %v5264 = vld [vmem:[#allocation4 + $0x1f8] sm:$0xf8]
    %v5265 = vld [vmem:[#allocation4 + $0x878] sm:$0x7]
    %v5268 = vrot.slane %v5264, 2
    %v5269 = vsel %vm4012, %v5268, %v5200
    %v5270 = vrot.slane %v5265, 2
    %v5271 = vsel %vm4012, %v5228, %v5270
    %v5275 = vadd.f32 %v5148, %v5269
    %v5276 = vadd.f32 %v5149, %v5203
    %v5277 = vadd.f32 %v5150, %v5205
    %v5278 = vadd.f32 %v5151, %v5207
    %v5279 = vadd.f32 %v5152, %v5209
    %v5280 = vadd.f32 %v5153, %v5211
    %v5281 = vadd.f32 %v5154, %v5213
    %v5282 = vadd.f32 %v5155, %v5215
    %v5283 = vadd.f32 %v5156, %v5217
    %v5284 = vadd.f32 %v5157, %v5219
    %v5285 = vadd.f32 %v5158, %v5221
    %v5286 = vadd.f32 %v5159, %v5223
    %v5287 = vadd.f32 %v5160, %v5225
    %v5288 = vadd.f32 %v5161, %v5227
    %v5289 = vadd.f32 %v5162, %v5229
    %v5290 = vadd.f32 %v5163, %v5271
    %v5291 = vadd.f32 %v5164, %v5270
    %v5292 = vld [vmem:[#allocation4 + $0x200] sm:$0xf0]
    %v5293 = vld [vmem:[#allocation4 + $0x268] sm:$0xff]
    %v5294 = vld [vmem:[#allocation4 + $0x2d0] sm:$0xff]
    %v5295 = vld [vmem:[#allocation4 + $0x338] sm:$0xff]
    %v5296 = vld [vmem:[#allocation4 + $0x3a0] sm:$0xff]
    %v5297 = vld [vmem:[#allocation4 + $0x408] sm:$0xff]
    %v5298 = vld [vmem:[#allocation4 + $0x470] sm:$0xff]
    %v5299 = vld [vmem:[#allocation4 + $0x4d8] sm:$0xff]
    %v5300 = vld [vmem:[#allocation4 + $0x540] sm:$0xff]
    %v5301 = vld [vmem:[#allocation4 + $0x5a8] sm:$0xff]
    %v5302 = vld [vmem:[#allocation4 + $0x610] sm:$0xff]
    %v5303 = vld [vmem:[#allocation4 + $0x678] sm:$0xff]
    %v5304 = vld [vmem:[#allocation4 + $0x6e0] sm:$0xff]
    %v5305 = vld [vmem:[#allocation4 + $0x748] sm:$0xff]
    %v5306 = vld [vmem:[#allocation4 + $0x7b0] sm:$0xff]
    %v5307 = vld [vmem:[#allocation4 + $0x818] sm:$0xff]
    %v5308 = vld [vmem:[#allocation4 + $0x880] sm:$0xf]
    %v5326 = vrot.slane %v5292, 4
    %v5327 = vrot.slane %v5293, 4
    %v5328 = vsel %vm4126, %v5326, %v5327
    %v5329 = vrot.slane %v5294, 4
    %v5330 = vsel %vm4126, %v5327, %v5329
    %v5331 = vrot.slane %v5295, 4
    %v5332 = vsel %vm4126, %v5329, %v5331
    %v5333 = vrot.slane %v5296, 4
    %v5334 = vsel %vm4126, %v5331, %v5333
    %v5335 = vrot.slane %v5297, 4
    %v5336 = vsel %vm4126, %v5333, %v5335
    %v5337 = vrot.slane %v5298, 4
    %v5338 = vsel %vm4126, %v5335, %v5337
    %v5339 = vrot.slane %v5299, 4
    %v5340 = vsel %vm4126, %v5337, %v5339
    %v5341 = vrot.slane %v5300, 4
    %v5342 = vsel %vm4126, %v5339, %v5341
    %v5343 = vrot.slane %v5301, 4
    %v5344 = vsel %vm4126, %v5341, %v5343
    %v5345 = vrot.slane %v5302, 4
    %v5346 = vsel %vm4126, %v5343, %v5345
    %v5347 = vrot.slane %v5303, 4
    %v5348 = vsel %vm4126, %v5345, %v5347
    %v5349 = vrot.slane %v5304, 4
    %v5350 = vsel %vm4126, %v5347, %v5349
    %v5351 = vrot.slane %v5305, 4
    %v5352 = vsel %vm4126, %v5349, %v5351
    %v5353 = vrot.slane %v5306, 4
    %v5354 = vsel %vm4126, %v5351, %v5353
    %v5355 = vrot.slane %v5307, 4
    %v5356 = vsel %vm4126, %v5353, %v5355
    %v5357 = vrot.slane %v5308, 4
    %v5358 = vsel %vm4126, %v5355, %v5357
    %v5375 = vadd.f32 %v5248, %v5328
    %v5376 = vadd.f32 %v5249, %v5330
    %v5377 = vadd.f32 %v5250, %v5332
    %v5378 = vadd.f32 %v5251, %v5334
    %v5379 = vadd.f32 %v5252, %v5336
    %v5380 = vadd.f32 %v5253, %v5338
    %v5381 = vadd.f32 %v5254, %v5340
    %v5382 = vadd.f32 %v5255, %v5342
    %v5383 = vadd.f32 %v5256, %v5344
    %v5384 = vadd.f32 %v5257, %v5346
    %v5385 = vadd.f32 %v5258, %v5348
    %v5386 = vadd.f32 %v5259, %v5350
    %v5387 = vadd.f32 %v5260, %v5352
    %v5388 = vadd.f32 %v5261, %v5354
    %v5389 = vadd.f32 %v5262, %v5356
    %v5390 = vadd.f32 %v5263, %v5358
    %v5408 = vrot.slane %v5275, 1
    %v5409 = vrot.slane %v5276, 1
    %v5410 = vsel %vm4294, %v5408, %v5409
    %v5411 = vrot.slane %v5277, 1
    %v5412 = vsel %vm4294, %v5409, %v5411
    %v5413 = vrot.slane %v5278, 1
    %v5414 = vsel %vm4294, %v5411, %v5413
    %v5415 = vrot.slane %v5279, 1
    %v5416 = vsel %vm4294, %v5413, %v5415
    %v5417 = vrot.slane %v5280, 1
    %v5418 = vsel %vm4294, %v5415, %v5417
    %v5419 = vrot.slane %v5281, 1
    %v5420 = vsel %vm4294, %v5417, %v5419
    %v5421 = vrot.slane %v5282, 1
    %v5422 = vsel %vm4294, %v5419, %v5421
    %v5423 = vrot.slane %v5283, 1
    %v5424 = vsel %vm4294, %v5421, %v5423
    %v5425 = vrot.slane %v5284, 1
    %v5426 = vsel %vm4294, %v5423, %v5425
    %v5427 = vrot.slane %v5285, 1
    %v5428 = vsel %vm4294, %v5425, %v5427
    %v5429 = vrot.slane %v5286, 1
    %v5430 = vsel %vm4294, %v5427, %v5429
    %v5431 = vrot.slane %v5287, 1
    %v5432 = vsel %vm4294, %v5429, %v5431
    %v5433 = vrot.slane %v5288, 1
    %v5434 = vsel %vm4294, %v5431, %v5433
    %v5435 = vrot.slane %v5289, 1
    %v5436 = vsel %vm4294, %v5433, %v5435
    %v5437 = vrot.slane %v5290, 1
    %v5438 = vsel %vm4294, %v5435, %v5437
    %v5439 = vrot.slane %v5291, 1
    %v5440 = vsel %vm4294, %v5437, %v5439
    %5457 = vrot.lane.b32.xlu0 %v5410, 64
    %v5458 = vpop.permute.xlu0 %5457
    %5459 = vrot.lane.b32.xlu0 %v5412, 64
    %v5460 = vpop.permute.xlu0 %5459
    %5461 = vrot.lane.b32.xlu0 %v5414, 64
    %v5462 = vpop.permute.xlu0 %5461
    %5463 = vrot.lane.b32.xlu0 %v5416, 64
    %v5464 = vpop.permute.xlu0 %5463
    %5465 = vrot.lane.b32.xlu0 %v5418, 64
    %v5466 = vpop.permute.xlu0 %5465
    %5467 = vrot.lane.b32.xlu0 %v5420, 64
    %v5468 = vpop.permute.xlu0 %5467
    %5469 = vrot.lane.b32.xlu0 %v5422, 64
    %v5470 = vpop.permute.xlu0 %5469
    %5471 = vrot.lane.b32.xlu0 %v5424, 64
    %v5472 = vpop.permute.xlu0 %5471
    %5473 = vrot.lane.b32.xlu0 %v5426, 64
    %v5474 = vpop.permute.xlu0 %5473
    %5475 = vrot.lane.b32.xlu0 %v5428, 64
    %v5476 = vpop.permute.xlu0 %5475
    %5477 = vrot.lane.b32.xlu0 %v5430, 64
    %v5478 = vpop.permute.xlu0 %5477
    %5479 = vrot.lane.b32.xlu0 %v5432, 64
    %v5480 = vpop.permute.xlu0 %5479
    %5481 = vrot.lane.b32.xlu0 %v5434, 64
    %v5482 = vpop.permute.xlu0 %5481
    %5483 = vrot.lane.b32.xlu0 %v5436, 64
    %v5484 = vpop.permute.xlu0 %5483
    %5485 = vrot.lane.b32.xlu0 %v5438, 64
    %v5486 = vpop.permute.xlu0 %5485
    %5487 = vrot.lane.b32.xlu0 %v5440, 64
    %v5488 = vpop.permute.xlu0 %5487
    %v5489 = vadd.f32 %v5375, %v5458
    %v5490 = vadd.f32 %v5376, %v5460
    %v5491 = vadd.f32 %v5377, %v5462
    %v5492 = vadd.f32 %v5378, %v5464
    %v5493 = vadd.f32 %v5379, %v5466
    %v5494 = vadd.f32 %v5380, %v5468
    %v5495 = vadd.f32 %v5381, %v5470
    %v5496 = vadd.f32 %v5382, %v5472
    %v5497 = vadd.f32 %v5383, %v5474
    %v5498 = vadd.f32 %v5384, %v5476
    %v5499 = vadd.f32 %v5385, %v5478
    %v5500 = vadd.f32 %v5386, %v5480
    %v5501 = vadd.f32 %v5387, %v5482
    %v5502 = vadd.f32 %v5388, %v5484
    %v5503 = vadd.f32 %v5389, %v5486
    %v5504 = vadd.f32 %v5390, %v5488
    %v5505 = vld [vmem:[%s6] sm:$0x1]
    %v5507 = vlaneseq
    %v5508 = vshrl.u32 %v5507, 7
    %v5509 = vsub.s32 0, %v5508
    %v5510 = vrot.slane %v5505, %v5509
    %v5512 = vadd.f32 %v5489, %v5510
    %v5513 = vadd.f32 %v5490, %v5510
    %v5514 = vadd.f32 %v5491, %v5510
    %v5515 = vadd.f32 %v5492, %v5510
    %v5516 = vadd.f32 %v5493, %v5510
    %v5517 = vadd.f32 %v5494, %v5510
    %v5518 = vadd.f32 %v5495, %v5510
    %v5519 = vadd.f32 %v5496, %v5510
    %v5520 = vadd.f32 %v5497, %v5510
    %v5521 = vadd.f32 %v5498, %v5510
    %v5522 = vadd.f32 %v5499, %v5510
    %v5523 = vadd.f32 %v5500, %v5510
    %v5524 = vadd.f32 %v5501, %v5510
    %v5525 = vadd.f32 %v5502, %v5510
    %v5526 = vadd.f32 %v5503, %v5510
    %v5527 = vadd.f32 %v5504, %v5510
    %v5528 = vld [vmem:[%s9] sm:$0xff]
    %v5529 = vld [vmem:[%s9 + $0x8] sm:$0xff]
    %v5530 = vld [vmem:[%s9 + $0x10] sm:$0xff]
    %v5531 = vld [vmem:[%s9 + $0x18] sm:$0xff]
    %v5532 = vld [vmem:[%s9 + $0x20] sm:$0xff]
    %v5533 = vld [vmem:[%s9 + $0x28] sm:$0xff]
    %v5534 = vld [vmem:[%s9 + $0x30] sm:$0xff]
    %v5535 = vld [vmem:[%s9 + $0x38] sm:$0xff]
    %v5536 = vld [vmem:[%s9 + $0x40] sm:$0xff]
    %v5537 = vld [vmem:[%s9 + $0x48] sm:$0xff]
    %v5538 = vld [vmem:[%s9 + $0x50] sm:$0xff]
    %v5539 = vld [vmem:[%s9 + $0x58] sm:$0xff]
    %v5540 = vld [vmem:[%s9 + $0x60] sm:$0xff]
    %v5541 = vld [vmem:[%s9 + $0x68] sm:$0xff]
    %v5542 = vld [vmem:[%s9 + $0x70] sm:$0xff]
    %v5543 = vld [vmem:[%s9 + $0x78] sm:$0xff]
    %5545 = vset.pattern.permute.xlu0 0
    %5546 = vperm.xlu0 %5545, %v5528
    %v5547 = vpop.permute.xlu0 %5546
    %5550 = vset.pattern.permute.xlu0 0
    %5551 = vperm.xlu0 %5550, %v5529
    %v5552 = vpop.permute.xlu0 %5551
    %5555 = vset.pattern.permute.xlu0 0
    %5556 = vperm.xlu0 %5555, %v5530
    %v5557 = vpop.permute.xlu0 %5556
    %5560 = vset.pattern.permute.xlu0 0
    %5561 = vperm.xlu0 %5560, %v5531
    %v5562 = vpop.permute.xlu0 %5561
    %5565 = vset.pattern.permute.xlu0 0
    %5566 = vperm.xlu0 %5565, %v5532
    %v5567 = vpop.permute.xlu0 %5566
    %5570 = vset.pattern.permute.xlu0 0
    %5571 = vperm.xlu0 %5570, %v5533
    %v5572 = vpop.permute.xlu0 %5571
    %5575 = vset.pattern.permute.xlu0 0
    %5576 = vperm.xlu0 %5575, %v5534
    %v5577 = vpop.permute.xlu0 %5576
    %5580 = vset.pattern.permute.xlu0 0
    %5581 = vperm.xlu0 %5580, %v5535
    %v5582 = vpop.permute.xlu0 %5581
    %5585 = vset.pattern.permute.xlu0 0
    %5586 = vperm.xlu0 %5585, %v5536
    %v5587 = vpop.permute.xlu0 %5586
    %5590 = vset.pattern.permute.xlu0 0
    %5591 = vperm.xlu0 %5590, %v5537
    %v5592 = vpop.permute.xlu0 %5591
    %5595 = vset.pattern.permute.xlu0 0
    %5596 = vperm.xlu0 %5595, %v5538
    %v5597 = vpop.permute.xlu0 %5596
    %5600 = vset.pattern.permute.xlu0 0
    %5601 = vperm.xlu0 %5600, %v5539
    %v5602 = vpop.permute.xlu0 %5601
    %5605 = vset.pattern.permute.xlu0 0
    %5606 = vperm.xlu0 %5605, %v5540
    %v5607 = vpop.permute.xlu0 %5606
    %5610 = vset.pattern.permute.xlu0 0
    %5611 = vperm.xlu0 %5610, %v5541
    %v5612 = vpop.permute.xlu0 %5611
    %5615 = vset.pattern.permute.xlu0 0
    %5616 = vperm.xlu0 %5615, %v5542
    %v5617 = vpop.permute.xlu0 %5616
    %5620 = vset.pattern.permute.xlu0 0
    %5621 = vperm.xlu0 %5620, %v5543
    %v5622 = vpop.permute.xlu0 %5621
    %v5624 = vmul.f32 %v5512, %v5547
    %v5625 = vmul.f32 %v5513, %v5552
    %v5626 = vmul.f32 %v5514, %v5557
    %v5627 = vmul.f32 %v5515, %v5562
    %v5628 = vmul.f32 %v5516, %v5567
    %v5629 = vmul.f32 %v5517, %v5572
    %v5630 = vmul.f32 %v5518, %v5577
    %v5631 = vmul.f32 %v5519, %v5582
    %v5632 = vmul.f32 %v5520, %v5587
    %v5633 = vmul.f32 %v5521, %v5592
    %v5634 = vmul.f32 %v5522, %v5597
    %v5635 = vmul.f32 %v5523, %v5602
    %v5636 = vmul.f32 %v5524, %v5607
    %v5637 = vmul.f32 %v5525, %v5612
    %v5638 = vmul.f32 %v5526, %v5617
    %v5639 = vmul.f32 %v5527, %v5622
    %v5640 = vadd.f32 %v5624, %v5625
    %v5641 = vadd.f32 %v5640, %v5626
    %v5642 = vadd.f32 %v5641, %v5627
    %v5643 = vadd.f32 %v5642, %v5628
    %v5644 = vadd.f32 %v5643, %v5629
    %v5645 = vadd.f32 %v5644, %v5630
    %v5646 = vadd.f32 %v5645, %v5631
    %v5647 = vadd.f32 %v5646, %v5632
    %v5648 = vadd.f32 %v5647, %v5633
    %v5649 = vadd.f32 %v5648, %v5634
    %v5650 = vadd.f32 %v5649, %v5635
    %v5651 = vadd.f32 %v5650, %v5636
    %v5652 = vadd.f32 %v5651, %v5637
    %v5653 = vadd.f32 %v5652, %v5638
    %v5654 = vadd.f32 %v5653, %v5639
    %v5655 = vrot.slane %v5654, 4
    %v5656 = vadd.f32 %v5654, %v5655
    %v5657 = vrot.slane %v5656, 2
    %v5658 = vadd.f32 %v5656, %v5657
    %v5659 = vrot.slane %v5658, 1
    %v5660 = vadd.f32 %v5658, %v5659
    %v5661 = vmul.f32 %v5660, 0.03125
    %v5662 = vmul.f32 %v5512, %v5512
    %v5663 = vmul.f32 %v5513, %v5513
    %v5664 = vmul.f32 %v5514, %v5514
    %v5665 = vmul.f32 %v5515, %v5515
    %v5666 = vmul.f32 %v5516, %v5516
    %v5667 = vmul.f32 %v5517, %v5517
    %v5668 = vmul.f32 %v5518, %v5518
    %v5669 = vmul.f32 %v5519, %v5519
    %v5670 = vmul.f32 %v5520, %v5520
    %v5671 = vmul.f32 %v5521, %v5521
    %v5672 = vmul.f32 %v5522, %v5522
    %v5673 = vmul.f32 %v5523, %v5523
    %v5674 = vmul.f32 %v5524, %v5524
    %v5675 = vmul.f32 %v5525, %v5525
    %v5676 = vmul.f32 %v5526, %v5526
    %v5677 = vmul.f32 %v5527, %v5527
    %v5678 = vmul.f32 %v5662, %v5547
    %v5679 = vmul.f32 %v5663, %v5552
    %v5680 = vmul.f32 %v5664, %v5557
    %v5681 = vmul.f32 %v5665, %v5562
    %v5682 = vmul.f32 %v5666, %v5567
    %v5683 = vmul.f32 %v5667, %v5572
    %v5684 = vmul.f32 %v5668, %v5577
    %v5685 = vmul.f32 %v5669, %v5582
    %v5686 = vmul.f32 %v5670, %v5587
    %v5687 = vmul.f32 %v5671, %v5592
    %v5688 = vmul.f32 %v5672, %v5597
    %v5689 = vmul.f32 %v5673, %v5602
    %v5690 = vmul.f32 %v5674, %v5607
    %v5691 = vmul.f32 %v5675, %v5612
    %v5692 = vmul.f32 %v5676, %v5617
    %v5693 = vmul.f32 %v5677, %v5622
    %v5694 = vadd.f32 %v5678, %v5679
    %v5695 = vadd.f32 %v5694, %v5680
    %v5696 = vadd.f32 %v5695, %v5681
    %v5697 = vadd.f32 %v5696, %v5682
    %v5698 = vadd.f32 %v5697, %v5683
    %v5699 = vadd.f32 %v5698, %v5684
    %v5700 = vadd.f32 %v5699, %v5685
    %v5701 = vadd.f32 %v5700, %v5686
    %v5702 = vadd.f32 %v5701, %v5687
    %v5703 = vadd.f32 %v5702, %v5688
    %v5704 = vadd.f32 %v5703, %v5689
    %v5705 = vadd.f32 %v5704, %v5690
    %v5706 = vadd.f32 %v5705, %v5691
    %v5707 = vadd.f32 %v5706, %v5692
    %v5708 = vadd.f32 %v5707, %v5693
    %v5709 = vrot.slane %v5708, 4
    %v5710 = vadd.f32 %v5708, %v5709
    %v5711 = vrot.slane %v5710, 2
    %v5712 = vadd.f32 %v5710, %v5711
    %v5713 = vrot.slane %v5712, 1
    %v5714 = vadd.f32 %v5712, %v5713
    %v5715 = vmul.f32 %v5714, 0.03125
    %v5716 = vmul.f32 %v5661, %v5661
    %v5717 = vsub.f32 %v5715, %v5716
    %v5718 = vmax.f32 %v5717, 0.0
    %v5719 = vld [vmem:[%s7] sm:$0x1]
    %v5720 = vadd.f32 %v5718, 1e-05
    %v5721 = vrsqrt.pop %v5720
    %v5722 = vmul.f32 %v5719, %v5721
    %v5724 = vlaneseq
    %v5725 = vshrl.u32 %v5724, 7
    %v5726 = vsub.s32 0, %v5725
    %v5727 = vrot.slane %v5722, %v5726
    %v5729 = vmul.f32 %v5512, %v5727
    %v5730 = vmul.f32 %v5513, %v5727
    %v5731 = vmul.f32 %v5514, %v5727
    %v5732 = vmul.f32 %v5515, %v5727
    %v5733 = vmul.f32 %v5516, %v5727
    %v5734 = vmul.f32 %v5517, %v5727
    %v5735 = vmul.f32 %v5518, %v5727
    %v5736 = vmul.f32 %v5519, %v5727
    %v5737 = vmul.f32 %v5520, %v5727
    %v5738 = vmul.f32 %v5521, %v5727
    %v5739 = vmul.f32 %v5522, %v5727
    %v5740 = vmul.f32 %v5523, %v5727
    %v5741 = vmul.f32 %v5524, %v5727
    %v5742 = vmul.f32 %v5525, %v5727
    %v5743 = vmul.f32 %v5526, %v5727
    %v5744 = vmul.f32 %v5527, %v5727
    %v5745 = vld [vmem:[%s8] sm:$0x1]
    %v5746 = vmul.f32 %v5661, %v5722
    %v5747 = vsub.f32 %v5745, %v5746
    %v5749 = vlaneseq
    %v5750 = vshrl.u32 %v5749, 7
    %v5751 = vsub.s32 0, %v5750
    %v5752 = vrot.slane %v5747, %v5751
    %v5754 = vadd.f32 %v5729, %v5752
    %v5755 = vadd.f32 %v5730, %v5752
    %v5756 = vadd.f32 %v5731, %v5752
    %v5757 = vadd.f32 %v5732, %v5752
    %v5758 = vadd.f32 %v5733, %v5752
    %v5759 = vadd.f32 %v5734, %v5752
    %v5760 = vadd.f32 %v5735, %v5752
    %v5761 = vadd.f32 %v5736, %v5752
    %v5762 = vadd.f32 %v5737, %v5752
    %v5763 = vadd.f32 %v5738, %v5752
    %v5764 = vadd.f32 %v5739, %v5752
    %v5765 = vadd.f32 %v5740, %v5752
    %v5766 = vadd.f32 %v5741, %v5752
    %v5767 = vadd.f32 %v5742, %v5752
    %v5768 = vadd.f32 %v5743, %v5752
    %v5769 = vadd.f32 %v5744, %v5752
    %5770 = vst [vmem:[#allocation5] sm:$0xff] %v5754
    %5771 = vst [vmem:[#allocation5 + $0x8] sm:$0xff] %v5755
    %5772 = vst [vmem:[#allocation5 + $0x10] sm:$0xff] %v5756
    %5773 = vst [vmem:[#allocation5 + $0x18] sm:$0xff] %v5757
    %5774 = vst [vmem:[#allocation5 + $0x20] sm:$0xff] %v5758
    %5775 = vst [vmem:[#allocation5 + $0x28] sm:$0xff] %v5759
    %5776 = vst [vmem:[#allocation5 + $0x30] sm:$0xff] %v5760
    %5777 = vst [vmem:[#allocation5 + $0x38] sm:$0xff] %v5761
    %5778 = vst [vmem:[#allocation5 + $0x40] sm:$0xff] %v5762
    %5779 = vst [vmem:[#allocation5 + $0x48] sm:$0xff] %v5763
    %5780 = vst [vmem:[#allocation5 + $0x50] sm:$0xff] %v5764
    %5781 = vst [vmem:[#allocation5 + $0x58] sm:$0xff] %v5765
    %5782 = vst [vmem:[#allocation5 + $0x60] sm:$0xff] %v5766
    %5783 = vst [vmem:[#allocation5 + $0x68] sm:$0xff] %v5767
    %5784 = vst [vmem:[#allocation5 + $0x70] sm:$0xff] %v5768
    %5785 = vst [vmem:[#allocation5 + $0x78] sm:$0xff] %v5769
    %5786 = vst [vmem:[#allocation5 + $0x80] sm:$0xff] 0.0
    %5787 = vst [vmem:[#allocation5 + $0x88] sm:$0xff] 0.0
    %v5788 = vld [vmem:[#allocation5] sm:$0xff]
    %v5789 = vld [vmem:[#allocation5 + $0x8] sm:$0xff]
    %v5790 = vld [vmem:[#allocation5 + $0x10] sm:$0xff]
    %v5791 = vld [vmem:[#allocation5 + $0x18] sm:$0xff]
    %v5792 = vld [vmem:[#allocation5 + $0x20] sm:$0xff]
    %v5793 = vld [vmem:[#allocation5 + $0x28] sm:$0xff]
    %v5794 = vld [vmem:[#allocation5 + $0x30] sm:$0xff]
    %v5795 = vld [vmem:[#allocation5 + $0x38] sm:$0xff]
    %v5796 = vld [vmem:[#allocation5 + $0x40] sm:$0xff]
    %v5797 = vld [vmem:[#allocation5 + $0x48] sm:$0xff]
    %v5798 = vld [vmem:[#allocation5 + $0x50] sm:$0xff]
    %v5799 = vld [vmem:[#allocation5 + $0x58] sm:$0xff]
    %v5800 = vld [vmem:[#allocation5 + $0x60] sm:$0xff]
    %v5801 = vld [vmem:[#allocation5 + $0x68] sm:$0xff]
    %v5802 = vld [vmem:[#allocation5 + $0x70] sm:$0xff]
    %v5803 = vld [vmem:[#allocation5 + $0x78] sm:$0xff]
    %v5804 = vld [vmem:[#allocation5 + $0x1] sm:$0xff]
    %v5805 = vld [vmem:[#allocation5 + $0x9] sm:$0xff]
    %v5806 = vld [vmem:[#allocation5 + $0x11] sm:$0xff]
    %v5807 = vld [vmem:[#allocation5 + $0x19] sm:$0xff]
    %v5808 = vld [vmem:[#allocation5 + $0x21] sm:$0xff]
    %v5809 = vld [vmem:[#allocation5 + $0x29] sm:$0xff]
    %v5810 = vld [vmem:[#allocation5 + $0x31] sm:$0xff]
    %v5811 = vld [vmem:[#allocation5 + $0x39] sm:$0xff]
    %v5812 = vld [vmem:[#allocation5 + $0x41] sm:$0xff]
    %v5813 = vld [vmem:[#allocation5 + $0x49] sm:$0xff]
    %v5814 = vld [vmem:[#allocation5 + $0x51] sm:$0xff]
    %v5815 = vld [vmem:[#allocation5 + $0x59] sm:$0xff]
    %v5816 = vld [vmem:[#allocation5 + $0x61] sm:$0xff]
    %v5817 = vld [vmem:[#allocation5 + $0x69] sm:$0xff]
    %v5818 = vld [vmem:[#allocation5 + $0x71] sm:$0xff]
    %v5819 = vld [vmem:[#allocation5 + $0x79] sm:$0xff]
    %v5820 = vmax.f32 %v5788, %v5804
    %v5821 = vmax.f32 %v5789, %v5805
    %v5822 = vmax.f32 %v5790, %v5806
    %v5823 = vmax.f32 %v5791, %v5807
    %v5824 = vmax.f32 %v5792, %v5808
    %v5825 = vmax.f32 %v5793, %v5809
    %v5826 = vmax.f32 %v5794, %v5810
    %v5827 = vmax.f32 %v5795, %v5811
    %v5828 = vmax.f32 %v5796, %v5812
    %v5829 = vmax.f32 %v5797, %v5813
    %v5830 = vmax.f32 %v5798, %v5814
    %v5831 = vmax.f32 %v5799, %v5815
    %v5832 = vmax.f32 %v5800, %v5816
    %v5833 = vmax.f32 %v5801, %v5817
    %v5834 = vmax.f32 %v5802, %v5818
    %v5835 = vmax.f32 %v5803, %v5819
    %v5836 = vld [vmem:[#allocation5 + $0x80] sm:$0xff]
    %v5837 = vmax.f32 %v5820, %v5789
    %v5838 = vmax.f32 %v5821, %v5790
    %v5839 = vmax.f32 %v5822, %v5791
    %v5840 = vmax.f32 %v5823, %v5792
    %v5841 = vmax.f32 %v5824, %v5793
    %v5842 = vmax.f32 %v5825, %v5794
    %v5843 = vmax.f32 %v5826, %v5795
    %v5844 = vmax.f32 %v5827, %v5796
    %v5845 = vmax.f32 %v5828, %v5797
    %v5846 = vmax.f32 %v5829, %v5798
    %v5847 = vmax.f32 %v5830, %v5799
    %v5848 = vmax.f32 %v5831, %v5800
    %v5849 = vmax.f32 %v5832, %v5801
    %v5850 = vmax.f32 %v5833, %v5802
    %v5851 = vmax.f32 %v5834, %v5803
    %v5852 = vmax.f32 %v5835, %v5836
    %v5853 = vld [vmem:[#allocation5 + $0x81] sm:$0xff]
    %v5854 = vmax.f32 %v5837, %v5805
    %v5855 = vmax.f32 %v5838, %v5806
    %v5856 = vmax.f32 %v5839, %v5807
    %v5857 = vmax.f32 %v5840, %v5808
    %v5858 = vmax.f32 %v5841, %v5809
    %v5859 = vmax.f32 %v5842, %v5810
    %v5860 = vmax.f32 %v5843, %v5811
    %v5861 = vmax.f32 %v5844, %v5812
    %v5862 = vmax.f32 %v5845, %v5813
    %v5863 = vmax.f32 %v5846, %v5814
    %v5864 = vmax.f32 %v5847, %v5815
    %v5865 = vmax.f32 %v5848, %v5816
    %v5866 = vmax.f32 %v5849, %v5817
    %v5867 = vmax.f32 %v5850, %v5818
    %v5868 = vmax.f32 %v5851, %v5819
    %v5869 = vmax.f32 %v5852, %v5853
    %v5870 = vmax.f32 %v5854, 0.0
    %v5871 = vmax.f32 %v5855, 0.0
    %v5872 = vmax.f32 %v5856, 0.0
    %v5873 = vmax.f32 %v5857, 0.0
    %v5874 = vmax.f32 %v5858, 0.0
    %v5875 = vmax.f32 %v5859, 0.0
    %v5876 = vmax.f32 %v5860, 0.0
    %v5877 = vmax.f32 %v5861, 0.0
    %v5878 = vmax.f32 %v5862, 0.0
    %v5879 = vmax.f32 %v5863, 0.0
    %v5880 = vmax.f32 %v5864, 0.0
    %v5881 = vmax.f32 %v5865, 0.0
    %v5882 = vmax.f32 %v5866, 0.0
    %v5883 = vmax.f32 %v5867, 0.0
    %v5884 = vmax.f32 %v5868, 0.0
    %v5885 = vmax.f32 %v5869, 0.0
    %v5886 = vld [vmem:[%s11] sm:$0xf]
    %v5887 = vpack.c.bf16 %v5871, %v5870
    %v5888 = vpack.c.bf16 %v5873, %v5872
    %v5889 = vpack.c.bf16 %v5875, %v5874
    %v5890 = vpack.c.bf16 %v5877, %v5876
    %v5891 = vpack.c.bf16 %v5879, %v5878
    %v5892 = vpack.c.bf16 %v5881, %v5880
    %v5893 = vpack.c.bf16 %v5883, %v5882
    %v5894 = vpack.c.bf16 %v5885, %v5884
    %5895 = vmatprep.subr.bf16.mxu0 0
    %5896 = vmatpush1.bf16.msra.mxu0 %v5887
    %5897 = vmatprep.subr.bf16.mxu0 0
    %5898 = vmatpush1.bf16.msra.mxu0 %v5888
    %5899 = vmatprep.subr.bf16.mxu0 0
    %5900 = vmatpush1.bf16.msra.mxu0 %v5889
    %5901 = vmatprep.subr.bf16.mxu0 0
    %5902 = vmatpush1.bf16.msra.mxu0 %v5890
    %5903 = vmatprep.subr.bf16.mxu0 0
    %5904 = vmatpush1.bf16.msra.mxu0 %v5891
    %5905 = vmatprep.subr.bf16.mxu0 0
    %5906 = vmatpush1.bf16.msra.mxu0 %v5892
    %5907 = vmatprep.subr.bf16.mxu0 0
    %5908 = vmatpush1.bf16.msra.mxu0 %v5893
    %5909 = vmatprep.subr.bf16.mxu0 0
    %5910 = vmatpush1.bf16.msra.mxu0 %v5894
    %5911 = vmatprep.subr.bf16.mxu0 0
    %5912 = vmatpush1.bf16.msra.mxu0 0
    %5913 = vmatprep.subr.bf16.mxu0 0
    %5914 = vmatpush1.bf16.msra.mxu0 0
    %5915 = vmatprep.subr.bf16.mxu0 0
    %5916 = vmatpush1.bf16.msra.mxu0 0
    %5917 = vmatprep.subr.bf16.mxu0 0
    %5918 = vmatpush1.bf16.msra.mxu0 0
    %5919 = vmatprep.subr.bf16.mxu0 0
    %5920 = vmatpush1.bf16.msra.mxu0 0
    %5921 = vmatprep.subr.bf16.mxu0 0
    %5922 = vmatpush1.bf16.msra.mxu0 0
    %5923 = vmatprep.subr.bf16.mxu0 0
    %5924 = vmatpush1.bf16.msra.mxu0 0
    %5925 = vmatprep.subr.bf16.mxu0 0
    %5926 = vmatpush1.bf16.msra.mxu0 0
    %5927 = vmatprep.mubr.bf16.mxu0 0
    %5928 = vmatmul.mubr.bf16.gmra.mrb[0].mxu0 %v5886
    %v5929 = vpop.f32.mrb[0].mxu0
    %v5930 = vadd.f32 0.0, %v5929
    %v5931 = vpop.f32.mrb[0].mxu0
    %v5932 = vpop.f32.mrb[0].mxu0
    %v5933 = vpop.f32.mrb[0].mxu0
    %5934 = vdwg.mxu0
    %v5935 = vpack.c.bf16 %v5930, %v5930
    %5936 = vst [vmem:[#allocation6] sm:$0x1] %v5935
    %v5938 = vunpack.c.l.b16 %v5935
    %v5939 = vpack.c.b16 %v5938, %v5938
    %v5940 = vrot.slane %v5939, 5
    %v5941 = vrot.slane %v5940, 4
    %5943 = vst [vmem:[#allocation6 + $0x4] sm:$0x1] %v5941
    %v5944 = vrot.slane %v5939, 6
    %v5945 = vrot.slane %v5944, 4
    %5947 = vst [vmem:[#allocation6 + $0x8] sm:$0x1] %v5945
    %v5948 = vrot.slane %v5939, 7
    %v5949 = vrot.slane %v5948, 4
    %5951 = vst [vmem:[#allocation6 + $0xc] sm:$0x1] %v5949
    %v5952 = vld [vmem:[#allocation6] sm:$0x11]
    %v5953 = vld [vmem:[#allocation6 + $0x8] sm:$0x11]
    %v5954 = vld [vmem:[%s12] sm:$0xf]
    %v5955 = vld [vmem:[%s12 + $0x4] sm:$0xf]
    %v5956 = vld [vmem:[%s12 + $0x8] sm:$0xf]
    %v5957 = vld [vmem:[%s12 + $0xc] sm:$0xf]
    %v5958 = vld [vmem:[%s12 + $0x10] sm:$0xf]
    %v5959 = vld [vmem:[%s12 + $0x14] sm:$0xf]
    %v5960 = vld [vmem:[%s12 + $0x18] sm:$0xf]
    %v5961 = vld [vmem:[%s12 + $0x1c] sm:$0xf]
    %v5962 = vld [vmem:[%s12 + $0x20] sm:$0xf]
    %v5963 = vld [vmem:[%s12 + $0x24] sm:$0xf]
    %v5964 = vld [vmem:[%s12 + $0x28] sm:$0xf]
    %v5965 = vld [vmem:[%s12 + $0x2c] sm:$0xf]
    %v5966 = vld [vmem:[%s12 + $0x30] sm:$0xf]
    %v5967 = vld [vmem:[%s12 + $0x34] sm:$0xf]
    %v5968 = vld [vmem:[%s12 + $0x38] sm:$0xf]
    %v5969 = vld [vmem:[%s12 + $0x3c] sm:$0xf]
    %v5970 = vld [vmem:[%s12 + $0x40] sm:$0xf]
    %v5971 = vld [vmem:[%s12 + $0x44] sm:$0xf]
    %v5972 = vld [vmem:[%s12 + $0x48] sm:$0xf]
    %v5973 = vld [vmem:[%s12 + $0x4c] sm:$0xf]
    %v5974 = vld [vmem:[%s12 + $0x50] sm:$0xf]
    %v5975 = vld [vmem:[%s12 + $0x54] sm:$0xf]
    %v5976 = vld [vmem:[%s12 + $0x58] sm:$0xf]
    %v5977 = vld [vmem:[%s12 + $0x5c] sm:$0xf]
    %v5978 = vld [vmem:[%s12 + $0x60] sm:$0xf]
    %v5979 = vld [vmem:[%s12 + $0x64] sm:$0xf]
    %v5980 = vld [vmem:[%s12 + $0x68] sm:$0xf]
    %v5981 = vld [vmem:[%s12 + $0x6c] sm:$0xf]
    %v5982 = vld [vmem:[%s12 + $0x70] sm:$0xf]
    %v5983 = vld [vmem:[%s12 + $0x74] sm:$0xf]
    %v5984 = vld [vmem:[%s12 + $0x78] sm:$0xf]
    %v5985 = vld [vmem:[%s12 + $0x7c] sm:$0xf]
    %v5986 = vld [vmem:[%s12 + $0x80] sm:$0xf]
    %v5987 = vld [vmem:[%s12 + $0x84] sm:$0xf]
    %v5988 = vld [vmem:[%s12 + $0x88] sm:$0xf]
    %v5989 = vld [vmem:[%s12 + $0x8c] sm:$0xf]
    %v5990 = vld [vmem:[%s12 + $0x90] sm:$0xf]
    %v5991 = vld [vmem:[%s12 + $0x94] sm:$0xf]
    %v5992 = vld [vmem:[%s12 + $0x98] sm:$0xf]
    %v5993 = vld [vmem:[%s12 + $0x9c] sm:$0xf]
    %v5994 = vld [vmem:[%s12 + $0xa0] sm:$0xf]
    %v5995 = vld [vmem:[%s12 + $0xa4] sm:$0xf]
    %v5996 = vld [vmem:[%s12 + $0xa8] sm:$0xf]
    %v5997 = vld [vmem:[%s12 + $0xac] sm:$0xf]
    %v5998 = vld [vmem:[%s12 + $0xb0] sm:$0xf]
    %v5999 = vld [vmem:[%s12 + $0xb4] sm:$0xf]
    %v6000 = vld [vmem:[%s12 + $0xb8] sm:$0xf]
    %v6001 = vld [vmem:[%s12 + $0xbc] sm:$0xf]
    %v6002 = vld [vmem:[%s12 + $0xc0] sm:$0xf]
    %v6003 = vld [vmem:[%s12 + $0xc4] sm:$0xf]
    %v6004 = vld [vmem:[%s12 + $0xc8] sm:$0xf]
    %v6005 = vld [vmem:[%s12 + $0xcc] sm:$0xf]
    %v6006 = vld [vmem:[%s12 + $0xd0] sm:$0xf]
    %v6007 = vld [vmem:[%s12 + $0xd4] sm:$0xf]
    %v6008 = vld [vmem:[%s12 + $0xd8] sm:$0xf]
    %v6009 = vld [vmem:[%s12 + $0xdc] sm:$0xf]
    %v6010 = vld [vmem:[%s12 + $0xe0] sm:$0xf]
    %v6011 = vld [vmem:[%s12 + $0xe4] sm:$0xf]
    %v6012 = vld [vmem:[%s12 + $0xe8] sm:$0xf]
    %v6013 = vld [vmem:[%s12 + $0xec] sm:$0xf]
    %v6014 = vld [vmem:[%s12 + $0xf0] sm:$0xf]
    %v6015 = vld [vmem:[%s12 + $0xf4] sm:$0xf]
    %v6016 = vld [vmem:[%s12 + $0xf8] sm:$0xf]
    %v6017 = vld [vmem:[%s12 + $0xfc] sm:$0xf]
    %v6018 = vld [vmem:[%s13] sm:$0x1]
    %v6020 = vlaneseq
    %v6021 = vshrl.u32 %v6020, 7
    %v6022 = vsub.s32 0, %v6021
    %v6023 = vrot.slane %v6018, %v6022
    %v6027 = vunpack.c.l.b16 %v5952
    %v6028 = vunpack.c.h.b16 %v5952
    %v6029 = vunpack.c.l.b16 %v5953
    %v6030 = vunpack.c.h.b16 %v5953
    %v6031 = vpack.c.b16 %v6027, %v6027
    %v6032 = vpack.c.b16 %v6028, %v6028
    %v6033 = vpack.c.b16 %v6029, %v6029
    %v6034 = vpack.c.b16 %v6030, %v6030
    %v6103 = vunpack.c.l.b16 %v5954
    %v6104 = vunpack.c.l.b16 %v5955
    %v6105 = vunpack.c.l.b16 %v5956
    %v6106 = vunpack.c.l.b16 %v5957
    %v6107 = vunpack.c.l.b16 %v5958
    %v6108 = vunpack.c.l.b16 %v5959
    %v6109 = vunpack.c.l.b16 %v5960
    %v6110 = vunpack.c.l.b16 %v5961
    %v6111 = vunpack.c.l.b16 %v5962
    %v6112 = vunpack.c.l.b16 %v5963
    %v6113 = vunpack.c.l.b16 %v5964
    %v6114 = vunpack.c.l.b16 %v5965
    %v6115 = vunpack.c.l.b16 %v5966
    %v6116 = vunpack.c.l.b16 %v5967
    %v6117 = vunpack.c.l.b16 %v5968
    %v6118 = vunpack.c.l.b16 %v5969
    %v6119 = vunpack.c.l.b16 %v5970
    %v6120 = vunpack.c.l.b16 %v5971
    %v6121 = vunpack.c.l.b16 %v5972
    %v6122 = vunpack.c.l.b16 %v5973
    %v6123 = vunpack.c.l.b16 %v5974
    %v6124 = vunpack.c.l.b16 %v5975
    %v6125 = vunpack.c.l.b16 %v5976
    %v6126 = vunpack.c.l.b16 %v5977
    %v6127 = vunpack.c.l.b16 %v5978
    %v6128 = vunpack.c.l.b16 %v5979
    %v6129 = vunpack.c.l.b16 %v5980
    %v6130 = vunpack.c.l.b16 %v5981
    %v6131 = vunpack.c.l.b16 %v5982
    %v6132 = vunpack.c.l.b16 %v5983
    %v6133 = vunpack.c.l.b16 %v5984
    %v6134 = vunpack.c.l.b16 %v5985
    %v6135 = vunpack.c.l.b16 %v5986
    %v6136 = vunpack.c.l.b16 %v5987
    %v6137 = vunpack.c.l.b16 %v5988
    %v6138 = vunpack.c.l.b16 %v5989
    %v6139 = vunpack.c.l.b16 %v5990
    %v6140 = vunpack.c.l.b16 %v5991
    %v6141 = vunpack.c.l.b16 %v5992
    %v6142 = vunpack.c.l.b16 %v5993
    %v6143 = vunpack.c.l.b16 %v5994
    %v6144 = vunpack.c.l.b16 %v5995
    %v6145 = vunpack.c.l.b16 %v5996
    %v6146 = vunpack.c.l.b16 %v5997
    %v6147 = vunpack.c.l.b16 %v5998
    %v6148 = vunpack.c.l.b16 %v5999
    %v6149 = vunpack.c.l.b16 %v6000
    %v6150 = vunpack.c.l.b16 %v6001
    %v6151 = vunpack.c.l.b16 %v6002
    %v6152 = vunpack.c.l.b16 %v6003
    %v6153 = vunpack.c.l.b16 %v6004
    %v6154 = vunpack.c.l.b16 %v6005
    %v6155 = vunpack.c.l.b16 %v6006
    %v6156 = vunpack.c.l.b16 %v6007
    %v6157 = vunpack.c.l.b16 %v6008
    %v6158 = vunpack.c.l.b16 %v6009
    %v6159 = vunpack.c.l.b16 %v6010
    %v6160 = vunpack.c.l.b16 %v6011
    %v6161 = vunpack.c.l.b16 %v6012
    %v6162 = vunpack.c.l.b16 %v6013
    %v6163 = vunpack.c.l.b16 %v6014
    %v6164 = vunpack.c.l.b16 %v6015
    %v6165 = vunpack.c.l.b16 %v6016
    %v6166 = vunpack.c.l.b16 %v6017
    %v6167 = vpack.c.b16 %v6104, %v6103
    %v6168 = vpack.c.b16 %v6106, %v6105
    %v6169 = vpack.c.b16 %v6108, %v6107
    %v6170 = vpack.c.b16 %v6110, %v6109
    %v6171 = vpack.c.b16 %v6112, %v6111
    %v6172 = vpack.c.b16 %v6114, %v6113
    %v6173 = vpack.c.b16 %v6116, %v6115
    %v6174 = vpack.c.b16 %v6118, %v6117
    %v6175 = vpack.c.b16 %v6120, %v6119
    %v6176 = vpack.c.b16 %v6122, %v6121
    %v6177 = vpack.c.b16 %v6124, %v6123
    %v6178 = vpack.c.b16 %v6126, %v6125
    %v6179 = vpack.c.b16 %v6128, %v6127
    %v6180 = vpack.c.b16 %v6130, %v6129
    %v6181 = vpack.c.b16 %v6132, %v6131
    %v6182 = vpack.c.b16 %v6134, %v6133
    %v6183 = vpack.c.b16 %v6136, %v6135
    %v6184 = vpack.c.b16 %v6138, %v6137
    %v6185 = vpack.c.b16 %v6140, %v6139
    %v6186 = vpack.c.b16 %v6142, %v6141
    %v6187 = vpack.c.b16 %v6144, %v6143
    %v6188 = vpack.c.b16 %v6146, %v6145
    %v6189 = vpack.c.b16 %v6148, %v6147
    %v6190 = vpack.c.b16 %v6150, %v6149
    %v6191 = vpack.c.b16 %v6152, %v6151
    %v6192 = vpack.c.b16 %v6154, %v6153
    %v6193 = vpack.c.b16 %v6156, %v6155
    %v6194 = vpack.c.b16 %v6158, %v6157
    %v6195 = vpack.c.b16 %v6160, %v6159
    %v6196 = vpack.c.b16 %v6162, %v6161
    %v6197 = vpack.c.b16 %v6164, %v6163
    %v6198 = vpack.c.b16 %v6166, %v6165
    %6231 = vmatprep.subr.bf16.mxu0 0
    %6232 = vmatpush1.bf16.msra.mxu0 %v6167
    %6233 = vmatprep.subr.bf16.mxu0 0
    %6234 = vmatpush1.bf16.msra.mxu0 %v6168
    %6235 = vmatprep.subr.bf16.mxu0 0
    %6236 = vmatpush1.bf16.msra.mxu0 %v6169
    %6237 = vmatprep.subr.bf16.mxu0 0
    %6238 = vmatpush1.bf16.msra.mxu0 %v6170
    %6239 = vmatprep.subr.bf16.mxu0 0
    %6240 = vmatpush1.bf16.msra.mxu0 %v6171
    %6241 = vmatprep.subr.bf16.mxu0 0
    %6242 = vmatpush1.bf16.msra.mxu0 %v6172
    %6243 = vmatprep.subr.bf16.mxu0 0
    %6244 = vmatpush1.bf16.msra.mxu0 %v6173
    %6245 = vmatprep.subr.bf16.mxu0 0
    %6246 = vmatpush1.bf16.msra.mxu0 %v6174
    %6247 = vmatprep.subr.bf16.mxu0 0
    %6248 = vmatpush1.bf16.msra.mxu0 %v6175
    %6249 = vmatprep.subr.bf16.mxu0 0
    %6250 = vmatpush1.bf16.msra.mxu0 %v6176
    %6251 = vmatprep.subr.bf16.mxu0 0
    %6252 = vmatpush1.bf16.msra.mxu0 %v6177
    %6253 = vmatprep.subr.bf16.mxu0 0
    %6254 = vmatpush1.bf16.msra.mxu0 %v6178
    %6255 = vmatprep.subr.bf16.mxu0 0
    %6256 = vmatpush1.bf16.msra.mxu0 %v6179
    %6257 = vmatprep.subr.bf16.mxu0 0
    %6258 = vmatpush1.bf16.msra.mxu0 %v6180
    %6259 = vmatprep.subr.bf16.mxu0 0
    %6260 = vmatpush1.bf16.msra.mxu0 %v6181
    %6261 = vmatprep.subr.bf16.mxu0 0
    %6262 = vmatpush1.bf16.msra.mxu0 %v6182
    %6263 = vmatprep.mubr.bf16.mxu0 %v6032
    %6264 = vmatmul.mubr.bf16.gmra.mrb[0].mxu0 %v6031
    %v6265 = vpop.f32.mrb[0].mxu0
    %v6266 = vadd.f32 %v6023, %v6265
    %v6267 = vpop.f32.mrb[0].mxu0
    %v6268 = vpop.f32.mrb[0].mxu0
    %v6269 = vpop.f32.mrb[0].mxu0
    %6270 = vdwg.mxu0
    %6271 = vmatprep.subr.bf16.mxu0 0
    %6272 = vmatpush1.bf16.msra.mxu0 %v6183
    %6273 = vmatprep.subr.bf16.mxu0 0
    %6274 = vmatpush1.bf16.msra.mxu0 %v6184
    %6275 = vmatprep.subr.bf16.mxu0 0
    %6276 = vmatpush1.bf16.msra.mxu0 %v6185
    %6277 = vmatprep.subr.bf16.mxu0 0
    %6278 = vmatpush1.bf16.msra.mxu0 %v6186
    %6279 = vmatprep.subr.bf16.mxu0 0
    %6280 = vmatpush1.bf16.msra.mxu0 %v6187
    %6281 = vmatprep.subr.bf16.mxu0 0
    %6282 = vmatpush1.bf16.msra.mxu0 %v6188
    %6283 = vmatprep.subr.bf16.mxu0 0
    %6284 = vmatpush1.bf16.msra.mxu0 %v6189
    %6285 = vmatprep.subr.bf16.mxu0 0
    %6286 = vmatpush1.bf16.msra.mxu0 %v6190
    %6287 = vmatprep.subr.bf16.mxu0 0
    %6288 = vmatpush1.bf16.msra.mxu0 %v6191
    %6289 = vmatprep.subr.bf16.mxu0 0
    %6290 = vmatpush1.bf16.msra.mxu0 %v6192
    %6291 = vmatprep.subr.bf16.mxu0 0
    %6292 = vmatpush1.bf16.msra.mxu0 %v6193
    %6293 = vmatprep.subr.bf16.mxu0 0
    %6294 = vmatpush1.bf16.msra.mxu0 %v6194
    %6295 = vmatprep.subr.bf16.mxu0 0
    %6296 = vmatpush1.bf16.msra.mxu0 %v6195
    %6297 = vmatprep.subr.bf16.mxu0 0
    %6298 = vmatpush1.bf16.msra.mxu0 %v6196
    %6299 = vmatprep.subr.bf16.mxu0 0
    %6300 = vmatpush1.bf16.msra.mxu0 %v6197
    %6301 = vmatprep.subr.bf16.mxu0 0
    %6302 = vmatpush1.bf16.msra.mxu0 %v6198
    %6303 = vmatprep.mubr.bf16.mxu0 %v6034
    %6304 = vmatmul.mubr.bf16.gmra.mrb[0].mxu0 %v6033
    %v6305 = vpop.f32.mrb[0].mxu0
    %v6306 = vadd.f32 %v6266, %v6305
    %v6307 = vpop.f32.mrb[0].mxu0
    %v6308 = vpop.f32.mrb[0].mxu0
    %v6309 = vpop.f32.mrb[0].mxu0
    %6310 = vdwg.mxu0
    %vm6311 = vcmask 17408
    %6312 = vst.msk [vmem:[#allocation7] sm:$0x3] %vm6311, %v6306
    // Predicated region
    $region58: #{forward.1} parent=1 // pred_check
      _
    $region59: #{forward.1} parent=1 // pred_check_branch
      %6314 = sbr.rel (0) target = $region61
    $region60: #{forward.1} parent=1 // pred_region
      %s6316 = ssub.s32 32, 32
      %6317 = vsyncadd [#allocation8], %s6316
      %s6319 = sshll.u32 [#allocation7], 4
      %s6320 = int_to_ptr.vmem [resolvable:$true] %s6319
      %6322 = dma.vmem_to_hbm [thread:$0]  %s6320, 32, %s14, [#allocation8]
    $region61: #{forward.1} parent=1 // pred_fallthru
      _
    // Predicated region
    $region62: #{forward.1} parent=1 // pred_check
      _
    $region63: #{forward.1} parent=1 // pred_check_branch
      %6324 = sbr.rel (0) target = $region65
    $region64: #{forward.1} parent=1 // pred_region
      %6325 = dma.done [#allocation8], 32
    $region65: #{forward.1} parent=1 // pred_fallthru
      _
    %6326 = vsyncpa [#allocation8], 1

</llo_original>
